<compile_context>
chip_gen: v5e
topology: v5e:2x2
jax: 0.10.0
libtpu: 0.0.40
codegen_flags: <defaults>
</compile_context>

<pallas_src>
import functools
import math

import jax
import jax.numpy as jnp
from jax.experimental import pallas as pl
from jax.experimental.pallas import tpu as pltpu


def _entity_attn_kernel(ent_ref, pre_ref, post_ref, wq_ref, wkv_ref, wout_ref,
                        bout_ref, out_ref, *, bb, ne, nq, embed, nh, hd, out_dim, pack):
    # ent_ref  : (bb, ne, in_dim)   bf16 entities for this batch block
    # pre_ref  : (bb, nq, ne)       f32 0/1, 1 = attention not allowed
    # post_ref : (bb, nq, 1)        f32 0/1, 1 = zero this query's output
    # wq_ref   : (in_dim, embed)    bf16, query columns pre-scaled by 1/sqrt(hd)
    # wkv_ref  : (in_dim, 2*embed)  bf16 (key, value columns)
    # wout_ref : (embed, out_dim)   bf16
    # bout_ref : (1, out_dim)       f32
    # out_ref  : (bb, nq*out_dim) if pack else (bb, nq, out_dim)
    ent = ent_ref[...]                                                    # bf16

    # --- projections: batch folded into the MXU M dimension, bf16 operands, f32 acc.
    e_kv = ent.reshape(bb * ne, -1)
    kv = jnp.dot(e_kv, wkv_ref[...], preferred_element_type=jnp.float32)  # (bb*ne, 2E)
    kv3 = kv.reshape(bb, ne, 2 * embed)
    k = kv3[:, :, :embed]                                                 # (bb, ne, E)
    v = kv3[:, :, embed:]                                                 # (bb, ne, E)

    e_q = ent[:, :nq, :].reshape(bb * nq, -1)        # only the query entities
    q = jnp.dot(e_q, wq_ref[...], preferred_element_type=jnp.float32)     # (bb*nq, E)
    q3 = q.reshape(bb, nq, embed)                    # already 1/sqrt(hd)-scaled

    # --- attention logits per head on the VPU/XLU (no per-batch MXU pushes).
    logit_blocks = []
    for h in range(nh):                              # static unroll; nh is small
        qh = q3[:, :, h * hd:(h + 1) * hd]           # (bb, nq, hd)
        kh = k[:, :, h * hd:(h + 1) * hd]            # (bb, ne, hd)
        prod = qh[:, :, None, :] * kh[:, None, :, :]  # (bb, nq, ne, hd)
        logit_blocks.append(jnp.sum(prod, axis=-1))   # (bb, nq, ne)
    logits = jnp.stack(logit_blocks, axis=1)          # (bb, nh, nq, ne)

    # --- fused masked softmax over all heads at once (f32 on every generation).
    pre = pre_ref[...]                                # (bb, nq, ne) 0/1
    keep = (1.0 - pre)[:, None, :, :]                 # (bb, 1, nq, ne)
    neg_bias = (pre * jnp.float32(-1e30))[:, None, :, :]
    masked = logits + neg_bias
    m = jnp.max(masked, axis=-1, keepdims=True)
    p = jnp.exp(masked - m) * keep                    # exact zeros where masked
    s = jnp.sum(p, axis=-1, keepdims=True)
    s_safe = jnp.maximum(s, jnp.float32(1e-30))
    inv = pl.reciprocal(s_safe, approx=True)          # EUP; + one Newton refinement
    inv = inv * (2.0 - s_safe * inv)
    w = p * jnp.where(s > 0.0, inv, 0.0)              # fully-masked rows -> all-zero

    # --- attention-weighted values per head (VPU mul + sublane reduce).
    head_outs = []
    for h in range(nh):
        vh = v[:, :, h * hd:(h + 1) * hd]             # (bb, ne, hd)
        wh = w[:, h]                                  # (bb, nq, ne)
        prod = wh[:, :, :, None] * vh[:, None, :, :]  # (bb, nq, ne, hd)
        head_outs.append(jnp.sum(prod, axis=2))       # (bb, nq, hd)
    attn = jnp.concatenate(head_outs, axis=-1)        # (bb, nq, E)

    # --- output projection (bf16 MXU, f32 acc) + bias + post mask.
    attn2 = attn.astype(jnp.bfloat16).reshape(bb * nq, embed)
    out2 = jnp.dot(attn2, wout_ref[...], preferred_element_type=jnp.float32)
    out2 = out2 + bout_ref[...]                       # (bb*nq, out_dim)
    out3 = out2.reshape(bb, nq, out_dim)
    out3 = jnp.where(post_ref[...] > 0.5, 0.0, out3)

    if pack:
        # Lane-dense store: nq*out_dim is a 128 multiple -> unmasked full-lane vst.
        wide = jnp.concatenate([out3[:, j:j + 1, :] for j in range(nq)], axis=-1)
        out_ref[...] = wide.reshape(bb, nq * out_dim).astype(out_ref.dtype)
    else:
        out_ref[...] = out3.astype(out_ref.dtype)


def _auto_block_b(ne, nq, in_dim, embed, out_dim, n_heads,
                  vmem_budget_bytes=6 * 1024 * 1024):
    """Pick a batch-block cap from a conservative per-step VMEM budget."""
    hd = embed // n_heads
    # Double-buffered per-element input/output bytes.
    io = 2 * (ne * in_dim * 2          # entities (bf16)
              + nq * ne * 4            # pre mask (f32)
              + nq * 4                 # post mask (f32)
              + nq * out_dim * 4)      # output (f32)
    # f32 in-kernel intermediates per element (q, kv, one head's 4-D temp,
    # logits/p/w, attn, out).
    inter = 4 * (nq * embed + ne * 2 * embed + nq * ne * hd
                 + 3 * n_heads * nq * ne + nq * embed + nq * out_dim)
    per_elem = max(1, io + inter)
    return int(max(8, min(512, vmem_budget_bytes // per_elem)))


def _choose_block_b(bs, cap):
    """Choose (block_b, padded_bs): prefer a divisor of bs (no padding), keep grid>=2."""
    if bs <= 1:
        return max(1, bs), bs
    cap = max(1, min(cap, (bs + 1) // 2))            # grid >= 2 so v7x uses both TCs
    best_div = max(d for d in range(1, cap + 1) if bs % d == 0)
    if best_div * 2 >= cap or best_div >= 64:
        return best_div, bs                          # no padding / extra HBM pass
    bb = min(cap, max(8, (cap // 8) * 8))            # fallback: pad a ragged tail
    bs_pad = ((bs + bb - 1) // bb) * bb
    return bb, bs_pad


def entity_attention_forward(entities, pre_mask, post_mask, w_in, w_out, b_out,
                             n_heads, block_b=None):
    """Pallas implementation of EntityAttentionLayer.forward (ret_attn_logits=None).

    entities : (bs, ne, in_dim)
    pre_mask : (bs, >=n_queries, >=ne)  truthy = masked (attention not allowed)
    post_mask: (bs, n_queries)          truthy = zero this query's output
    w_in     : (in_dim, 3*embed)        in_trans weight (transposed, no bias)
    w_out    : (embed, out_dim)         out_trans weight (transposed)
    b_out    : (out_dim,)
    """
    bs, ne, in_dim = entities.shape
    nq = post_mask.shape[1]
    embed = w_in.shape[1] // 3
    out_dim = w_out.shape[1]
    assert embed % n_heads == 0, "embed dim must be divisible by n_heads"
    assert nq <= ne, "queries must be the first n_queries entities"
    hd = embed // n_heads

    # Constant weight transforms: fold 1/sqrt(hd) into the query projection and split
    # w_in so no Q is computed for non-query entities.  Matmul operands go to bf16.
    inv_scale = 1.0 / math.sqrt(float(hd))
    w_in_f = w_in.astype(jnp.float32)
    w_q = (w_in_f[:, :embed] * inv_scale).astype(jnp.bfloat16)
    w_kv = w_in_f[:, embed:].astype(jnp.bfloat16)
    w_out_b = w_out.astype(jnp.bfloat16)
    b_out2 = b_out.astype(jnp.float32).reshape(1, out_dim)

    ent_b = entities.astype(jnp.bfloat16)
    pre = pre_mask[:, :nq, :ne].astype(jnp.float32)
    post = post_mask.astype(jnp.float32).reshape(bs, nq, 1)

    cap = int(block_b) if block_b is not None else _auto_block_b(
        ne, nq, in_dim, embed, out_dim, n_heads)
    bb, bs_pad = _choose_block_b(bs, cap)
    if bs_pad != bs:
        # Fallback only (awkward batch sizes); divisor-based bb avoids this extra pass.
        pad = bs_pad - bs
        ent_b = jnp.pad(ent_b, ((0, pad), (0, 0), (0, 0)))
        pre = jnp.pad(pre, ((0, pad), (0, 0), (0, 0)))
        post = jnp.pad(post, ((0, pad), (0, 0), (0, 0)))

    # Lane-dense packed output only when it yields unmasked full-lane stores.
    pack = (out_dim < 128) and ((nq * out_dim) % 128 == 0) and (bb % 8 == 0 or bb == bs_pad)

    kernel = functools.partial(_entity_attn_kernel, bb=bb, ne=ne, nq=nq, embed=embed,
                               nh=n_heads, hd=hd, out_dim=out_dim, pack=pack)

    if pack:
        out_shape = jax.ShapeDtypeStruct((bs_pad, nq * out_dim), jnp.float32)
        out_spec = pl.BlockSpec((bb, nq * out_dim), lambda b: (b, 0))
    else:
        out_shape = jax.ShapeDtypeStruct((bs_pad, nq, out_dim), jnp.float32)
        out_spec = pl.BlockSpec((bb, nq, out_dim), lambda b: (b, 0, 0))

    # NOTE: for scaled-up embed/out_dim, pipeline_mode=pl.Buffered(1) on the
    # constant-index weight specs would reclaim their unused second buffer.
    out = pl.pallas_call(
        kernel,
        out_shape=out_shape,
        grid=(bs_pad // bb,),
        in_specs=[
            pl.BlockSpec((bb, ne, in_dim), lambda b: (b, 0, 0)),
            pl.BlockSpec((bb, nq, ne), lambda b: (b, 0, 0)),
            pl.BlockSpec((bb, nq, 1), lambda b: (b, 0, 0)),
            pl.BlockSpec((in_dim, embed), lambda b: (0, 0)),
            pl.BlockSpec((in_dim, 2 * embed), lambda b: (0, 0)),
            pl.BlockSpec((embed, out_dim), lambda b: (0, 0)),
            pl.BlockSpec((1, out_dim), lambda b: (0, 0)),
        ],
        out_specs=out_spec,
        compiler_params=pltpu.CompilerParams(
            dimension_semantics=("parallel",),
            vmem_limit_bytes=32 * 1024 * 1024),
    )(ent_b, pre, post, w_q, w_kv, w_out_b, b_out2)

    if pack:
        return out[:bs].reshape(bs, nq, out_dim)
    return out[:bs]


def entity_attention_reference(entities, pre_mask, post_mask, w_in, w_out, b_out, n_heads):
    """Pure-JAX f32 reference mirroring the PyTorch module exactly."""
    bs, ne, in_dim = entities.shape
    nq = post_mask.shape[1]
    embed = w_in.shape[1] // 3
    hd = embed // n_heads
    qkv = entities @ w_in                                       # (bs, ne, 3*embed)
    q = qkv[:, :nq, 0:embed].reshape(bs, nq, n_heads, hd)
    k = qkv[:, :, embed:2 * embed].reshape(bs, ne, n_heads, hd)
    v = qkv[:, :, 2 * embed:].reshape(bs, ne, n_heads, hd)
    logits = jnp.einsum('bqhd,bkhd->bhqk', q, k) / jnp.sqrt(jnp.float32(hd))
    mask = pre_mask[:, :nq, :ne][:, None, :, :]
    masked = jnp.where(mask, -jnp.inf, logits)
    w = jax.nn.softmax(masked, axis=-1)
    w = jnp.nan_to_num(w, nan=0.0, posinf=0.0, neginf=0.0)
    attn = jnp.einsum('bhqk,bkhd->bqhd', w, v).reshape(bs, nq, embed)
    out = attn @ w_out + b_out
    return jnp.where(post_mask[:, :, None], 0.0, out)


if __name__ == "__main__":
    # Config consistent with the module: attn_n_heads=4, n_agents=4, 8 entities.
    in_dim, embed_dim, out_dim, n_heads, n_agents, ne = 32, 32, 32, 4, 4, 8

    key = jax.random.PRNGKey(0)
    k_win, k_wout, k_bout = jax.random.split(key, 3)
    w_in = jax.random.normal(k_win, (in_dim, 3 * embed_dim), dtype=jnp.float32) * 0.1
    w_out = jax.random.normal(k_wout, (embed_dim, out_dim), dtype=jnp.float32) * 0.1
    b_out = jax.random.normal(k_bout, (out_dim,), dtype=jnp.float32) * 0.1

    # bs=16 -> bb=8, grid=2, lane-dense packed output (nq*out_dim == 128)
    # bs=10 -> bb=5, grid=2, plain (bb, nq, out_dim) output, no padding
    # bs=13 -> bb=7, grid=2, fallback ragged-tail padding path
    for cfg_i, bs in enumerate((16, 10, 13)):
        ks = jax.random.split(jax.random.PRNGKey(cfg_i + 1), 3)
        entities = jax.random.normal(ks[0], (bs, ne, in_dim), dtype=jnp.float32)
        pre_mask = jax.random.bernoulli(ks[1], p=0.3, shape=(bs, n_agents, ne))
        pre_mask = pre_mask.at[0, 1, :].set(True)   # fully-masked row -> zero-weights path
        post_mask = jax.random.bernoulli(ks[2], p=0.25, shape=(bs, n_agents))

        out = entity_attention_forward(entities, pre_mask, post_mask,
                                       w_in, w_out, b_out, n_heads)
        out = jax.block_until_ready(out)

        ref = entity_attention_reference(entities, pre_mask, post_mask,
                                         w_in, w_out, b_out, n_heads)
        assert out.shape == (bs, n_agents, out_dim)
        # bf16 matmul operands vs. the all-f32 reference: ~2^-8 relative precision.
        assert jnp.allclose(out, ref, atol=2e-2, rtol=2e-2), f"mismatch vs reference (bs={bs})"

    # TODO(synk): ret_attn_logits ("max"/"mean") auxiliary return not implemented; default path only.
    print("KERNEL_OK")
</pallas_src>

<mosaic_0001>
module attributes {stable_mosaic.version = 11 : i64} {
  func.func @_entity_attn_kernel(%arg0: i32, %arg1: memref<8x8x32xbf16, #tpu.memory_space<vmem>>, %arg2: memref<8x4x8xf32, #tpu.memory_space<vmem>>, %arg3: memref<8x4x1xf32, #tpu.memory_space<vmem>>, %arg4: memref<32x32xbf16, #tpu.memory_space<vmem>>, %arg5: memref<32x64xbf16, #tpu.memory_space<vmem>>, %arg6: memref<32x32xbf16, #tpu.memory_space<vmem>>, %arg7: memref<1x32xf32, #tpu.memory_space<vmem>>, %arg8: memref<8x128xf32, #tpu.memory_space<vmem>>) attributes {dimension_semantics = [#tpu.dimension_semantics<parallel>], iteration_bounds = array<i64: 2>, scalar_prefetch = 0 : i64, scratch_operands = 0 : i64, tpu.core_type = #tpu.core_type<tc>, window_params = [{transform_indices = @transform_0, window_bounds = array<i64: 8, 8, 32>}, {transform_indices = @transform_1, window_bounds = array<i64: 8, 4, 8>}, {transform_indices = @transform_2, window_bounds = array<i64: 8, 4, 1>}, {pipeline_mode = #tpu.pipeline_mode<synchronous>, transform_indices = @transform_3, window_bounds = array<i64: 32, 32>}, {pipeline_mode = #tpu.pipeline_mode<synchronous>, transform_indices = @transform_4, window_bounds = array<i64: 32, 64>}, {pipeline_mode = #tpu.pipeline_mode<synchronous>, transform_indices = @transform_5, window_bounds = array<i64: 32, 32>}, {pipeline_mode = #tpu.pipeline_mode<synchronous>, transform_indices = @transform_6, window_bounds = array<i64: 1, 32>}, {transform_indices = @transform_7, window_bounds = array<i64: 8, 128>}]} {
    %c0 = arith.constant 0 : index
    %c0_0 = arith.constant 0 : index
    %c0_1 = arith.constant 0 : index
    %0 = vector.load %arg1[%c0, %c0_0, %c0_1] : memref<8x8x32xbf16, #tpu.memory_space<vmem>>, vector<8x8x32xbf16>
    %1 = vector.shape_cast %0 : vector<8x8x32xbf16> to vector<64x32xbf16>
    %c0_2 = arith.constant 0 : index
    %c0_3 = arith.constant 0 : index
    %2 = vector.load %arg5[%c0_2, %c0_3] : memref<32x64xbf16, #tpu.memory_space<vmem>>, vector<32x64xbf16>
    %cst = arith.constant dense<0.000000e+00> : vector<64x64xf32>
    %3 = tpu.matmul %1, %2, %cst {dimension_numbers = #tpu.dot_dimension_numbers<[1], [0], [0], [1], [0, 0, 1, 1], [], []>} : vector<64x32xbf16>, vector<32x64xbf16>, vector<64x64xf32> -> vector<64x64xf32>
    %4 = vector.shape_cast %3 : vector<64x64xf32> to vector<8x8x64xf32>
    %5 = vector.extract_strided_slice %4 {offsets = [0, 0, 0], sizes = [8, 8, 32], strides = [1, 1, 1]} : vector<8x8x64xf32> to vector<8x8x32xf32>
    %6 = vector.extract_strided_slice %4 {offsets = [0, 0, 32], sizes = [8, 8, 32], strides = [1, 1, 1]} : vector<8x8x64xf32> to vector<8x8x32xf32>
    %7 = vector.extract_strided_slice %0 {offsets = [0, 0, 0], sizes = [8, 4, 32], strides = [1, 1, 1]} : vector<8x8x32xbf16> to vector<8x4x32xbf16>
    %8 = vector.shape_cast %7 : vector<8x4x32xbf16> to vector<32x32xbf16>
    %c0_4 = arith.constant 0 : index
    %c0_5 = arith.constant 0 : index
    %9 = vector.load %arg4[%c0_4, %c0_5] : memref<32x32xbf16, #tpu.memory_space<vmem>>, vector<32x32xbf16>
    %cst_6 = arith.constant dense<0.000000e+00> : vector<32x32xf32>
    %10 = tpu.matmul %8, %9, %cst_6 {dimension_numbers = #tpu.dot_dimension_numbers<[1], [0], [0], [1], [0, 0, 1, 1], [], []>} : vector<32x32xbf16>, vector<32x32xbf16>, vector<32x32xf32> -> vector<32x32xf32>
    %11 = vector.shape_cast %10 : vector<32x32xf32> to vector<8x4x32xf32>
    %12 = vector.extract_strided_slice %11 {offsets = [0, 0, 0], sizes = [8, 4, 8], strides = [1, 1, 1]} : vector<8x4x32xf32> to vector<8x4x8xf32>
    %13 = vector.extract_strided_slice %5 {offsets = [0, 0, 0], sizes = [8, 8, 8], strides = [1, 1, 1]} : vector<8x8x32xf32> to vector<8x8x8xf32>
    %14 = vector.shape_cast %12 : vector<8x4x8xf32> to vector<8x4x1x8xf32>
    %15 = vector.shape_cast %13 : vector<8x8x8xf32> to vector<8x1x8x8xf32>
    %16 = vector.broadcast %14 : vector<8x4x1x8xf32> to vector<8x4x8x8xf32>
    %17 = vector.broadcast %15 : vector<8x1x8x8xf32> to vector<8x4x8x8xf32>
    %18 = arith.mulf %16, %17 : vector<8x4x8x8xf32>
    %cst_7 = arith.constant dense<0.000000e+00> : vector<8x4x8xf32>
    %19 = vector.multi_reduction <add>, %18, %cst_7 [3] : vector<8x4x8x8xf32> to vector<8x4x8xf32>
    %20 = vector.extract_strided_slice %11 {offsets = [0, 0, 8], sizes = [8, 4, 8], strides = [1, 1, 1]} : vector<8x4x32xf32> to vector<8x4x8xf32>
    %21 = vector.extract_strided_slice %5 {offsets = [0, 0, 8], sizes = [8, 8, 8], strides = [1, 1, 1]} : vector<8x8x32xf32> to vector<8x8x8xf32>
    %22 = vector.shape_cast %20 : vector<8x4x8xf32> to vector<8x4x1x8xf32>
    %23 = vector.shape_cast %21 : vector<8x8x8xf32> to vector<8x1x8x8xf32>
    %24 = vector.broadcast %22 : vector<8x4x1x8xf32> to vector<8x4x8x8xf32>
    %25 = vector.broadcast %23 : vector<8x1x8x8xf32> to vector<8x4x8x8xf32>
    %26 = arith.mulf %24, %25 : vector<8x4x8x8xf32>
    %cst_8 = arith.constant dense<0.000000e+00> : vector<8x4x8xf32>
    %27 = vector.multi_reduction <add>, %26, %cst_8 [3] : vector<8x4x8x8xf32> to vector<8x4x8xf32>
    %28 = vector.extract_strided_slice %11 {offsets = [0, 0, 16], sizes = [8, 4, 8], strides = [1, 1, 1]} : vector<8x4x32xf32> to vector<8x4x8xf32>
    %29 = vector.extract_strided_slice %5 {offsets = [0, 0, 16], sizes = [8, 8, 8], strides = [1, 1, 1]} : vector<8x8x32xf32> to vector<8x8x8xf32>
    %30 = vector.shape_cast %28 : vector<8x4x8xf32> to vector<8x4x1x8xf32>
    %31 = vector.shape_cast %29 : vector<8x8x8xf32> to vector<8x1x8x8xf32>
    %32 = vector.broadcast %30 : vector<8x4x1x8xf32> to vector<8x4x8x8xf32>
    %33 = vector.broadcast %31 : vector<8x1x8x8xf32> to vector<8x4x8x8xf32>
    %34 = arith.mulf %32, %33 : vector<8x4x8x8xf32>
    %cst_9 = arith.constant dense<0.000000e+00> : vector<8x4x8xf32>
    %35 = vector.multi_reduction <add>, %34, %cst_9 [3] : vector<8x4x8x8xf32> to vector<8x4x8xf32>
    %36 = vector.extract_strided_slice %11 {offsets = [0, 0, 24], sizes = [8, 4, 8], strides = [1, 1, 1]} : vector<8x4x32xf32> to vector<8x4x8xf32>
    %37 = vector.extract_strided_slice %5 {offsets = [0, 0, 24], sizes = [8, 8, 8], strides = [1, 1, 1]} : vector<8x8x32xf32> to vector<8x8x8xf32>
    %38 = vector.shape_cast %36 : vector<8x4x8xf32> to vector<8x4x1x8xf32>
    %39 = vector.shape_cast %37 : vector<8x8x8xf32> to vector<8x1x8x8xf32>
    %40 = vector.broadcast %38 : vector<8x4x1x8xf32> to vector<8x4x8x8xf32>
    %41 = vector.broadcast %39 : vector<8x1x8x8xf32> to vector<8x4x8x8xf32>
    %42 = arith.mulf %40, %41 : vector<8x4x8x8xf32>
    %cst_10 = arith.constant dense<0.000000e+00> : vector<8x4x8xf32>
    %43 = vector.multi_reduction <add>, %42, %cst_10 [3] : vector<8x4x8x8xf32> to vector<8x4x8xf32>
    %44 = vector.shape_cast %19 : vector<8x4x8xf32> to vector<8x1x4x8xf32>
    %45 = vector.shape_cast %27 : vector<8x4x8xf32> to vector<8x1x4x8xf32>
    %46 = vector.shape_cast %35 : vector<8x4x8xf32> to vector<8x1x4x8xf32>
    %47 = vector.shape_cast %43 : vector<8x4x8xf32> to vector<8x1x4x8xf32>
    %48 = tpu.concatenate %44, %45, %46, %47 in 1 : vector<8x1x4x8xf32>, vector<8x1x4x8xf32>, vector<8x1x4x8xf32>, vector<8x1x4x8xf32> -> vector<8x4x4x8xf32>
    %c0_11 = arith.constant 0 : index
    %c0_12 = arith.constant 0 : index
    %c0_13 = arith.constant 0 : index
    %49 = vector.load %arg2[%c0_11, %c0_12, %c0_13] : memref<8x4x8xf32, #tpu.memory_space<vmem>>, vector<8x4x8xf32>
    %cst_14 = arith.constant 1.000000e+00 : f32
    %50 = vector.broadcast %cst_14 : f32 to vector<8x4x8xf32>
    %51 = arith.subf %50, %49 : vector<8x4x8xf32>
    %52 = vector.shape_cast %51 : vector<8x4x8xf32> to vector<8x1x4x8xf32>
    %cst_15 = arith.constant -1.000000e+30 : f32
    %53 = vector.broadcast %cst_15 : f32 to vector<8x4x8xf32>
    %54 = arith.mulf %49, %53 : vector<8x4x8xf32>
    %55 = vector.shape_cast %54 : vector<8x4x8xf32> to vector<8x1x4x8xf32>
    %56 = vector.broadcast %55 : vector<8x1x4x8xf32> to vector<8x4x4x8xf32>
    %57 = arith.addf %48, %56 : vector<8x4x4x8xf32>
    %cst_16 = arith.constant dense<0xFF800000> : vector<8x4x4xf32>
    %58 = vector.multi_reduction <maximumf>, %57, %cst_16 [3] : vector<8x4x4x8xf32> to vector<8x4x4xf32>
    %59 = vector.shape_cast %58 : vector<8x4x4xf32> to vector<8x4x4x1xf32>
    %60 = vector.broadcast %59 : vector<8x4x4x1xf32> to vector<8x4x4x8xf32>
    %61 = arith.subf %57, %60 : vector<8x4x4x8xf32>
    %62 = math.exp %61 : vector<8x4x4x8xf32>
    %63 = vector.broadcast %52 : vector<8x1x4x8xf32> to vector<8x4x4x8xf32>
    %64 = arith.mulf %62, %63 : vector<8x4x4x8xf32>
    %cst_17 = arith.constant dense<0.000000e+00> : vector<8x4x4xf32>
    %65 = vector.multi_reduction <add>, %64, %cst_17 [3] : vector<8x4x4x8xf32> to vector<8x4x4xf32>
    %66 = vector.shape_cast %65 : vector<8x4x4xf32> to vector<8x4x4x1xf32>
    %cst_18 = arith.constant 1.000000e-30 : f32
    %67 = vector.broadcast %cst_18 : f32 to vector<8x4x4x1xf32>
    %68 = arith.maximumf %66, %67 : vector<8x4x4x1xf32>
    %69 = tpu.reciprocal %68 {approx = true} : vector<8x4x4x1xf32> -> vector<8x4x4x1xf32>
    %70 = arith.mulf %68, %69 : vector<8x4x4x1xf32>
    %cst_19 = arith.constant 2.000000e+00 : f32
    %71 = vector.broadcast %cst_19 : f32 to vector<8x4x4x1xf32>
    %72 = arith.subf %71, %70 : vector<8x4x4x1xf32>
    %73 = arith.mulf %69, %72 : vector<8x4x4x1xf32>
    %cst_20 = arith.constant 0.000000e+00 : f32
    %74 = vector.broadcast %cst_20 : f32 to vector<8x4x4x1xf32>
    %75 = arith.cmpf ogt, %66, %74 : vector<8x4x4x1xf32>
    %cst_21 = arith.constant 0.000000e+00 : f32
    %76 = vector.broadcast %cst_21 : f32 to vector<8x4x4x1xf32>
    %77 = arith.select %75, %73, %76 : vector<8x4x4x1xi1>, vector<8x4x4x1xf32>
    %78 = vector.broadcast %77 : vector<8x4x4x1xf32> to vector<8x4x4x8xf32>
    %79 = arith.mulf %64, %78 : vector<8x4x4x8xf32>
    %80 = vector.extract_strided_slice %6 {offsets = [0, 0, 0], sizes = [8, 8, 8], strides = [1, 1, 1]} : vector<8x8x32xf32> to vector<8x8x8xf32>
    %81 = vector.extract_strided_slice %79 {offsets = [0, 0, 0, 0], sizes = [8, 1, 4, 8], strides = [1, 1, 1, 1]} : vector<8x4x4x8xf32> to vector<8x1x4x8xf32>
    %82 = vector.shape_cast %81 : vector<8x1x4x8xf32> to vector<8x4x8xf32>
    %83 = vector.shape_cast %82 : vector<8x4x8xf32> to vector<8x4x8x1xf32>
    %84 = vector.shape_cast %80 : vector<8x8x8xf32> to vector<8x1x8x8xf32>
    %85 = vector.broadcast %83 : vector<8x4x8x1xf32> to vector<8x4x8x8xf32>
    %86 = vector.broadcast %84 : vector<8x1x8x8xf32> to vector<8x4x8x8xf32>
    %87 = arith.mulf %85, %86 : vector<8x4x8x8xf32>
    %cst_22 = arith.constant dense<0.000000e+00> : vector<8x4x8xf32>
    %88 = vector.multi_reduction <add>, %87, %cst_22 [2] : vector<8x4x8x8xf32> to vector<8x4x8xf32>
    %89 = vector.extract_strided_slice %6 {offsets = [0, 0, 8], sizes = [8, 8, 8], strides = [1, 1, 1]} : vector<8x8x32xf32> to vector<8x8x8xf32>
    %90 = vector.extract_strided_slice %79 {offsets = [0, 1, 0, 0], sizes = [8, 1, 4, 8], strides = [1, 1, 1, 1]} : vector<8x4x4x8xf32> to vector<8x1x4x8xf32>
    %91 = vector.shape_cast %90 : vector<8x1x4x8xf32> to vector<8x4x8xf32>
    %92 = vector.shape_cast %91 : vector<8x4x8xf32> to vector<8x4x8x1xf32>
    %93 = vector.shape_cast %89 : vector<8x8x8xf32> to vector<8x1x8x8xf32>
    %94 = vector.broadcast %92 : vector<8x4x8x1xf32> to vector<8x4x8x8xf32>
    %95 = vector.broadcast %93 : vector<8x1x8x8xf32> to vector<8x4x8x8xf32>
    %96 = arith.mulf %94, %95 : vector<8x4x8x8xf32>
    %cst_23 = arith.constant dense<0.000000e+00> : vector<8x4x8xf32>
    %97 = vector.multi_reduction <add>, %96, %cst_23 [2] : vector<8x4x8x8xf32> to vector<8x4x8xf32>
    %98 = vector.extract_strided_slice %6 {offsets = [0, 0, 16], sizes = [8, 8, 8], strides = [1, 1, 1]} : vector<8x8x32xf32> to vector<8x8x8xf32>
    %99 = vector.extract_strided_slice %79 {offsets = [0, 2, 0, 0], sizes = [8, 1, 4, 8], strides = [1, 1, 1, 1]} : vector<8x4x4x8xf32> to vector<8x1x4x8xf32>
    %100 = vector.shape_cast %99 : vector<8x1x4x8xf32> to vector<8x4x8xf32>
    %101 = vector.shape_cast %100 : vector<8x4x8xf32> to vector<8x4x8x1xf32>
    %102 = vector.shape_cast %98 : vector<8x8x8xf32> to vector<8x1x8x8xf32>
    %103 = vector.broadcast %101 : vector<8x4x8x1xf32> to vector<8x4x8x8xf32>
    %104 = vector.broadcast %102 : vector<8x1x8x8xf32> to vector<8x4x8x8xf32>
    %105 = arith.mulf %103, %104 : vector<8x4x8x8xf32>
    %cst_24 = arith.constant dense<0.000000e+00> : vector<8x4x8xf32>
    %106 = vector.multi_reduction <add>, %105, %cst_24 [2] : vector<8x4x8x8xf32> to vector<8x4x8xf32>
    %107 = vector.extract_strided_slice %6 {offsets = [0, 0, 24], sizes = [8, 8, 8], strides = [1, 1, 1]} : vector<8x8x32xf32> to vector<8x8x8xf32>
    %108 = vector.extract_strided_slice %79 {offsets = [0, 3, 0, 0], sizes = [8, 1, 4, 8], strides = [1, 1, 1, 1]} : vector<8x4x4x8xf32> to vector<8x1x4x8xf32>
    %109 = vector.shape_cast %108 : vector<8x1x4x8xf32> to vector<8x4x8xf32>
    %110 = vector.shape_cast %109 : vector<8x4x8xf32> to vector<8x4x8x1xf32>
    %111 = vector.shape_cast %107 : vector<8x8x8xf32> to vector<8x1x8x8xf32>
    %112 = vector.broadcast %110 : vector<8x4x8x1xf32> to vector<8x4x8x8xf32>
    %113 = vector.broadcast %111 : vector<8x1x8x8xf32> to vector<8x4x8x8xf32>
    %114 = arith.mulf %112, %113 : vector<8x4x8x8xf32>
    %cst_25 = arith.constant dense<0.000000e+00> : vector<8x4x8xf32>
    %115 = vector.multi_reduction <add>, %114, %cst_25 [2] : vector<8x4x8x8xf32> to vector<8x4x8xf32>
    %116 = tpu.concatenate %88, %97, %106, %115 in 2 : vector<8x4x8xf32>, vector<8x4x8xf32>, vector<8x4x8xf32>, vector<8x4x8xf32> -> vector<8x4x32xf32>
    %117 = arith.truncf %116 : vector<8x4x32xf32> to vector<8x4x32xbf16>
    %118 = vector.shape_cast %117 : vector<8x4x32xbf16> to vector<32x32xbf16>
    %c0_26 = arith.constant 0 : index
    %c0_27 = arith.constant 0 : index
    %119 = vector.load %arg6[%c0_26, %c0_27] : memref<32x32xbf16, #tpu.memory_space<vmem>>, vector<32x32xbf16>
    %cst_28 = arith.constant dense<0.000000e+00> : vector<32x32xf32>
    %120 = tpu.matmul %118, %119, %cst_28 {dimension_numbers = #tpu.dot_dimension_numbers<[1], [0], [0], [1], [0, 0, 1, 1], [], []>} : vector<32x32xbf16>, vector<32x32xbf16>, vector<32x32xf32> -> vector<32x32xf32>
    %c0_29 = arith.constant 0 : index
    %c0_30 = arith.constant 0 : index
    %121 = vector.load %arg7[%c0_29, %c0_30] : memref<1x32xf32, #tpu.memory_space<vmem>>, vector<1x32xf32>
    %122 = vector.broadcast %121 : vector<1x32xf32> to vector<32x32xf32>
    %123 = arith.addf %120, %122 : vector<32x32xf32>
    %124 = vector.shape_cast %123 : vector<32x32xf32> to vector<8x4x32xf32>
    %c0_31 = arith.constant 0 : index
    %c0_32 = arith.constant 0 : index
    %c0_33 = arith.constant 0 : index
    %125 = vector.load %arg3[%c0_31, %c0_32, %c0_33] : memref<8x4x1xf32, #tpu.memory_space<vmem>>, vector<8x4x1xf32>
    %cst_34 = arith.constant 5.000000e-01 : f32
    %126 = vector.broadcast %cst_34 : f32 to vector<8x4x1xf32>
    %127 = arith.cmpf ogt, %125, %126 : vector<8x4x1xf32>
    %cst_35 = arith.constant 0.000000e+00 : f32
    %128 = vector.shape_cast %127 : vector<8x4x1xi1> to vector<8x4x1xi1>
    %129 = vector.broadcast %128 : vector<8x4x1xi1> to vector<8x4x32xi1>
    %130 = vector.broadcast %cst_35 : f32 to vector<8x4x32xf32>
    %131 = arith.select %129, %130, %124 : vector<8x4x32xi1>, vector<8x4x32xf32>
    %132 = vector.extract_strided_slice %131 {offsets = [0, 0, 0], sizes = [8, 1, 32], strides = [1, 1, 1]} : vector<8x4x32xf32> to vector<8x1x32xf32>
    %133 = vector.extract_strided_slice %131 {offsets = [0, 1, 0], sizes = [8, 1, 32], strides = [1, 1, 1]} : vector<8x4x32xf32> to vector<8x1x32xf32>
    %134 = vector.extract_strided_slice %131 {offsets = [0, 2, 0], sizes = [8, 1, 32], strides = [1, 1, 1]} : vector<8x4x32xf32> to vector<8x1x32xf32>
    %135 = vector.extract_strided_slice %131 {offsets = [0, 3, 0], sizes = [8, 1, 32], strides = [1, 1, 1]} : vector<8x4x32xf32> to vector<8x1x32xf32>
    %136 = tpu.concatenate %132, %133, %134, %135 in 2 : vector<8x1x32xf32>, vector<8x1x32xf32>, vector<8x1x32xf32>, vector<8x1x32xf32> -> vector<8x1x128xf32>
    %137 = vector.shape_cast %136 : vector<8x1x128xf32> to vector<8x128xf32>
    %c0_36 = arith.constant 0 : index
    %c0_37 = arith.constant 0 : index
    %138 = vector.load %arg8[%c0_36, %c0_37] : memref<8x128xf32, #tpu.memory_space<vmem>>, vector<8x128xf32>
    tpu.vector_store %arg8[%c0_36, %c0_37], %137 {strides = array<i32>} : memref<8x128xf32, #tpu.memory_space<vmem>>, vector<8x128xf32>,
    return
  }
  func.func @transform_0(%arg0: i32) -> (i32, i32, i32) {
    %c0_i32 = arith.constant 0 : i32
    %c0_i32_0 = arith.constant 0 : i32
    %c0_i32_1 = arith.constant 0 : i32
    return %arg0, %c0_i32, %c0_i32_0 : i32, i32, i32
  }
  func.func @transform_1(%arg0: i32) -> (i32, i32, i32) {
    %c0_i32 = arith.constant 0 : i32
    %c0_i32_0 = arith.constant 0 : i32
    %c0_i32_1 = arith.constant 0 : i32
    return %arg0, %c0_i32, %c0_i32_0 : i32, i32, i32
  }
  func.func @transform_2(%arg0: i32) -> (i32, i32, i32) {
    %c0_i32 = arith.constant 0 : i32
    %c0_i32_0 = arith.constant 0 : i32
    %c0_i32_1 = arith.constant 0 : i32
    return %arg0, %c0_i32, %c0_i32_0 : i32, i32, i32
  }
  func.func @transform_3(%arg0: i32) -> (i32, i32) {
    %c0_i32 = arith.constant 0 : i32
    %c0_i32_0 = arith.constant 0 : i32
    %c0_i32_1 = arith.constant 0 : i32
    return %c0_i32, %c0_i32_0 : i32, i32
  }
  func.func @transform_4(%arg0: i32) -> (i32, i32) {
    %c0_i32 = arith.constant 0 : i32
    %c0_i32_0 = arith.constant 0 : i32
    %c0_i32_1 = arith.constant 0 : i32
    return %c0_i32, %c0_i32_0 : i32, i32
  }
  func.func @transform_5(%arg0: i32) -> (i32, i32) {
    %c0_i32 = arith.constant 0 : i32
    %c0_i32_0 = arith.constant 0 : i32
    %c0_i32_1 = arith.constant 0 : i32
    return %c0_i32, %c0_i32_0 : i32, i32
  }
  func.func @transform_6(%arg0: i32) -> (i32, i32) {
    %c0_i32 = arith.constant 0 : i32
    %c0_i32_0 = arith.constant 0 : i32
    %c0_i32_1 = arith.constant 0 : i32
    return %c0_i32, %c0_i32_0 : i32, i32
  }
  func.func @transform_7(%arg0: i32) -> (i32, i32) {
    %c0_i32 = arith.constant 0 : i32
    %c0_i32_0 = arith.constant 0 : i32
    return %arg0, %c0_i32 : i32, i32
  }
}

</mosaic_0001>

<llo_original>
// kernel: tpu_custom_call.1
$region0: #{tpu_custom_call.1}
  #allocation0 [shape = 'u32[]', space=smem, size = 0x4, offset = 0x4, fixed_abs, tag = 'smem constant byte address 0x4 - core index']
  #allocation1 [shape = 'u32[72,128]{1,0:T(1,128)}', space=vmem, size = 0x9000, scoped, tag = 'internal scratch']
  %s0 = inlined_call_operand.vmem [shape: bf16[16,8,32], index: 0, kind: input, shape index: {}]
  %s1 = inlined_call_operand.vmem [shape: f32[16,4,8], index: 1, kind: input, shape index: {}]
  %s2 = inlined_call_operand.vmem [shape: f32[16,4,1], index: 2, kind: input, shape index: {}]
  %s3 = inlined_call_operand.vmem [shape: bf16[32,32], index: 3, kind: input, shape index: {}]
  %s4 = inlined_call_operand.vmem [shape: bf16[32,64], index: 4, kind: input, shape index: {}]
  %s5 = inlined_call_operand.vmem [shape: bf16[32,32], index: 5, kind: input, shape index: {}]
  %s6 = inlined_call_operand.vmem [shape: f32[1,32], index: 6, kind: input, shape index: {}]
  %s7 = inlined_call_operand.hbm [shape: f32[16,128], index: 7, kind: output, shape index: {}]
  %s8 = sld [smem:[#allocation0]]
  $region61: #{tpu_custom_call.1} parent=0
    _
  %s10 = ssub.s32 1, %s8
  %s11 = scalar_select 0, %s10, %s8
  $region1: #{tpu_custom_call.1} parent=0
    #allocation2 [shape = 'u8[8192]{0}', space=vmem, size = 0x2000, scoped, tag = 'output window, operand 0']
    #allocation3 [shape = 's32[2]{0}', space=sflag, size = 0x8, scoped, tag = 'scoped memory for tpu_custom_call.1']
    %12 = vsyncpa [#allocation3], 0
    %s13 = scalar_lea.sflag [#allocation3], 1
    %14 = vsyncpa %s13, 0
    loop: start=0, step=1, limit=4
    $region2: #{tpu_custom_call.1} parent=1 // loop_pre_header
      _
    $region3: #{tpu_custom_call.1} parent=1 // loop_header
      %s16 = sphi 0, %s20
      %p17 = scmp.ge.s32.totalorder %s16, 4
      %s26 = sphi 0, %s28
      %s29 = sphi 0, %s26
      %s30 = sphi 0, %s29
      %s46 = sphi 0, %s30
      %s52 = sphi 0, %s54
      %s55 = sphi 0, %s52
      %s56 = sphi 0, %s55
      %s72 = sphi 0, %s56
      %s78 = sphi 0, %s80
      %s81 = sphi 0, %s78
      %s82 = sphi 0, %s81
      %s98 = sphi 0, %s82
      %s102 = sphi 0, %s102
      %s104 = sphi 0, %s102
      %s105 = sphi 0, %s104
      %s119 = sphi 0, %s105
      %s123 = sphi 0, %s123
      %s125 = sphi 0, %s123
      %s126 = sphi 0, %s125
      %s140 = sphi 0, %s126
      %s144 = sphi 0, %s144
      %s146 = sphi 0, %s144
      %s147 = sphi 0, %s146
      %s161 = sphi 0, %s147
      %s165 = sphi 0, %s165
      %s167 = sphi 0, %s165
      %s168 = sphi 0, %s167
      %s182 = sphi 0, %s168
      %s188 = sphi 0, %s190
      %s191 = sphi 0, %s188
      %s192 = sphi 0, %s191
      %s208 = sphi 0, %s192
    $region4: #{tpu_custom_call.1} parent=1 // loop_header_branch
      %19 = sbr.rel (%p17) target = $region8
    $region5: #{tpu_custom_call.1} parent=1 // loop_body
      %s21 = ssub.s32 %s16, 1
      %s22 = ssub.s32 %s16, 2
      %s23 = sadd.s32 %s16, 1
      %s24 = ssub.s32 %s16, %s23
      %p25 = scmp.eq.s32.totalorder %s24, 0
      %s27 = sadd.s32 %s26, 1
      %s28 = scalar_select %p25, %s26, %s27
      %p31 = pneg %p25
      %p32 = scmp.eq.s32.totalorder %s16, 1
      %p33 = por %p31, %p32
      %p34 = scmp.ne.s32.totalorder %s26, %s29
      %p35 = scmp.eq.s32.totalorder %s16, 0
      %p36 = por %p34, %p35
      %p37 = scmp.ne.s32.totalorder %s26, %s29
      %p38 = scmp.eq.s32.totalorder %s21, 1
      %p39 = por %p37, %p38
      %p40 = scmp.ne.s32.totalorder %s29, %s30
      %p41 = scmp.eq.s32.totalorder %s21, 0
      %p42 = por %p40, %p41
      %p43 = scmp.ne.s32.totalorder %s29, %s30
      %p44 = scmp.eq.s32.totalorder %s22, 1
      %p45 = por %p43, %p44
      %p47 = scmp.ne.s32.totalorder %s30, %s46
      %p48 = scmp.eq.s32.totalorder %s22, 0
      %p49 = por %p47, %p48
      %s50 = ssub.s32 %s16, %s23
      %p51 = scmp.eq.s32.totalorder %s50, 0
      %s53 = sadd.s32 %s52, 1
      %s54 = scalar_select %p51, %s52, %s53
      %p57 = pneg %p51
      %p58 = scmp.eq.s32.totalorder %s16, 1
      %p59 = por %p57, %p58
      %p60 = scmp.ne.s32.totalorder %s52, %s55
      %p61 = scmp.eq.s32.totalorder %s16, 0
      %p62 = por %p60, %p61
      %p63 = scmp.ne.s32.totalorder %s52, %s55
      %p64 = scmp.eq.s32.totalorder %s21, 1
      %p65 = por %p63, %p64
      %p66 = scmp.ne.s32.totalorder %s55, %s56
      %p67 = scmp.eq.s32.totalorder %s21, 0
      %p68 = por %p66, %p67
      %p69 = scmp.ne.s32.totalorder %s55, %s56
      %p70 = scmp.eq.s32.totalorder %s22, 1
      %p71 = por %p69, %p70
      %p73 = scmp.ne.s32.totalorder %s56, %s72
      %p74 = scmp.eq.s32.totalorder %s22, 0
      %p75 = por %p73, %p74
      %s76 = ssub.s32 %s16, %s23
      %p77 = scmp.eq.s32.totalorder %s76, 0
      %s79 = sadd.s32 %s78, 1
      %s80 = scalar_select %p77, %s78, %s79
      %p83 = pneg %p77
      %p84 = scmp.eq.s32.totalorder %s16, 1
      %p85 = por %p83, %p84
      %p86 = scmp.ne.s32.totalorder %s78, %s81
      %p87 = scmp.eq.s32.totalorder %s16, 0
      %p88 = por %p86, %p87
      %p89 = scmp.ne.s32.totalorder %s78, %s81
      %p90 = scmp.eq.s32.totalorder %s21, 1
      %p91 = por %p89, %p90
      %p92 = scmp.ne.s32.totalorder %s81, %s82
      %p93 = scmp.eq.s32.totalorder %s21, 0
      %p94 = por %p92, %p93
      %p95 = scmp.ne.s32.totalorder %s81, %s82
      %p96 = scmp.eq.s32.totalorder %s22, 1
      %p97 = por %p95, %p96
      %p99 = scmp.ne.s32.totalorder %s82, %s98
      %p100 = scmp.eq.s32.totalorder %s22, 0
      %p101 = por %p99, %p100
      %s103 = sadd.s32 %s102, 1
      %p106 = scmp.eq.s32.totalorder %s16, 1
      %p107 = scmp.ne.s32.totalorder %s102, %s104
      %p108 = scmp.eq.s32.totalorder %s16, 0
      %p109 = por %p107, %p108
      %p110 = scmp.ne.s32.totalorder %s102, %s104
      %p111 = scmp.eq.s32.totalorder %s21, 1
      %p112 = por %p110, %p111
      %p113 = scmp.ne.s32.totalorder %s104, %s105
      %p114 = scmp.eq.s32.totalorder %s21, 0
      %p115 = por %p113, %p114
      %p116 = scmp.ne.s32.totalorder %s104, %s105
      %p117 = scmp.eq.s32.totalorder %s22, 1
      %p118 = por %p116, %p117
      %p120 = scmp.ne.s32.totalorder %s105, %s119
      %p121 = scmp.eq.s32.totalorder %s22, 0
      %p122 = por %p120, %p121
      %s124 = sadd.s32 %s123, 1
      %p127 = scmp.eq.s32.totalorder %s16, 1
      %p128 = scmp.ne.s32.totalorder %s123, %s125
      %p129 = scmp.eq.s32.totalorder %s16, 0
      %p130 = por %p128, %p129
      %p131 = scmp.ne.s32.totalorder %s123, %s125
      %p132 = scmp.eq.s32.totalorder %s21, 1
      %p133 = por %p131, %p132
      %p134 = scmp.ne.s32.totalorder %s125, %s126
      %p135 = scmp.eq.s32.totalorder %s21, 0
      %p136 = por %p134, %p135
      %p137 = scmp.ne.s32.totalorder %s125, %s126
      %p138 = scmp.eq.s32.totalorder %s22, 1
      %p139 = por %p137, %p138
      %p141 = scmp.ne.s32.totalorder %s126, %s140
      %p142 = scmp.eq.s32.totalorder %s22, 0
      %p143 = por %p141, %p142
      %s145 = sadd.s32 %s144, 1
      %p148 = scmp.eq.s32.totalorder %s16, 1
      %p149 = scmp.ne.s32.totalorder %s144, %s146
      %p150 = scmp.eq.s32.totalorder %s16, 0
      %p151 = por %p149, %p150
      %p152 = scmp.ne.s32.totalorder %s144, %s146
      %p153 = scmp.eq.s32.totalorder %s21, 1
      %p154 = por %p152, %p153
      %p155 = scmp.ne.s32.totalorder %s146, %s147
      %p156 = scmp.eq.s32.totalorder %s21, 0
      %p157 = por %p155, %p156
      %p158 = scmp.ne.s32.totalorder %s146, %s147
      %p159 = scmp.eq.s32.totalorder %s22, 1
      %p160 = por %p158, %p159
      %p162 = scmp.ne.s32.totalorder %s147, %s161
      %p163 = scmp.eq.s32.totalorder %s22, 0
      %p164 = por %p162, %p163
      %s166 = sadd.s32 %s165, 1
      %p169 = scmp.eq.s32.totalorder %s16, 1
      %p170 = scmp.ne.s32.totalorder %s165, %s167
      %p171 = scmp.eq.s32.totalorder %s16, 0
      %p172 = por %p170, %p171
      %p173 = scmp.ne.s32.totalorder %s165, %s167
      %p174 = scmp.eq.s32.totalorder %s21, 1
      %p175 = por %p173, %p174
      %p176 = scmp.ne.s32.totalorder %s167, %s168
      %p177 = scmp.eq.s32.totalorder %s21, 0
      %p178 = por %p176, %p177
      %p179 = scmp.ne.s32.totalorder %s167, %s168
      %p180 = scmp.eq.s32.totalorder %s22, 1
      %p181 = por %p179, %p180
      %p183 = scmp.ne.s32.totalorder %s168, %s182
      %p184 = scmp.eq.s32.totalorder %s22, 0
      %p185 = por %p183, %p184
      %s186 = ssub.s32 %s16, %s23
      %p187 = scmp.eq.s32.totalorder %s186, 0
      %s189 = sadd.s32 %s188, 1
      %s190 = scalar_select %p187, %s188, %s189
      %p193 = pneg %p187
      %p194 = scmp.eq.s32.totalorder %s16, 1
      %p195 = por %p193, %p194
      %p196 = scmp.ne.s32.totalorder %s188, %s191
      %p197 = scmp.eq.s32.totalorder %s16, 0
      %p198 = por %p196, %p197
      %p199 = scmp.ne.s32.totalorder %s188, %s191
      %p200 = scmp.eq.s32.totalorder %s21, 1
      %p201 = por %p199, %p200
      %p202 = scmp.ne.s32.totalorder %s191, %s192
      %p203 = scmp.eq.s32.totalorder %s21, 0
      %p204 = por %p202, %p203
      %p205 = scmp.ne.s32.totalorder %s191, %s192
      %p206 = scmp.eq.s32.totalorder %s22, 1
      %p207 = por %p205, %p206
      %p209 = scmp.ne.s32.totalorder %s192, %s208
      %p210 = scmp.eq.s32.totalorder %s22, 0
      %p211 = por %p209, %p210
      %p212 = scmp.le.s32.totalorder 1, %s16
      %p213 = scmp.lt.s32.totalorder %s16, 3
      %p214 = pnand %p212, %p213
      %p215 = pneg %p214
      // Predicated region
      $region9: #{tpu_custom_call.1} parent=5 // pred_check
        _
      $region10: #{tpu_custom_call.1} parent=5 // pred_check_branch
        %217 = sbr.rel (%p214) target = $region12
      $region11: #{tpu_custom_call.1} parent=5 // pred_region
        %s218 = ssub.s32 %s16, 1
        // Predicated region
        $region13: #{tpu_custom_call.1} parent=11 // pred_check
          %p219 = pneg %p115
        $region14: #{tpu_custom_call.1} parent=11 // pred_check_branch
          %221 = sbr.rel (%p219) target = $region16
        $region15: #{tpu_custom_call.1} parent=11 // pred_region
          _
        $region16: #{tpu_custom_call.1} parent=11 // pred_fallthru
          _
        // Predicated region
        $region17: #{tpu_custom_call.1} parent=11 // pred_check
          %p222 = pneg %p136
        $region18: #{tpu_custom_call.1} parent=11 // pred_check_branch
          %224 = sbr.rel (%p222) target = $region20
        $region19: #{tpu_custom_call.1} parent=11 // pred_region
          _
        $region20: #{tpu_custom_call.1} parent=11 // pred_fallthru
          _
        // Predicated region
        $region21: #{tpu_custom_call.1} parent=11 // pred_check
          %p225 = pneg %p157
        $region22: #{tpu_custom_call.1} parent=11 // pred_check_branch
          %227 = sbr.rel (%p225) target = $region24
        $region23: #{tpu_custom_call.1} parent=11 // pred_region
          _
        $region24: #{tpu_custom_call.1} parent=11 // pred_fallthru
          _
        // Predicated region
        $region25: #{tpu_custom_call.1} parent=11 // pred_check
          %p228 = pneg %p178
        $region26: #{tpu_custom_call.1} parent=11 // pred_check_branch
          %230 = sbr.rel (%p228) target = $region28
        $region27: #{tpu_custom_call.1} parent=11 // pred_region
          _
        $region28: #{tpu_custom_call.1} parent=11 // pred_fallthru
          _
      $region12: #{tpu_custom_call.1} parent=5 // pred_fallthru
        _
      %p231 = scmp.lt.s32.totalorder %s16, 2
      // Predicated region
      $region29: #{tpu_custom_call.1} parent=5 // pred_check
        %p232 = pneg %p231
      $region30: #{tpu_custom_call.1} parent=5 // pred_check_branch
        %234 = sbr.rel (%p232) target = $region32
      $region31: #{tpu_custom_call.1} parent=5 // pred_region
        // Predicated region
        $region33: #{tpu_custom_call.1} parent=31 // pred_check
          %p235 = pneg %p36
        $region34: #{tpu_custom_call.1} parent=31 // pred_check_branch
          %237 = sbr.rel (%p235) target = $region36
        $region35: #{tpu_custom_call.1} parent=31 // pred_region
          %s238 = smul.u32 8, %s16
          %p239 = scmp.lt.s32.totalorder %s238, 15
          %s240 = scalar_select %p239, %s238, 15
          %s241 = smul.addr %s240, 4
          %s242 = scalar_lea.vmem %s0, %s241
          %s243 = smul.u32 8, %s16
        $region36: #{tpu_custom_call.1} parent=31 // pred_fallthru
          _
        // Predicated region
        $region37: #{tpu_custom_call.1} parent=31 // pred_check
          %p244 = pneg %p62
        $region38: #{tpu_custom_call.1} parent=31 // pred_check_branch
          %246 = sbr.rel (%p244) target = $region40
        $region39: #{tpu_custom_call.1} parent=31 // pred_region
          %s247 = smul.u32 8, %s16
          %p248 = scmp.lt.s32.totalorder %s247, 15
          %s249 = scalar_select %p248, %s247, 15
          %s250 = smul.addr %s249, 4
          %s251 = scalar_lea.vmem %s1, %s250
          %s252 = smul.u32 8, %s16
        $region40: #{tpu_custom_call.1} parent=31 // pred_fallthru
          _
        // Predicated region
        $region41: #{tpu_custom_call.1} parent=31 // pred_check
          %p253 = pneg %p88
        $region42: #{tpu_custom_call.1} parent=31 // pred_check_branch
          %255 = sbr.rel (%p253) target = $region44
        $region43: #{tpu_custom_call.1} parent=31 // pred_region
          %s256 = smul.u32 8, %s16
          %p257 = scmp.lt.s32.totalorder %s256, 15
          %s258 = scalar_select %p257, %s256, 15
          %s259 = smul.addr %s258, 4
          %s260 = scalar_lea.vmem %s2, %s259
          %s261 = smul.u32 8, %s16
        $region44: #{tpu_custom_call.1} parent=31 // pred_fallthru
          _
      $region32: #{tpu_custom_call.1} parent=5 // pred_fallthru
        _
      %p262 = scmp.le.s32.totalorder 1, %s16
      %p263 = scmp.lt.s32.totalorder %s16, 3
      %p264 = pnand %p262, %p263
      %p265 = pneg %p264
      // Predicated region
      $region45: #{tpu_custom_call.1} parent=5 // pred_check
        _
      $region46: #{tpu_custom_call.1} parent=5 // pred_check_branch
        %267 = sbr.rel (%p264) target = $region48
      $region47: #{tpu_custom_call.1} parent=5 // pred_region
        %s268 = ssub.s32 %s16, 1
        %s269 = smul.u32 8, %s21
        %p270 = scmp.lt.s32.totalorder %s269, 15
        %s271 = scalar_select %p270, %s269, 15
        %s272 = smul.addr %s271, 4
        %s273 = scalar_lea.vmem %s0, %s272
        %p274 = pneg %p42
        %p275 = pneg %p39
        %s276 = smul.u32 8, %s21
        %p277 = scmp.lt.s32.totalorder %s276, 15
        %s278 = scalar_select %p277, %s276, 15
        %s279 = smul.addr %s278, 4
        %s280 = scalar_lea.vmem %s1, %s279
        %p281 = pneg %p68
        %p282 = pneg %p65
        %s283 = smul.u32 8, %s21
        %p284 = scmp.lt.s32.totalorder %s283, 15
        %s285 = scalar_select %p284, %s283, 15
        %s286 = smul.addr %s285, 4
        %s287 = scalar_lea.vmem %s2, %s286
        %p288 = pneg %p94
        %p289 = pneg %p91
        %p290 = pneg %p115
        %p291 = pneg %p112
        %p292 = pneg %p136
        %p293 = pneg %p133
        %p294 = pneg %p157
        %p295 = pneg %p154
        %p296 = pneg %p178
        %p297 = pneg %p175
        %p298 = pneg %p204
        %p299 = pneg %p201
        %s300 = sand.u32 %s191, 1
        %s301 = scalar_lea.sflag [#allocation3], %s300
        %s302 = sand.u32 %s191, 1
        %s303 = smul.addr %s302, 8
        %s304 = scalar_lea.vmem [#allocation2], %s303
        %s305 = smul.u32 8, %s21
        %p306 = scmp.lt.s32.totalorder %s305, 15
        %s307 = scalar_select %p306, %s305, 15
        %s308 = smul.addr %s307, 4
        %s309 = scalar_lea.vmem %s0, %s308
        %s310 = smul.u32 8, %s21
        %s311 = smul.u32 8, %s21
        %p312 = scmp.lt.s32.totalorder %s311, 15
        %s313 = scalar_select %p312, %s311, 15
        %s314 = smul.addr %s313, 4
        %s315 = scalar_lea.vmem %s1, %s314
        %s316 = smul.u32 8, %s21
        %s317 = smul.u32 8, %s21
        %p318 = scmp.lt.s32.totalorder %s317, 15
        %s319 = scalar_select %p318, %s317, 15
        %s320 = smul.addr %s319, 4
        %s321 = scalar_lea.vmem %s2, %s320
        %s322 = smul.u32 8, %s21
        %v324 = vld [vmem:[%s309] sm:$0xf]
        %v325 = vld [vmem:[%s309 + $0x4] sm:$0xf]
        %v326 = vld [vmem:[%s309 + $0x8] sm:$0xf]
        %v327 = vld [vmem:[%s309 + $0xc] sm:$0xf]
        %v328 = vld [vmem:[%s309 + $0x10] sm:$0xf]
        %v329 = vld [vmem:[%s309 + $0x14] sm:$0xf]
        %v330 = vld [vmem:[%s309 + $0x18] sm:$0xf]
        %v331 = vld [vmem:[%s309 + $0x1c] sm:$0xf]
        %v332 = vld [vmem:[%s4] sm:$0xf]
        %v333 = vld [vmem:[%s4 + $0x4] sm:$0xf]
        %v334 = vld [vmem:[%s4 + $0x8] sm:$0xf]
        %v335 = vld [vmem:[%s4 + $0xc] sm:$0xf]
        %v344 = vunpack.c.l.b16 %v324
        %v345 = vunpack.c.l.b16 %v325
        %v346 = vunpack.c.l.b16 %v326
        %v347 = vunpack.c.l.b16 %v327
        %v348 = vunpack.c.l.b16 %v328
        %v349 = vunpack.c.l.b16 %v329
        %v350 = vunpack.c.l.b16 %v330
        %v351 = vunpack.c.l.b16 %v331
        %v352 = vpack.c.b16 %v345, %v344
        %v353 = vpack.c.b16 %v347, %v346
        %v354 = vpack.c.b16 %v349, %v348
        %v355 = vpack.c.b16 %v351, %v350
        %v360 = vunpack.c.l.b16 %v332
        %v361 = vunpack.c.l.b16 %v333
        %v362 = vunpack.c.l.b16 %v334
        %v363 = vunpack.c.l.b16 %v335
        %v364 = vpack.c.b16 %v361, %v360
        %v365 = vpack.c.b16 %v363, %v362
        %vm368 = vcmask 261120
        %v370 = vsel %vm368, %v352, 0
        %v373 = vsel %vm368, %v353, 0
        %v376 = vsel %vm368, %v354, 0
        %v379 = vsel %vm368, %v355, 0
        %381 = vmatpush.bf16.msra.mxu0 0
        %382 = vmatpush.bf16.msra.mxu0 0
        %383 = vmatpush.bf16.msra.mxu0 0
        %384 = vmatpush.bf16.msra.mxu0 0
        %385 = vmatpush.bf16.msra.mxu0 0
        %386 = vmatpush.bf16.msra.mxu0 0
        %387 = vmatpush.bf16.msra.mxu0 %v365
        %388 = vmatpush.bf16.msra.mxu0 %v364
        %389 = vmatmul.bf16.gmra.mxu0 %v370
        %v390 = vpop.f32.mrf.mxu0
        %v391 = vadd.f32 0.0, %v390
        %v392 = vpop.f32.mrf.mxu0
        %v393 = vadd.f32 0.0, %v392
        %394 = vmatmul.bf16.gmra.mxu0 %v373
        %v395 = vpop.f32.mrf.mxu0
        %v396 = vadd.f32 0.0, %v395
        %v397 = vpop.f32.mrf.mxu0
        %v398 = vadd.f32 0.0, %v397
        %399 = vmatmul.bf16.gmra.mxu0 %v376
        %v400 = vpop.f32.mrf.mxu0
        %v401 = vadd.f32 0.0, %v400
        %v402 = vpop.f32.mrf.mxu0
        %v403 = vadd.f32 0.0, %v402
        %404 = vmatmul.bf16.gmra.mxu0 %v379
        %v405 = vpop.f32.mrf.mxu0
        %v406 = vadd.f32 0.0, %v405
        %v407 = vpop.f32.mrf.mxu0
        %v408 = vadd.f32 0.0, %v407
        %409 = vdwg.mxu0
        %v410 = vld [vmem:[%s3] sm:$0xf]
        %v411 = vld [vmem:[%s3 + $0x4] sm:$0xf]
        %v412 = vld [vmem:[%s3 + $0x8] sm:$0xf]
        %v413 = vld [vmem:[%s3 + $0xc] sm:$0xf]
        %415 = vst [vmem:[#allocation1] ss:$4 sm:$0xff] %v324
        %s417 = scalar_lea.vmem [#allocation1], 1
        %418 = vst [vmem:[%s417] ss:$4 sm:$0xff] %v325
        %s420 = scalar_lea.vmem [#allocation1], 2
        %421 = vst [vmem:[%s420] ss:$4 sm:$0xff] %v326
        %s423 = scalar_lea.vmem [#allocation1], 3
        %424 = vst [vmem:[%s423] ss:$4 sm:$0xff] %v327
        %s426 = scalar_lea.vmem [#allocation1], 32
        %427 = vst [vmem:[%s426] ss:$4 sm:$0xff] %v328
        %s429 = scalar_lea.vmem [#allocation1], 33
        %430 = vst [vmem:[%s429] ss:$4 sm:$0xff] %v329
        %s432 = scalar_lea.vmem [#allocation1], 34
        %433 = vst [vmem:[%s432] ss:$4 sm:$0xff] %v330
        %s435 = scalar_lea.vmem [#allocation1], 35
        %436 = vst [vmem:[%s435] ss:$4 sm:$0xff] %v331
        %v437 = vld.sshfl [vmem:[#allocation1] sm:$0xff pattern:$0x73625140]
        %v438 = vld.sshfl [vmem:[#allocation1 + $0x20] sm:$0xff pattern:$0x73625140]
        %v443 = vunpack.c.l.b16 %v410
        %v444 = vunpack.c.l.b16 %v411
        %v445 = vunpack.c.l.b16 %v412
        %v446 = vunpack.c.l.b16 %v413
        %v447 = vpack.c.b16 %v444, %v443
        %v448 = vpack.c.b16 %v446, %v445
        %v451 = vsel %vm368, %v437, 0
        %v453 = vsel %vm368, %v438, 0
        %455 = vmatpush.bf16.msra.mxu0 0
        %456 = vmatpush.bf16.msra.mxu0 0
        %457 = vmatpush.bf16.msra.mxu0 0
        %458 = vmatpush.bf16.msra.mxu0 0
        %459 = vmatpush.bf16.msra.mxu0 0
        %460 = vmatpush.bf16.msra.mxu0 0
        %461 = vmatpush.bf16.msra.mxu0 %v448
        %462 = vmatpush.bf16.msra.mxu0 %v447
        %463 = vmatmul.bf16.gmra.mxu0 %v451
        %v464 = vpop.f32.mrf.mxu0
        %v465 = vadd.f32 0.0, %v464
        %v466 = vpop.f32.mrf.mxu0
        %v467 = vadd.f32 0.0, %v466
        %468 = vmatmul.bf16.gmra.mxu0 %v453
        %v469 = vpop.f32.mrf.mxu0
        %v470 = vadd.f32 0.0, %v469
        %v471 = vpop.f32.mrf.mxu0
        %v472 = vadd.f32 0.0, %v471
        %473 = vdwg.mxu0
        %v478 = vrot.slane %v465, 4
        %v479 = vrot.slane %v467, 4
        %v480 = vrot.slane %v470, 4
        %v481 = vrot.slane %v472, 4
        %v482 = vrot.slane %v465, 3
        %v483 = vrot.slane %v478, 3
        %v484 = vrot.slane %v467, 3
        %v485 = vrot.slane %v479, 3
        %v486 = vrot.slane %v470, 3
        %v487 = vrot.slane %v480, 3
        %v488 = vrot.slane %v472, 3
        %v489 = vrot.slane %v481, 3
        %vm490 = vcmask 1040384
        %v491 = vsel %vm490, %v465, %v482
        %vm492 = vcmask 1041409
        %v493 = vsel %vm492, %v465, %v482
        %v494 = vrot.slane %v493, 1
        %vm495 = vcmask 1042434
        %v496 = vsel %vm495, %v465, %v482
        %v497 = vrot.slane %v496, 2
        %vm498 = vcmask 1043459
        %v499 = vsel %vm498, %v465, %v482
        %v500 = vrot.slane %v499, 3
        %v501 = vsel %vm490, %v478, %v483
        %v502 = vsel %vm492, %v478, %v483
        %v503 = vrot.slane %v502, 1
        %v504 = vsel %vm495, %v478, %v483
        %v505 = vrot.slane %v504, 2
        %v506 = vsel %vm498, %v478, %v483
        %v507 = vrot.slane %v506, 3
        %v508 = vsel %vm490, %v467, %v484
        %v509 = vsel %vm492, %v467, %v484
        %v510 = vrot.slane %v509, 1
        %v511 = vsel %vm495, %v467, %v484
        %v512 = vrot.slane %v511, 2
        %v513 = vsel %vm498, %v467, %v484
        %v514 = vrot.slane %v513, 3
        %v515 = vsel %vm490, %v479, %v485
        %v516 = vsel %vm492, %v479, %v485
        %v517 = vrot.slane %v516, 1
        %v518 = vsel %vm495, %v479, %v485
        %v519 = vrot.slane %v518, 2
        %v520 = vsel %vm498, %v479, %v485
        %v521 = vrot.slane %v520, 3
        %v522 = vsel %vm490, %v470, %v486
        %v523 = vsel %vm492, %v470, %v486
        %v524 = vrot.slane %v523, 1
        %v525 = vsel %vm495, %v470, %v486
        %v526 = vrot.slane %v525, 2
        %v527 = vsel %vm498, %v470, %v486
        %v528 = vrot.slane %v527, 3
        %v529 = vsel %vm490, %v480, %v487
        %v530 = vsel %vm492, %v480, %v487
        %v531 = vrot.slane %v530, 1
        %v532 = vsel %vm495, %v480, %v487
        %v533 = vrot.slane %v532, 2
        %v534 = vsel %vm498, %v480, %v487
        %v535 = vrot.slane %v534, 3
        %v536 = vsel %vm490, %v472, %v488
        %v537 = vsel %vm492, %v472, %v488
        %v538 = vrot.slane %v537, 1
        %v539 = vsel %vm495, %v472, %v488
        %v540 = vrot.slane %v539, 2
        %v541 = vsel %vm498, %v472, %v488
        %v542 = vrot.slane %v541, 3
        %v543 = vsel %vm490, %v481, %v489
        %v544 = vsel %vm492, %v481, %v489
        %v545 = vrot.slane %v544, 1
        %v546 = vsel %vm495, %v481, %v489
        %v547 = vrot.slane %v546, 2
        %v548 = vsel %vm498, %v481, %v489
        %v549 = vrot.slane %v548, 3
        %v550 = vperm.slane %v491, 0
        %v551 = vperm.slane %v494, 0
        %v552 = vperm.slane %v497, 0
        %v553 = vperm.slane %v500, 0
        %v554 = vperm.slane %v501, 0
        %v555 = vperm.slane %v503, 0
        %v556 = vperm.slane %v505, 0
        %v557 = vperm.slane %v507, 0
        %v558 = vperm.slane %v508, 0
        %v559 = vperm.slane %v510, 0
        %v560 = vperm.slane %v512, 0
        %v561 = vperm.slane %v514, 0
        %v562 = vperm.slane %v515, 0
        %v563 = vperm.slane %v517, 0
        %v564 = vperm.slane %v519, 0
        %v565 = vperm.slane %v521, 0
        %v566 = vperm.slane %v522, 0
        %v567 = vperm.slane %v524, 0
        %v568 = vperm.slane %v526, 0
        %v569 = vperm.slane %v528, 0
        %v570 = vperm.slane %v529, 0
        %v571 = vperm.slane %v531, 0
        %v572 = vperm.slane %v533, 0
        %v573 = vperm.slane %v535, 0
        %v574 = vperm.slane %v536, 0
        %v575 = vperm.slane %v538, 0
        %v576 = vperm.slane %v540, 0
        %v577 = vperm.slane %v542, 0
        %v578 = vperm.slane %v543, 0
        %v579 = vperm.slane %v545, 0
        %v580 = vperm.slane %v547, 0
        %v581 = vperm.slane %v549, 0
        %v614 = vmul.f32 %v550, %v391
        %v615 = vmul.f32 %v551, %v391
        %v616 = vmul.f32 %v552, %v391
        %v617 = vmul.f32 %v553, %v391
        %v618 = vmul.f32 %v554, %v393
        %v619 = vmul.f32 %v555, %v393
        %v620 = vmul.f32 %v556, %v393
        %v621 = vmul.f32 %v557, %v393
        %v622 = vmul.f32 %v558, %v396
        %v623 = vmul.f32 %v559, %v396
        %v624 = vmul.f32 %v560, %v396
        %v625 = vmul.f32 %v561, %v396
        %v626 = vmul.f32 %v562, %v398
        %v627 = vmul.f32 %v563, %v398
        %v628 = vmul.f32 %v564, %v398
        %v629 = vmul.f32 %v565, %v398
        %v630 = vmul.f32 %v566, %v401
        %v631 = vmul.f32 %v567, %v401
        %v632 = vmul.f32 %v568, %v401
        %v633 = vmul.f32 %v569, %v401
        %v634 = vmul.f32 %v570, %v403
        %v635 = vmul.f32 %v571, %v403
        %v636 = vmul.f32 %v572, %v403
        %v637 = vmul.f32 %v573, %v403
        %v638 = vmul.f32 %v574, %v406
        %v639 = vmul.f32 %v575, %v406
        %v640 = vmul.f32 %v576, %v406
        %v641 = vmul.f32 %v577, %v406
        %v642 = vmul.f32 %v578, %v408
        %v643 = vmul.f32 %v579, %v408
        %v644 = vmul.f32 %v580, %v408
        %v645 = vmul.f32 %v581, %v408
        %vm646 = vcmask 64512
        %v647 = vsel %vm646, %v614, 0.0
        %648 = vadd.xlane.f32.xlu0 %v647
        %v649 = vpop.xlane.xlu0 %648
        %v650 = vsel %vm646, %v615, 0.0
        %651 = vadd.xlane.f32.xlu0 %v650
        %v652 = vpop.xlane.xlu0 %651
        %v653 = vsel %vm646, %v616, 0.0
        %654 = vadd.xlane.f32.xlu0 %v653
        %v655 = vpop.xlane.xlu0 %654
        %v656 = vsel %vm646, %v617, 0.0
        %657 = vadd.xlane.f32.xlu0 %v656
        %v658 = vpop.xlane.xlu0 %657
        %v659 = vsel %vm646, %v618, 0.0
        %660 = vadd.xlane.f32.xlu0 %v659
        %v661 = vpop.xlane.xlu0 %660
        %v662 = vsel %vm646, %v619, 0.0
        %663 = vadd.xlane.f32.xlu0 %v662
        %v664 = vpop.xlane.xlu0 %663
        %v665 = vsel %vm646, %v620, 0.0
        %666 = vadd.xlane.f32.xlu0 %v665
        %v667 = vpop.xlane.xlu0 %666
        %v668 = vsel %vm646, %v621, 0.0
        %669 = vadd.xlane.f32.xlu0 %v668
        %v670 = vpop.xlane.xlu0 %669
        %v671 = vsel %vm646, %v622, 0.0
        %672 = vadd.xlane.f32.xlu0 %v671
        %v673 = vpop.xlane.xlu0 %672
        %v674 = vsel %vm646, %v623, 0.0
        %675 = vadd.xlane.f32.xlu0 %v674
        %v676 = vpop.xlane.xlu0 %675
        %v677 = vsel %vm646, %v624, 0.0
        %678 = vadd.xlane.f32.xlu0 %v677
        %v679 = vpop.xlane.xlu0 %678
        %v680 = vsel %vm646, %v625, 0.0
        %681 = vadd.xlane.f32.xlu0 %v680
        %v682 = vpop.xlane.xlu0 %681
        %v683 = vsel %vm646, %v626, 0.0
        %684 = vadd.xlane.f32.xlu0 %v683
        %v685 = vpop.xlane.xlu0 %684
        %v686 = vsel %vm646, %v627, 0.0
        %687 = vadd.xlane.f32.xlu0 %v686
        %v688 = vpop.xlane.xlu0 %687
        %v689 = vsel %vm646, %v628, 0.0
        %690 = vadd.xlane.f32.xlu0 %v689
        %v691 = vpop.xlane.xlu0 %690
        %v692 = vsel %vm646, %v629, 0.0
        %693 = vadd.xlane.f32.xlu0 %v692
        %v694 = vpop.xlane.xlu0 %693
        %v695 = vsel %vm646, %v630, 0.0
        %696 = vadd.xlane.f32.xlu0 %v695
        %v697 = vpop.xlane.xlu0 %696
        %v698 = vsel %vm646, %v631, 0.0
        %699 = vadd.xlane.f32.xlu0 %v698
        %v700 = vpop.xlane.xlu0 %699
        %v701 = vsel %vm646, %v632, 0.0
        %702 = vadd.xlane.f32.xlu0 %v701
        %v703 = vpop.xlane.xlu0 %702
        %v704 = vsel %vm646, %v633, 0.0
        %705 = vadd.xlane.f32.xlu0 %v704
        %v706 = vpop.xlane.xlu0 %705
        %v707 = vsel %vm646, %v634, 0.0
        %708 = vadd.xlane.f32.xlu0 %v707
        %v709 = vpop.xlane.xlu0 %708
        %v710 = vsel %vm646, %v635, 0.0
        %711 = vadd.xlane.f32.xlu0 %v710
        %v712 = vpop.xlane.xlu0 %711
        %v713 = vsel %vm646, %v636, 0.0
        %714 = vadd.xlane.f32.xlu0 %v713
        %v715 = vpop.xlane.xlu0 %714
        %v716 = vsel %vm646, %v637, 0.0
        %717 = vadd.xlane.f32.xlu0 %v716
        %v718 = vpop.xlane.xlu0 %717
        %v719 = vsel %vm646, %v638, 0.0
        %720 = vadd.xlane.f32.xlu0 %v719
        %v721 = vpop.xlane.xlu0 %720
        %v722 = vsel %vm646, %v639, 0.0
        %723 = vadd.xlane.f32.xlu0 %v722
        %v724 = vpop.xlane.xlu0 %723
        %v725 = vsel %vm646, %v640, 0.0
        %726 = vadd.xlane.f32.xlu0 %v725
        %v727 = vpop.xlane.xlu0 %726
        %v728 = vsel %vm646, %v641, 0.0
        %729 = vadd.xlane.f32.xlu0 %v728
        %v730 = vpop.xlane.xlu0 %729
        %v731 = vsel %vm646, %v642, 0.0
        %732 = vadd.xlane.f32.xlu0 %v731
        %v733 = vpop.xlane.xlu0 %732
        %v734 = vsel %vm646, %v643, 0.0
        %735 = vadd.xlane.f32.xlu0 %v734
        %v736 = vpop.xlane.xlu0 %735
        %v737 = vsel %vm646, %v644, 0.0
        %738 = vadd.xlane.f32.xlu0 %v737
        %v739 = vpop.xlane.xlu0 %738
        %v740 = vsel %vm646, %v645, 0.0
        %741 = vadd.xlane.f32.xlu0 %v740
        %v742 = vpop.xlane.xlu0 %741
        %775 = vrot.lane.b32.xlu0 %v614, 120
        %v776 = vpop.permute.xlu0 %775
        %777 = vrot.lane.b32.xlu0 %v615, 120
        %v778 = vpop.permute.xlu0 %777
        %779 = vrot.lane.b32.xlu0 %v616, 120
        %v780 = vpop.permute.xlu0 %779
        %781 = vrot.lane.b32.xlu0 %v617, 120
        %v782 = vpop.permute.xlu0 %781
        %783 = vrot.lane.b32.xlu0 %v618, 120
        %v784 = vpop.permute.xlu0 %783
        %785 = vrot.lane.b32.xlu0 %v619, 120
        %v786 = vpop.permute.xlu0 %785
        %787 = vrot.lane.b32.xlu0 %v620, 120
        %v788 = vpop.permute.xlu0 %787
        %789 = vrot.lane.b32.xlu0 %v621, 120
        %v790 = vpop.permute.xlu0 %789
        %791 = vrot.lane.b32.xlu0 %v622, 120
        %v792 = vpop.permute.xlu0 %791
        %793 = vrot.lane.b32.xlu0 %v623, 120
        %v794 = vpop.permute.xlu0 %793
        %795 = vrot.lane.b32.xlu0 %v624, 120
        %v796 = vpop.permute.xlu0 %795
        %797 = vrot.lane.b32.xlu0 %v625, 120
        %v798 = vpop.permute.xlu0 %797
        %799 = vrot.lane.b32.xlu0 %v626, 120
        %v800 = vpop.permute.xlu0 %799
        %801 = vrot.lane.b32.xlu0 %v627, 120
        %v802 = vpop.permute.xlu0 %801
        %803 = vrot.lane.b32.xlu0 %v628, 120
        %v804 = vpop.permute.xlu0 %803
        %805 = vrot.lane.b32.xlu0 %v629, 120
        %v806 = vpop.permute.xlu0 %805
        %807 = vrot.lane.b32.xlu0 %v630, 120
        %v808 = vpop.permute.xlu0 %807
        %809 = vrot.lane.b32.xlu0 %v631, 120
        %v810 = vpop.permute.xlu0 %809
        %811 = vrot.lane.b32.xlu0 %v632, 120
        %v812 = vpop.permute.xlu0 %811
        %813 = vrot.lane.b32.xlu0 %v633, 120
        %v814 = vpop.permute.xlu0 %813
        %815 = vrot.lane.b32.xlu0 %v634, 120
        %v816 = vpop.permute.xlu0 %815
        %817 = vrot.lane.b32.xlu0 %v635, 120
        %v818 = vpop.permute.xlu0 %817
        %819 = vrot.lane.b32.xlu0 %v636, 120
        %v820 = vpop.permute.xlu0 %819
        %821 = vrot.lane.b32.xlu0 %v637, 120
        %v822 = vpop.permute.xlu0 %821
        %823 = vrot.lane.b32.xlu0 %v638, 120
        %v824 = vpop.permute.xlu0 %823
        %825 = vrot.lane.b32.xlu0 %v639, 120
        %v826 = vpop.permute.xlu0 %825
        %827 = vrot.lane.b32.xlu0 %v640, 120
        %v828 = vpop.permute.xlu0 %827
        %829 = vrot.lane.b32.xlu0 %v641, 120
        %v830 = vpop.permute.xlu0 %829
        %831 = vrot.lane.b32.xlu0 %v642, 120
        %v832 = vpop.permute.xlu0 %831
        %833 = vrot.lane.b32.xlu0 %v643, 120
        %v834 = vpop.permute.xlu0 %833
        %835 = vrot.lane.b32.xlu0 %v644, 120
        %v836 = vpop.permute.xlu0 %835
        %837 = vrot.lane.b32.xlu0 %v645, 120
        %v838 = vpop.permute.xlu0 %837
        %v871 = vsel %vm646, %v776, 0.0
        %872 = vadd.xlane.f32.xlu0 %v871
        %v873 = vpop.xlane.xlu0 %872
        %v874 = vsel %vm646, %v778, 0.0
        %875 = vadd.xlane.f32.xlu0 %v874
        %v876 = vpop.xlane.xlu0 %875
        %v877 = vsel %vm646, %v780, 0.0
        %878 = vadd.xlane.f32.xlu0 %v877
        %v879 = vpop.xlane.xlu0 %878
        %v880 = vsel %vm646, %v782, 0.0
        %881 = vadd.xlane.f32.xlu0 %v880
        %v882 = vpop.xlane.xlu0 %881
        %v883 = vsel %vm646, %v784, 0.0
        %884 = vadd.xlane.f32.xlu0 %v883
        %v885 = vpop.xlane.xlu0 %884
        %v886 = vsel %vm646, %v786, 0.0
        %887 = vadd.xlane.f32.xlu0 %v886
        %v888 = vpop.xlane.xlu0 %887
        %v889 = vsel %vm646, %v788, 0.0
        %890 = vadd.xlane.f32.xlu0 %v889
        %v891 = vpop.xlane.xlu0 %890
        %v892 = vsel %vm646, %v790, 0.0
        %893 = vadd.xlane.f32.xlu0 %v892
        %v894 = vpop.xlane.xlu0 %893
        %v895 = vsel %vm646, %v792, 0.0
        %896 = vadd.xlane.f32.xlu0 %v895
        %v897 = vpop.xlane.xlu0 %896
        %v898 = vsel %vm646, %v794, 0.0
        %899 = vadd.xlane.f32.xlu0 %v898
        %v900 = vpop.xlane.xlu0 %899
        %v901 = vsel %vm646, %v796, 0.0
        %902 = vadd.xlane.f32.xlu0 %v901
        %v903 = vpop.xlane.xlu0 %902
        %v904 = vsel %vm646, %v798, 0.0
        %905 = vadd.xlane.f32.xlu0 %v904
        %v906 = vpop.xlane.xlu0 %905
        %v907 = vsel %vm646, %v800, 0.0
        %908 = vadd.xlane.f32.xlu0 %v907
        %v909 = vpop.xlane.xlu0 %908
        %v910 = vsel %vm646, %v802, 0.0
        %911 = vadd.xlane.f32.xlu0 %v910
        %v912 = vpop.xlane.xlu0 %911
        %v913 = vsel %vm646, %v804, 0.0
        %914 = vadd.xlane.f32.xlu0 %v913
        %v915 = vpop.xlane.xlu0 %914
        %v916 = vsel %vm646, %v806, 0.0
        %917 = vadd.xlane.f32.xlu0 %v916
        %v918 = vpop.xlane.xlu0 %917
        %v919 = vsel %vm646, %v808, 0.0
        %920 = vadd.xlane.f32.xlu0 %v919
        %v921 = vpop.xlane.xlu0 %920
        %v922 = vsel %vm646, %v810, 0.0
        %923 = vadd.xlane.f32.xlu0 %v922
        %v924 = vpop.xlane.xlu0 %923
        %v925 = vsel %vm646, %v812, 0.0
        %926 = vadd.xlane.f32.xlu0 %v925
        %v927 = vpop.xlane.xlu0 %926
        %v928 = vsel %vm646, %v814, 0.0
        %929 = vadd.xlane.f32.xlu0 %v928
        %v930 = vpop.xlane.xlu0 %929
        %v931 = vsel %vm646, %v816, 0.0
        %932 = vadd.xlane.f32.xlu0 %v931
        %v933 = vpop.xlane.xlu0 %932
        %v934 = vsel %vm646, %v818, 0.0
        %935 = vadd.xlane.f32.xlu0 %v934
        %v936 = vpop.xlane.xlu0 %935
        %v937 = vsel %vm646, %v820, 0.0
        %938 = vadd.xlane.f32.xlu0 %v937
        %v939 = vpop.xlane.xlu0 %938
        %v940 = vsel %vm646, %v822, 0.0
        %941 = vadd.xlane.f32.xlu0 %v940
        %v942 = vpop.xlane.xlu0 %941
        %v943 = vsel %vm646, %v824, 0.0
        %944 = vadd.xlane.f32.xlu0 %v943
        %v945 = vpop.xlane.xlu0 %944
        %v946 = vsel %vm646, %v826, 0.0
        %947 = vadd.xlane.f32.xlu0 %v946
        %v948 = vpop.xlane.xlu0 %947
        %v949 = vsel %vm646, %v828, 0.0
        %950 = vadd.xlane.f32.xlu0 %v949
        %v951 = vpop.xlane.xlu0 %950
        %v952 = vsel %vm646, %v830, 0.0
        %953 = vadd.xlane.f32.xlu0 %v952
        %v954 = vpop.xlane.xlu0 %953
        %v955 = vsel %vm646, %v832, 0.0
        %956 = vadd.xlane.f32.xlu0 %v955
        %v957 = vpop.xlane.xlu0 %956
        %v958 = vsel %vm646, %v834, 0.0
        %959 = vadd.xlane.f32.xlu0 %v958
        %v960 = vpop.xlane.xlu0 %959
        %v961 = vsel %vm646, %v836, 0.0
        %962 = vadd.xlane.f32.xlu0 %v961
        %v963 = vpop.xlane.xlu0 %962
        %v964 = vsel %vm646, %v838, 0.0
        %965 = vadd.xlane.f32.xlu0 %v964
        %v966 = vpop.xlane.xlu0 %965
        %967 = vrot.lane.b32.xlu0 %v614, 112
        %v968 = vpop.permute.xlu0 %967
        %969 = vrot.lane.b32.xlu0 %v615, 112
        %v970 = vpop.permute.xlu0 %969
        %971 = vrot.lane.b32.xlu0 %v616, 112
        %v972 = vpop.permute.xlu0 %971
        %973 = vrot.lane.b32.xlu0 %v617, 112
        %v974 = vpop.permute.xlu0 %973
        %975 = vrot.lane.b32.xlu0 %v618, 112
        %v976 = vpop.permute.xlu0 %975
        %977 = vrot.lane.b32.xlu0 %v619, 112
        %v978 = vpop.permute.xlu0 %977
        %979 = vrot.lane.b32.xlu0 %v620, 112
        %v980 = vpop.permute.xlu0 %979
        %981 = vrot.lane.b32.xlu0 %v621, 112
        %v982 = vpop.permute.xlu0 %981
        %983 = vrot.lane.b32.xlu0 %v622, 112
        %v984 = vpop.permute.xlu0 %983
        %985 = vrot.lane.b32.xlu0 %v623, 112
        %v986 = vpop.permute.xlu0 %985
        %987 = vrot.lane.b32.xlu0 %v624, 112
        %v988 = vpop.permute.xlu0 %987
        %989 = vrot.lane.b32.xlu0 %v625, 112
        %v990 = vpop.permute.xlu0 %989
        %991 = vrot.lane.b32.xlu0 %v626, 112
        %v992 = vpop.permute.xlu0 %991
        %993 = vrot.lane.b32.xlu0 %v627, 112
        %v994 = vpop.permute.xlu0 %993
        %995 = vrot.lane.b32.xlu0 %v628, 112
        %v996 = vpop.permute.xlu0 %995
        %997 = vrot.lane.b32.xlu0 %v629, 112
        %v998 = vpop.permute.xlu0 %997
        %999 = vrot.lane.b32.xlu0 %v630, 112
        %v1000 = vpop.permute.xlu0 %999
        %1001 = vrot.lane.b32.xlu0 %v631, 112
        %v1002 = vpop.permute.xlu0 %1001
        %1003 = vrot.lane.b32.xlu0 %v632, 112
        %v1004 = vpop.permute.xlu0 %1003
        %1005 = vrot.lane.b32.xlu0 %v633, 112
        %v1006 = vpop.permute.xlu0 %1005
        %1007 = vrot.lane.b32.xlu0 %v634, 112
        %v1008 = vpop.permute.xlu0 %1007
        %1009 = vrot.lane.b32.xlu0 %v635, 112
        %v1010 = vpop.permute.xlu0 %1009
        %1011 = vrot.lane.b32.xlu0 %v636, 112
        %v1012 = vpop.permute.xlu0 %1011
        %1013 = vrot.lane.b32.xlu0 %v637, 112
        %v1014 = vpop.permute.xlu0 %1013
        %1015 = vrot.lane.b32.xlu0 %v638, 112
        %v1016 = vpop.permute.xlu0 %1015
        %1017 = vrot.lane.b32.xlu0 %v639, 112
        %v1018 = vpop.permute.xlu0 %1017
        %1019 = vrot.lane.b32.xlu0 %v640, 112
        %v1020 = vpop.permute.xlu0 %1019
        %1021 = vrot.lane.b32.xlu0 %v641, 112
        %v1022 = vpop.permute.xlu0 %1021
        %1023 = vrot.lane.b32.xlu0 %v642, 112
        %v1024 = vpop.permute.xlu0 %1023
        %1025 = vrot.lane.b32.xlu0 %v643, 112
        %v1026 = vpop.permute.xlu0 %1025
        %1027 = vrot.lane.b32.xlu0 %v644, 112
        %v1028 = vpop.permute.xlu0 %1027
        %1029 = vrot.lane.b32.xlu0 %v645, 112
        %v1030 = vpop.permute.xlu0 %1029
        %v1063 = vsel %vm646, %v968, 0.0
        %1064 = vadd.xlane.f32.xlu0 %v1063
        %v1065 = vpop.xlane.xlu0 %1064
        %v1066 = vsel %vm646, %v970, 0.0
        %1067 = vadd.xlane.f32.xlu0 %v1066
        %v1068 = vpop.xlane.xlu0 %1067
        %v1069 = vsel %vm646, %v972, 0.0
        %1070 = vadd.xlane.f32.xlu0 %v1069
        %v1071 = vpop.xlane.xlu0 %1070
        %v1072 = vsel %vm646, %v974, 0.0
        %1073 = vadd.xlane.f32.xlu0 %v1072
        %v1074 = vpop.xlane.xlu0 %1073
        %v1075 = vsel %vm646, %v976, 0.0
        %1076 = vadd.xlane.f32.xlu0 %v1075
        %v1077 = vpop.xlane.xlu0 %1076
        %v1078 = vsel %vm646, %v978, 0.0
        %1079 = vadd.xlane.f32.xlu0 %v1078
        %v1080 = vpop.xlane.xlu0 %1079
        %v1081 = vsel %vm646, %v980, 0.0
        %1082 = vadd.xlane.f32.xlu0 %v1081
        %v1083 = vpop.xlane.xlu0 %1082
        %v1084 = vsel %vm646, %v982, 0.0
        %1085 = vadd.xlane.f32.xlu0 %v1084
        %v1086 = vpop.xlane.xlu0 %1085
        %v1087 = vsel %vm646, %v984, 0.0
        %1088 = vadd.xlane.f32.xlu0 %v1087
        %v1089 = vpop.xlane.xlu0 %1088
        %v1090 = vsel %vm646, %v986, 0.0
        %1091 = vadd.xlane.f32.xlu0 %v1090
        %v1092 = vpop.xlane.xlu0 %1091
        %v1093 = vsel %vm646, %v988, 0.0
        %1094 = vadd.xlane.f32.xlu0 %v1093
        %v1095 = vpop.xlane.xlu0 %1094
        %v1096 = vsel %vm646, %v990, 0.0
        %1097 = vadd.xlane.f32.xlu0 %v1096
        %v1098 = vpop.xlane.xlu0 %1097
        %v1099 = vsel %vm646, %v992, 0.0
        %1100 = vadd.xlane.f32.xlu0 %v1099
        %v1101 = vpop.xlane.xlu0 %1100
        %v1102 = vsel %vm646, %v994, 0.0
        %1103 = vadd.xlane.f32.xlu0 %v1102
        %v1104 = vpop.xlane.xlu0 %1103
        %v1105 = vsel %vm646, %v996, 0.0
        %1106 = vadd.xlane.f32.xlu0 %v1105
        %v1107 = vpop.xlane.xlu0 %1106
        %v1108 = vsel %vm646, %v998, 0.0
        %1109 = vadd.xlane.f32.xlu0 %v1108
        %v1110 = vpop.xlane.xlu0 %1109
        %v1111 = vsel %vm646, %v1000, 0.0
        %1112 = vadd.xlane.f32.xlu0 %v1111
        %v1113 = vpop.xlane.xlu0 %1112
        %v1114 = vsel %vm646, %v1002, 0.0
        %1115 = vadd.xlane.f32.xlu0 %v1114
        %v1116 = vpop.xlane.xlu0 %1115
        %v1117 = vsel %vm646, %v1004, 0.0
        %1118 = vadd.xlane.f32.xlu0 %v1117
        %v1119 = vpop.xlane.xlu0 %1118
        %v1120 = vsel %vm646, %v1006, 0.0
        %1121 = vadd.xlane.f32.xlu0 %v1120
        %v1122 = vpop.xlane.xlu0 %1121
        %v1123 = vsel %vm646, %v1008, 0.0
        %1124 = vadd.xlane.f32.xlu0 %v1123
        %v1125 = vpop.xlane.xlu0 %1124
        %v1126 = vsel %vm646, %v1010, 0.0
        %1127 = vadd.xlane.f32.xlu0 %v1126
        %v1128 = vpop.xlane.xlu0 %1127
        %v1129 = vsel %vm646, %v1012, 0.0
        %1130 = vadd.xlane.f32.xlu0 %v1129
        %v1131 = vpop.xlane.xlu0 %1130
        %v1132 = vsel %vm646, %v1014, 0.0
        %1133 = vadd.xlane.f32.xlu0 %v1132
        %v1134 = vpop.xlane.xlu0 %1133
        %v1135 = vsel %vm646, %v1016, 0.0
        %1136 = vadd.xlane.f32.xlu0 %v1135
        %v1137 = vpop.xlane.xlu0 %1136
        %v1138 = vsel %vm646, %v1018, 0.0
        %1139 = vadd.xlane.f32.xlu0 %v1138
        %v1140 = vpop.xlane.xlu0 %1139
        %v1141 = vsel %vm646, %v1020, 0.0
        %1142 = vadd.xlane.f32.xlu0 %v1141
        %v1143 = vpop.xlane.xlu0 %1142
        %v1144 = vsel %vm646, %v1022, 0.0
        %1145 = vadd.xlane.f32.xlu0 %v1144
        %v1146 = vpop.xlane.xlu0 %1145
        %v1147 = vsel %vm646, %v1024, 0.0
        %1148 = vadd.xlane.f32.xlu0 %v1147
        %v1149 = vpop.xlane.xlu0 %1148
        %v1150 = vsel %vm646, %v1026, 0.0
        %1151 = vadd.xlane.f32.xlu0 %v1150
        %v1152 = vpop.xlane.xlu0 %1151
        %v1153 = vsel %vm646, %v1028, 0.0
        %1154 = vadd.xlane.f32.xlu0 %v1153
        %v1155 = vpop.xlane.xlu0 %1154
        %v1156 = vsel %vm646, %v1030, 0.0
        %1157 = vadd.xlane.f32.xlu0 %v1156
        %v1158 = vpop.xlane.xlu0 %1157
        %1159 = vrot.lane.b32.xlu0 %v614, 104
        %v1160 = vpop.permute.xlu0 %1159
        %1161 = vrot.lane.b32.xlu0 %v615, 104
        %v1162 = vpop.permute.xlu0 %1161
        %1163 = vrot.lane.b32.xlu0 %v616, 104
        %v1164 = vpop.permute.xlu0 %1163
        %1165 = vrot.lane.b32.xlu0 %v617, 104
        %v1166 = vpop.permute.xlu0 %1165
        %1167 = vrot.lane.b32.xlu0 %v618, 104
        %v1168 = vpop.permute.xlu0 %1167
        %1169 = vrot.lane.b32.xlu0 %v619, 104
        %v1170 = vpop.permute.xlu0 %1169
        %1171 = vrot.lane.b32.xlu0 %v620, 104
        %v1172 = vpop.permute.xlu0 %1171
        %1173 = vrot.lane.b32.xlu0 %v621, 104
        %v1174 = vpop.permute.xlu0 %1173
        %1175 = vrot.lane.b32.xlu0 %v622, 104
        %v1176 = vpop.permute.xlu0 %1175
        %1177 = vrot.lane.b32.xlu0 %v623, 104
        %v1178 = vpop.permute.xlu0 %1177
        %1179 = vrot.lane.b32.xlu0 %v624, 104
        %v1180 = vpop.permute.xlu0 %1179
        %1181 = vrot.lane.b32.xlu0 %v625, 104
        %v1182 = vpop.permute.xlu0 %1181
        %1183 = vrot.lane.b32.xlu0 %v626, 104
        %v1184 = vpop.permute.xlu0 %1183
        %1185 = vrot.lane.b32.xlu0 %v627, 104
        %v1186 = vpop.permute.xlu0 %1185
        %1187 = vrot.lane.b32.xlu0 %v628, 104
        %v1188 = vpop.permute.xlu0 %1187
        %1189 = vrot.lane.b32.xlu0 %v629, 104
        %v1190 = vpop.permute.xlu0 %1189
        %1191 = vrot.lane.b32.xlu0 %v630, 104
        %v1192 = vpop.permute.xlu0 %1191
        %1193 = vrot.lane.b32.xlu0 %v631, 104
        %v1194 = vpop.permute.xlu0 %1193
        %1195 = vrot.lane.b32.xlu0 %v632, 104
        %v1196 = vpop.permute.xlu0 %1195
        %1197 = vrot.lane.b32.xlu0 %v633, 104
        %v1198 = vpop.permute.xlu0 %1197
        %1199 = vrot.lane.b32.xlu0 %v634, 104
        %v1200 = vpop.permute.xlu0 %1199
        %1201 = vrot.lane.b32.xlu0 %v635, 104
        %v1202 = vpop.permute.xlu0 %1201
        %1203 = vrot.lane.b32.xlu0 %v636, 104
        %v1204 = vpop.permute.xlu0 %1203
        %1205 = vrot.lane.b32.xlu0 %v637, 104
        %v1206 = vpop.permute.xlu0 %1205
        %1207 = vrot.lane.b32.xlu0 %v638, 104
        %v1208 = vpop.permute.xlu0 %1207
        %1209 = vrot.lane.b32.xlu0 %v639, 104
        %v1210 = vpop.permute.xlu0 %1209
        %1211 = vrot.lane.b32.xlu0 %v640, 104
        %v1212 = vpop.permute.xlu0 %1211
        %1213 = vrot.lane.b32.xlu0 %v641, 104
        %v1214 = vpop.permute.xlu0 %1213
        %1215 = vrot.lane.b32.xlu0 %v642, 104
        %v1216 = vpop.permute.xlu0 %1215
        %1217 = vrot.lane.b32.xlu0 %v643, 104
        %v1218 = vpop.permute.xlu0 %1217
        %1219 = vrot.lane.b32.xlu0 %v644, 104
        %v1220 = vpop.permute.xlu0 %1219
        %1221 = vrot.lane.b32.xlu0 %v645, 104
        %v1222 = vpop.permute.xlu0 %1221
        %v1255 = vsel %vm646, %v1160, 0.0
        %1256 = vadd.xlane.f32.xlu0 %v1255
        %v1257 = vpop.xlane.xlu0 %1256
        %v1258 = vsel %vm646, %v1162, 0.0
        %1259 = vadd.xlane.f32.xlu0 %v1258
        %v1260 = vpop.xlane.xlu0 %1259
        %v1261 = vsel %vm646, %v1164, 0.0
        %1262 = vadd.xlane.f32.xlu0 %v1261
        %v1263 = vpop.xlane.xlu0 %1262
        %v1264 = vsel %vm646, %v1166, 0.0
        %1265 = vadd.xlane.f32.xlu0 %v1264
        %v1266 = vpop.xlane.xlu0 %1265
        %v1267 = vsel %vm646, %v1168, 0.0
        %1268 = vadd.xlane.f32.xlu0 %v1267
        %v1269 = vpop.xlane.xlu0 %1268
        %v1270 = vsel %vm646, %v1170, 0.0
        %1271 = vadd.xlane.f32.xlu0 %v1270
        %v1272 = vpop.xlane.xlu0 %1271
        %v1273 = vsel %vm646, %v1172, 0.0
        %1274 = vadd.xlane.f32.xlu0 %v1273
        %v1275 = vpop.xlane.xlu0 %1274
        %v1276 = vsel %vm646, %v1174, 0.0
        %1277 = vadd.xlane.f32.xlu0 %v1276
        %v1278 = vpop.xlane.xlu0 %1277
        %v1279 = vsel %vm646, %v1176, 0.0
        %1280 = vadd.xlane.f32.xlu0 %v1279
        %v1281 = vpop.xlane.xlu0 %1280
        %v1282 = vsel %vm646, %v1178, 0.0
        %1283 = vadd.xlane.f32.xlu0 %v1282
        %v1284 = vpop.xlane.xlu0 %1283
        %v1285 = vsel %vm646, %v1180, 0.0
        %1286 = vadd.xlane.f32.xlu0 %v1285
        %v1287 = vpop.xlane.xlu0 %1286
        %v1288 = vsel %vm646, %v1182, 0.0
        %1289 = vadd.xlane.f32.xlu0 %v1288
        %v1290 = vpop.xlane.xlu0 %1289
        %v1291 = vsel %vm646, %v1184, 0.0
        %1292 = vadd.xlane.f32.xlu0 %v1291
        %v1293 = vpop.xlane.xlu0 %1292
        %v1294 = vsel %vm646, %v1186, 0.0
        %1295 = vadd.xlane.f32.xlu0 %v1294
        %v1296 = vpop.xlane.xlu0 %1295
        %v1297 = vsel %vm646, %v1188, 0.0
        %1298 = vadd.xlane.f32.xlu0 %v1297
        %v1299 = vpop.xlane.xlu0 %1298
        %v1300 = vsel %vm646, %v1190, 0.0
        %1301 = vadd.xlane.f32.xlu0 %v1300
        %v1302 = vpop.xlane.xlu0 %1301
        %v1303 = vsel %vm646, %v1192, 0.0
        %1304 = vadd.xlane.f32.xlu0 %v1303
        %v1305 = vpop.xlane.xlu0 %1304
        %v1306 = vsel %vm646, %v1194, 0.0
        %1307 = vadd.xlane.f32.xlu0 %v1306
        %v1308 = vpop.xlane.xlu0 %1307
        %v1309 = vsel %vm646, %v1196, 0.0
        %1310 = vadd.xlane.f32.xlu0 %v1309
        %v1311 = vpop.xlane.xlu0 %1310
        %v1312 = vsel %vm646, %v1198, 0.0
        %1313 = vadd.xlane.f32.xlu0 %v1312
        %v1314 = vpop.xlane.xlu0 %1313
        %v1315 = vsel %vm646, %v1200, 0.0
        %1316 = vadd.xlane.f32.xlu0 %v1315
        %v1317 = vpop.xlane.xlu0 %1316
        %v1318 = vsel %vm646, %v1202, 0.0
        %1319 = vadd.xlane.f32.xlu0 %v1318
        %v1320 = vpop.xlane.xlu0 %1319
        %v1321 = vsel %vm646, %v1204, 0.0
        %1322 = vadd.xlane.f32.xlu0 %v1321
        %v1323 = vpop.xlane.xlu0 %1322
        %v1324 = vsel %vm646, %v1206, 0.0
        %1325 = vadd.xlane.f32.xlu0 %v1324
        %v1326 = vpop.xlane.xlu0 %1325
        %v1327 = vsel %vm646, %v1208, 0.0
        %1328 = vadd.xlane.f32.xlu0 %v1327
        %v1329 = vpop.xlane.xlu0 %1328
        %v1330 = vsel %vm646, %v1210, 0.0
        %1331 = vadd.xlane.f32.xlu0 %v1330
        %v1332 = vpop.xlane.xlu0 %1331
        %v1333 = vsel %vm646, %v1212, 0.0
        %1334 = vadd.xlane.f32.xlu0 %v1333
        %v1335 = vpop.xlane.xlu0 %1334
        %v1336 = vsel %vm646, %v1214, 0.0
        %1337 = vadd.xlane.f32.xlu0 %v1336
        %v1338 = vpop.xlane.xlu0 %1337
        %v1339 = vsel %vm646, %v1216, 0.0
        %1340 = vadd.xlane.f32.xlu0 %v1339
        %v1341 = vpop.xlane.xlu0 %1340
        %v1342 = vsel %vm646, %v1218, 0.0
        %1343 = vadd.xlane.f32.xlu0 %v1342
        %v1344 = vpop.xlane.xlu0 %1343
        %v1345 = vsel %vm646, %v1220, 0.0
        %1346 = vadd.xlane.f32.xlu0 %v1345
        %v1347 = vpop.xlane.xlu0 %1346
        %v1348 = vsel %vm646, %v1222, 0.0
        %1349 = vadd.xlane.f32.xlu0 %v1348
        %v1350 = vpop.xlane.xlu0 %1349
        %v1351 = vld [vmem:[%s315] sm:$0xf]
        %v1352 = vld [vmem:[%s315 + $0x4] sm:$0xf]
        %v1353 = vld [vmem:[%s315 + $0x8] sm:$0xf]
        %v1354 = vld [vmem:[%s315 + $0xc] sm:$0xf]
        %v1355 = vld [vmem:[%s315 + $0x10] sm:$0xf]
        %v1356 = vld [vmem:[%s315 + $0x14] sm:$0xf]
        %v1357 = vld [vmem:[%s315 + $0x18] sm:$0xf]
        %v1358 = vld [vmem:[%s315 + $0x1c] sm:$0xf]
        %v1359 = vsub.f32 1.0, %v1351
        %v1360 = vsub.f32 1.0, %v1352
        %v1361 = vsub.f32 1.0, %v1353
        %v1362 = vsub.f32 1.0, %v1354
        %v1363 = vsub.f32 1.0, %v1355
        %v1364 = vsub.f32 1.0, %v1356
        %v1365 = vsub.f32 1.0, %v1357
        %v1366 = vsub.f32 1.0, %v1358
        %v1367 = vmul.f32 %v1351, -1e+30
        %v1368 = vmul.f32 %v1352, -1e+30
        %v1369 = vmul.f32 %v1353, -1e+30
        %v1370 = vmul.f32 %v1354, -1e+30
        %v1371 = vmul.f32 %v1355, -1e+30
        %v1372 = vmul.f32 %v1356, -1e+30
        %v1373 = vmul.f32 %v1357, -1e+30
        %v1374 = vmul.f32 %v1358, -1e+30
        %v1383 = vperm.slane %v1367, 0
        %v1384 = vlaneseq
        %v1385 = vshrl.u32 %v1384, 7
        %1387 = vset.pattern.permute.xlu0 %v1385
        %1388 = vperm.xlu0 %1387, %v1383
        %v1389 = vpop.permute.xlu0 %1388
        %v1390 = vperm.slane %v1367, 1
        %v1391 = vlaneseq
        %v1392 = vshrl.u32 %v1391, 7
        %1394 = vset.pattern.permute.xlu0 %v1392
        %1395 = vperm.xlu0 %1394, %v1390
        %v1396 = vpop.permute.xlu0 %1395
        %v1397 = vperm.slane %v1367, 2
        %v1398 = vlaneseq
        %v1399 = vshrl.u32 %v1398, 7
        %1401 = vset.pattern.permute.xlu0 %v1399
        %1402 = vperm.xlu0 %1401, %v1397
        %v1403 = vpop.permute.xlu0 %1402
        %v1404 = vperm.slane %v1367, 3
        %v1405 = vlaneseq
        %v1406 = vshrl.u32 %v1405, 7
        %1408 = vset.pattern.permute.xlu0 %v1406
        %1409 = vperm.xlu0 %1408, %v1404
        %v1410 = vpop.permute.xlu0 %1409
        %v1411 = vperm.slane %v1368, 0
        %v1412 = vlaneseq
        %v1413 = vshrl.u32 %v1412, 7
        %1415 = vset.pattern.permute.xlu0 %v1413
        %1416 = vperm.xlu0 %1415, %v1411
        %v1417 = vpop.permute.xlu0 %1416
        %v1418 = vperm.slane %v1368, 1
        %v1419 = vlaneseq
        %v1420 = vshrl.u32 %v1419, 7
        %1422 = vset.pattern.permute.xlu0 %v1420
        %1423 = vperm.xlu0 %1422, %v1418
        %v1424 = vpop.permute.xlu0 %1423
        %v1425 = vperm.slane %v1368, 2
        %v1426 = vlaneseq
        %v1427 = vshrl.u32 %v1426, 7
        %1429 = vset.pattern.permute.xlu0 %v1427
        %1430 = vperm.xlu0 %1429, %v1425
        %v1431 = vpop.permute.xlu0 %1430
        %v1432 = vperm.slane %v1368, 3
        %v1433 = vlaneseq
        %v1434 = vshrl.u32 %v1433, 7
        %1436 = vset.pattern.permute.xlu0 %v1434
        %1437 = vperm.xlu0 %1436, %v1432
        %v1438 = vpop.permute.xlu0 %1437
        %v1439 = vperm.slane %v1369, 0
        %v1440 = vlaneseq
        %v1441 = vshrl.u32 %v1440, 7
        %1443 = vset.pattern.permute.xlu0 %v1441
        %1444 = vperm.xlu0 %1443, %v1439
        %v1445 = vpop.permute.xlu0 %1444
        %v1446 = vperm.slane %v1369, 1
        %v1447 = vlaneseq
        %v1448 = vshrl.u32 %v1447, 7
        %1450 = vset.pattern.permute.xlu0 %v1448
        %1451 = vperm.xlu0 %1450, %v1446
        %v1452 = vpop.permute.xlu0 %1451
        %v1453 = vperm.slane %v1369, 2
        %v1454 = vlaneseq
        %v1455 = vshrl.u32 %v1454, 7
        %1457 = vset.pattern.permute.xlu0 %v1455
        %1458 = vperm.xlu0 %1457, %v1453
        %v1459 = vpop.permute.xlu0 %1458
        %v1460 = vperm.slane %v1369, 3
        %v1461 = vlaneseq
        %v1462 = vshrl.u32 %v1461, 7
        %1464 = vset.pattern.permute.xlu0 %v1462
        %1465 = vperm.xlu0 %1464, %v1460
        %v1466 = vpop.permute.xlu0 %1465
        %v1467 = vperm.slane %v1370, 0
        %v1468 = vlaneseq
        %v1469 = vshrl.u32 %v1468, 7
        %1471 = vset.pattern.permute.xlu0 %v1469
        %1472 = vperm.xlu0 %1471, %v1467
        %v1473 = vpop.permute.xlu0 %1472
        %v1474 = vperm.slane %v1370, 1
        %v1475 = vlaneseq
        %v1476 = vshrl.u32 %v1475, 7
        %1478 = vset.pattern.permute.xlu0 %v1476
        %1479 = vperm.xlu0 %1478, %v1474
        %v1480 = vpop.permute.xlu0 %1479
        %v1481 = vperm.slane %v1370, 2
        %v1482 = vlaneseq
        %v1483 = vshrl.u32 %v1482, 7
        %1485 = vset.pattern.permute.xlu0 %v1483
        %1486 = vperm.xlu0 %1485, %v1481
        %v1487 = vpop.permute.xlu0 %1486
        %v1488 = vperm.slane %v1370, 3
        %v1489 = vlaneseq
        %v1490 = vshrl.u32 %v1489, 7
        %1492 = vset.pattern.permute.xlu0 %v1490
        %1493 = vperm.xlu0 %1492, %v1488
        %v1494 = vpop.permute.xlu0 %1493
        %v1495 = vperm.slane %v1371, 0
        %v1496 = vlaneseq
        %v1497 = vshrl.u32 %v1496, 7
        %1499 = vset.pattern.permute.xlu0 %v1497
        %1500 = vperm.xlu0 %1499, %v1495
        %v1501 = vpop.permute.xlu0 %1500
        %v1502 = vperm.slane %v1371, 1
        %v1503 = vlaneseq
        %v1504 = vshrl.u32 %v1503, 7
        %1506 = vset.pattern.permute.xlu0 %v1504
        %1507 = vperm.xlu0 %1506, %v1502
        %v1508 = vpop.permute.xlu0 %1507
        %v1509 = vperm.slane %v1371, 2
        %v1510 = vlaneseq
        %v1511 = vshrl.u32 %v1510, 7
        %1513 = vset.pattern.permute.xlu0 %v1511
        %1514 = vperm.xlu0 %1513, %v1509
        %v1515 = vpop.permute.xlu0 %1514
        %v1516 = vperm.slane %v1371, 3
        %v1517 = vlaneseq
        %v1518 = vshrl.u32 %v1517, 7
        %1520 = vset.pattern.permute.xlu0 %v1518
        %1521 = vperm.xlu0 %1520, %v1516
        %v1522 = vpop.permute.xlu0 %1521
        %v1523 = vperm.slane %v1372, 0
        %v1524 = vlaneseq
        %v1525 = vshrl.u32 %v1524, 7
        %1527 = vset.pattern.permute.xlu0 %v1525
        %1528 = vperm.xlu0 %1527, %v1523
        %v1529 = vpop.permute.xlu0 %1528
        %v1530 = vperm.slane %v1372, 1
        %v1531 = vlaneseq
        %v1532 = vshrl.u32 %v1531, 7
        %1534 = vset.pattern.permute.xlu0 %v1532
        %1535 = vperm.xlu0 %1534, %v1530
        %v1536 = vpop.permute.xlu0 %1535
        %v1537 = vperm.slane %v1372, 2
        %v1538 = vlaneseq
        %v1539 = vshrl.u32 %v1538, 7
        %1541 = vset.pattern.permute.xlu0 %v1539
        %1542 = vperm.xlu0 %1541, %v1537
        %v1543 = vpop.permute.xlu0 %1542
        %v1544 = vperm.slane %v1372, 3
        %v1545 = vlaneseq
        %v1546 = vshrl.u32 %v1545, 7
        %1548 = vset.pattern.permute.xlu0 %v1546
        %1549 = vperm.xlu0 %1548, %v1544
        %v1550 = vpop.permute.xlu0 %1549
        %v1551 = vperm.slane %v1373, 0
        %v1552 = vlaneseq
        %v1553 = vshrl.u32 %v1552, 7
        %1555 = vset.pattern.permute.xlu0 %v1553
        %1556 = vperm.xlu0 %1555, %v1551
        %v1557 = vpop.permute.xlu0 %1556
        %v1558 = vperm.slane %v1373, 1
        %v1559 = vlaneseq
        %v1560 = vshrl.u32 %v1559, 7
        %1562 = vset.pattern.permute.xlu0 %v1560
        %1563 = vperm.xlu0 %1562, %v1558
        %v1564 = vpop.permute.xlu0 %1563
        %v1565 = vperm.slane %v1373, 2
        %v1566 = vlaneseq
        %v1567 = vshrl.u32 %v1566, 7
        %1569 = vset.pattern.permute.xlu0 %v1567
        %1570 = vperm.xlu0 %1569, %v1565
        %v1571 = vpop.permute.xlu0 %1570
        %v1572 = vperm.slane %v1373, 3
        %v1573 = vlaneseq
        %v1574 = vshrl.u32 %v1573, 7
        %1576 = vset.pattern.permute.xlu0 %v1574
        %1577 = vperm.xlu0 %1576, %v1572
        %v1578 = vpop.permute.xlu0 %1577
        %v1579 = vperm.slane %v1374, 0
        %v1580 = vlaneseq
        %v1581 = vshrl.u32 %v1580, 7
        %1583 = vset.pattern.permute.xlu0 %v1581
        %1584 = vperm.xlu0 %1583, %v1579
        %v1585 = vpop.permute.xlu0 %1584
        %v1586 = vperm.slane %v1374, 1
        %v1587 = vlaneseq
        %v1588 = vshrl.u32 %v1587, 7
        %1590 = vset.pattern.permute.xlu0 %v1588
        %1591 = vperm.xlu0 %1590, %v1586
        %v1592 = vpop.permute.xlu0 %1591
        %v1593 = vperm.slane %v1374, 2
        %v1594 = vlaneseq
        %v1595 = vshrl.u32 %v1594, 7
        %1597 = vset.pattern.permute.xlu0 %v1595
        %1598 = vperm.xlu0 %1597, %v1593
        %v1599 = vpop.permute.xlu0 %1598
        %v1600 = vperm.slane %v1374, 3
        %v1601 = vlaneseq
        %v1602 = vshrl.u32 %v1601, 7
        %1604 = vset.pattern.permute.xlu0 %v1602
        %1605 = vperm.xlu0 %1604, %v1600
        %v1606 = vpop.permute.xlu0 %1605
        %v1639 = vadd.f32 %v649, %v1389
        %v1640 = vadd.f32 %v652, %v1396
        %v1641 = vadd.f32 %v655, %v1403
        %v1642 = vadd.f32 %v658, %v1410
        %v1643 = vadd.f32 %v873, %v1389
        %v1644 = vadd.f32 %v876, %v1396
        %v1645 = vadd.f32 %v879, %v1403
        %v1646 = vadd.f32 %v882, %v1410
        %v1647 = vadd.f32 %v1065, %v1389
        %v1648 = vadd.f32 %v1068, %v1396
        %v1649 = vadd.f32 %v1071, %v1403
        %v1650 = vadd.f32 %v1074, %v1410
        %v1651 = vadd.f32 %v1257, %v1389
        %v1652 = vadd.f32 %v1260, %v1396
        %v1653 = vadd.f32 %v1263, %v1403
        %v1654 = vadd.f32 %v1266, %v1410
        %v1655 = vadd.f32 %v661, %v1417
        %v1656 = vadd.f32 %v664, %v1424
        %v1657 = vadd.f32 %v667, %v1431
        %v1658 = vadd.f32 %v670, %v1438
        %v1659 = vadd.f32 %v885, %v1417
        %v1660 = vadd.f32 %v888, %v1424
        %v1661 = vadd.f32 %v891, %v1431
        %v1662 = vadd.f32 %v894, %v1438
        %v1663 = vadd.f32 %v1077, %v1417
        %v1664 = vadd.f32 %v1080, %v1424
        %v1665 = vadd.f32 %v1083, %v1431
        %v1666 = vadd.f32 %v1086, %v1438
        %v1667 = vadd.f32 %v1269, %v1417
        %v1668 = vadd.f32 %v1272, %v1424
        %v1669 = vadd.f32 %v1275, %v1431
        %v1670 = vadd.f32 %v1278, %v1438
        %v1671 = vadd.f32 %v673, %v1445
        %v1672 = vadd.f32 %v676, %v1452
        %v1673 = vadd.f32 %v679, %v1459
        %v1674 = vadd.f32 %v682, %v1466
        %v1675 = vadd.f32 %v897, %v1445
        %v1676 = vadd.f32 %v900, %v1452
        %v1677 = vadd.f32 %v903, %v1459
        %v1678 = vadd.f32 %v906, %v1466
        %v1679 = vadd.f32 %v1089, %v1445
        %v1680 = vadd.f32 %v1092, %v1452
        %v1681 = vadd.f32 %v1095, %v1459
        %v1682 = vadd.f32 %v1098, %v1466
        %v1683 = vadd.f32 %v1281, %v1445
        %v1684 = vadd.f32 %v1284, %v1452
        %v1685 = vadd.f32 %v1287, %v1459
        %v1686 = vadd.f32 %v1290, %v1466
        %v1687 = vadd.f32 %v685, %v1473
        %v1688 = vadd.f32 %v688, %v1480
        %v1689 = vadd.f32 %v691, %v1487
        %v1690 = vadd.f32 %v694, %v1494
        %v1691 = vadd.f32 %v909, %v1473
        %v1692 = vadd.f32 %v912, %v1480
        %v1693 = vadd.f32 %v915, %v1487
        %v1694 = vadd.f32 %v918, %v1494
        %v1695 = vadd.f32 %v1101, %v1473
        %v1696 = vadd.f32 %v1104, %v1480
        %v1697 = vadd.f32 %v1107, %v1487
        %v1698 = vadd.f32 %v1110, %v1494
        %v1699 = vadd.f32 %v1293, %v1473
        %v1700 = vadd.f32 %v1296, %v1480
        %v1701 = vadd.f32 %v1299, %v1487
        %v1702 = vadd.f32 %v1302, %v1494
        %v1703 = vadd.f32 %v697, %v1501
        %v1704 = vadd.f32 %v700, %v1508
        %v1705 = vadd.f32 %v703, %v1515
        %v1706 = vadd.f32 %v706, %v1522
        %v1707 = vadd.f32 %v921, %v1501
        %v1708 = vadd.f32 %v924, %v1508
        %v1709 = vadd.f32 %v927, %v1515
        %v1710 = vadd.f32 %v930, %v1522
        %v1711 = vadd.f32 %v1113, %v1501
        %v1712 = vadd.f32 %v1116, %v1508
        %v1713 = vadd.f32 %v1119, %v1515
        %v1714 = vadd.f32 %v1122, %v1522
        %v1715 = vadd.f32 %v1305, %v1501
        %v1716 = vadd.f32 %v1308, %v1508
        %v1717 = vadd.f32 %v1311, %v1515
        %v1718 = vadd.f32 %v1314, %v1522
        %v1719 = vadd.f32 %v709, %v1529
        %v1720 = vadd.f32 %v712, %v1536
        %v1721 = vadd.f32 %v715, %v1543
        %v1722 = vadd.f32 %v718, %v1550
        %v1723 = vadd.f32 %v933, %v1529
        %v1724 = vadd.f32 %v936, %v1536
        %v1725 = vadd.f32 %v939, %v1543
        %v1726 = vadd.f32 %v942, %v1550
        %v1727 = vadd.f32 %v1125, %v1529
        %v1728 = vadd.f32 %v1128, %v1536
        %v1729 = vadd.f32 %v1131, %v1543
        %v1730 = vadd.f32 %v1134, %v1550
        %v1731 = vadd.f32 %v1317, %v1529
        %v1732 = vadd.f32 %v1320, %v1536
        %v1733 = vadd.f32 %v1323, %v1543
        %v1734 = vadd.f32 %v1326, %v1550
        %v1735 = vadd.f32 %v721, %v1557
        %v1736 = vadd.f32 %v724, %v1564
        %v1737 = vadd.f32 %v727, %v1571
        %v1738 = vadd.f32 %v730, %v1578
        %v1739 = vadd.f32 %v945, %v1557
        %v1740 = vadd.f32 %v948, %v1564
        %v1741 = vadd.f32 %v951, %v1571
        %v1742 = vadd.f32 %v954, %v1578
        %v1743 = vadd.f32 %v1137, %v1557
        %v1744 = vadd.f32 %v1140, %v1564
        %v1745 = vadd.f32 %v1143, %v1571
        %v1746 = vadd.f32 %v1146, %v1578
        %v1747 = vadd.f32 %v1329, %v1557
        %v1748 = vadd.f32 %v1332, %v1564
        %v1749 = vadd.f32 %v1335, %v1571
        %v1750 = vadd.f32 %v1338, %v1578
        %v1751 = vadd.f32 %v733, %v1585
        %v1752 = vadd.f32 %v736, %v1592
        %v1753 = vadd.f32 %v739, %v1599
        %v1754 = vadd.f32 %v742, %v1606
        %v1755 = vadd.f32 %v957, %v1585
        %v1756 = vadd.f32 %v960, %v1592
        %v1757 = vadd.f32 %v963, %v1599
        %v1758 = vadd.f32 %v966, %v1606
        %v1759 = vadd.f32 %v1149, %v1585
        %v1760 = vadd.f32 %v1152, %v1592
        %v1761 = vadd.f32 %v1155, %v1599
        %v1762 = vadd.f32 %v1158, %v1606
        %v1763 = vadd.f32 %v1341, %v1585
        %v1764 = vadd.f32 %v1344, %v1592
        %v1765 = vadd.f32 %v1347, %v1599
        %v1766 = vadd.f32 %v1350, %v1606
        %1895 = vset.pattern.permute.xlu0 0
        %1896 = vperm.xlu0 %1895, %v1639
        %v1897 = vpop.permute.xlu0 %1896
        %1898 = vset.pattern.permute.xlu0 0
        %1899 = vperm.xlu0 %1898, %v1640
        %v1900 = vpop.permute.xlu0 %1899
        %1901 = vset.pattern.permute.xlu0 0
        %1902 = vperm.xlu0 %1901, %v1641
        %v1903 = vpop.permute.xlu0 %1902
        %1904 = vset.pattern.permute.xlu0 0
        %1905 = vperm.xlu0 %1904, %v1642
        %v1906 = vpop.permute.xlu0 %1905
        %1907 = vset.pattern.permute.xlu0 0
        %1908 = vperm.xlu0 %1907, %v1643
        %v1909 = vpop.permute.xlu0 %1908
        %1910 = vset.pattern.permute.xlu0 0
        %1911 = vperm.xlu0 %1910, %v1644
        %v1912 = vpop.permute.xlu0 %1911
        %1913 = vset.pattern.permute.xlu0 0
        %1914 = vperm.xlu0 %1913, %v1645
        %v1915 = vpop.permute.xlu0 %1914
        %1916 = vset.pattern.permute.xlu0 0
        %1917 = vperm.xlu0 %1916, %v1646
        %v1918 = vpop.permute.xlu0 %1917
        %1919 = vset.pattern.permute.xlu0 0
        %1920 = vperm.xlu0 %1919, %v1647
        %v1921 = vpop.permute.xlu0 %1920
        %1922 = vset.pattern.permute.xlu0 0
        %1923 = vperm.xlu0 %1922, %v1648
        %v1924 = vpop.permute.xlu0 %1923
        %1925 = vset.pattern.permute.xlu0 0
        %1926 = vperm.xlu0 %1925, %v1649
        %v1927 = vpop.permute.xlu0 %1926
        %1928 = vset.pattern.permute.xlu0 0
        %1929 = vperm.xlu0 %1928, %v1650
        %v1930 = vpop.permute.xlu0 %1929
        %1931 = vset.pattern.permute.xlu0 0
        %1932 = vperm.xlu0 %1931, %v1651
        %v1933 = vpop.permute.xlu0 %1932
        %1934 = vset.pattern.permute.xlu0 0
        %1935 = vperm.xlu0 %1934, %v1652
        %v1936 = vpop.permute.xlu0 %1935
        %1937 = vset.pattern.permute.xlu0 0
        %1938 = vperm.xlu0 %1937, %v1653
        %v1939 = vpop.permute.xlu0 %1938
        %1940 = vset.pattern.permute.xlu0 0
        %1941 = vperm.xlu0 %1940, %v1654
        %v1942 = vpop.permute.xlu0 %1941
        %1943 = vset.pattern.permute.xlu0 0
        %1944 = vperm.xlu0 %1943, %v1655
        %v1945 = vpop.permute.xlu0 %1944
        %1946 = vset.pattern.permute.xlu0 0
        %1947 = vperm.xlu0 %1946, %v1656
        %v1948 = vpop.permute.xlu0 %1947
        %1949 = vset.pattern.permute.xlu0 0
        %1950 = vperm.xlu0 %1949, %v1657
        %v1951 = vpop.permute.xlu0 %1950
        %1952 = vset.pattern.permute.xlu0 0
        %1953 = vperm.xlu0 %1952, %v1658
        %v1954 = vpop.permute.xlu0 %1953
        %1955 = vset.pattern.permute.xlu0 0
        %1956 = vperm.xlu0 %1955, %v1659
        %v1957 = vpop.permute.xlu0 %1956
        %1958 = vset.pattern.permute.xlu0 0
        %1959 = vperm.xlu0 %1958, %v1660
        %v1960 = vpop.permute.xlu0 %1959
        %1961 = vset.pattern.permute.xlu0 0
        %1962 = vperm.xlu0 %1961, %v1661
        %v1963 = vpop.permute.xlu0 %1962
        %1964 = vset.pattern.permute.xlu0 0
        %1965 = vperm.xlu0 %1964, %v1662
        %v1966 = vpop.permute.xlu0 %1965
        %1967 = vset.pattern.permute.xlu0 0
        %1968 = vperm.xlu0 %1967, %v1663
        %v1969 = vpop.permute.xlu0 %1968
        %1970 = vset.pattern.permute.xlu0 0
        %1971 = vperm.xlu0 %1970, %v1664
        %v1972 = vpop.permute.xlu0 %1971
        %1973 = vset.pattern.permute.xlu0 0
        %1974 = vperm.xlu0 %1973, %v1665
        %v1975 = vpop.permute.xlu0 %1974
        %1976 = vset.pattern.permute.xlu0 0
        %1977 = vperm.xlu0 %1976, %v1666
        %v1978 = vpop.permute.xlu0 %1977
        %1979 = vset.pattern.permute.xlu0 0
        %1980 = vperm.xlu0 %1979, %v1667
        %v1981 = vpop.permute.xlu0 %1980
        %1982 = vset.pattern.permute.xlu0 0
        %1983 = vperm.xlu0 %1982, %v1668
        %v1984 = vpop.permute.xlu0 %1983
        %1985 = vset.pattern.permute.xlu0 0
        %1986 = vperm.xlu0 %1985, %v1669
        %v1987 = vpop.permute.xlu0 %1986
        %1988 = vset.pattern.permute.xlu0 0
        %1989 = vperm.xlu0 %1988, %v1670
        %v1990 = vpop.permute.xlu0 %1989
        %1991 = vset.pattern.permute.xlu0 0
        %1992 = vperm.xlu0 %1991, %v1671
        %v1993 = vpop.permute.xlu0 %1992
        %1994 = vset.pattern.permute.xlu0 0
        %1995 = vperm.xlu0 %1994, %v1672
        %v1996 = vpop.permute.xlu0 %1995
        %1997 = vset.pattern.permute.xlu0 0
        %1998 = vperm.xlu0 %1997, %v1673
        %v1999 = vpop.permute.xlu0 %1998
        %2000 = vset.pattern.permute.xlu0 0
        %2001 = vperm.xlu0 %2000, %v1674
        %v2002 = vpop.permute.xlu0 %2001
        %2003 = vset.pattern.permute.xlu0 0
        %2004 = vperm.xlu0 %2003, %v1675
        %v2005 = vpop.permute.xlu0 %2004
        %2006 = vset.pattern.permute.xlu0 0
        %2007 = vperm.xlu0 %2006, %v1676
        %v2008 = vpop.permute.xlu0 %2007
        %2009 = vset.pattern.permute.xlu0 0
        %2010 = vperm.xlu0 %2009, %v1677
        %v2011 = vpop.permute.xlu0 %2010
        %2012 = vset.pattern.permute.xlu0 0
        %2013 = vperm.xlu0 %2012, %v1678
        %v2014 = vpop.permute.xlu0 %2013
        %2015 = vset.pattern.permute.xlu0 0
        %2016 = vperm.xlu0 %2015, %v1679
        %v2017 = vpop.permute.xlu0 %2016
        %2018 = vset.pattern.permute.xlu0 0
        %2019 = vperm.xlu0 %2018, %v1680
        %v2020 = vpop.permute.xlu0 %2019
        %2021 = vset.pattern.permute.xlu0 0
        %2022 = vperm.xlu0 %2021, %v1681
        %v2023 = vpop.permute.xlu0 %2022
        %2024 = vset.pattern.permute.xlu0 0
        %2025 = vperm.xlu0 %2024, %v1682
        %v2026 = vpop.permute.xlu0 %2025
        %2027 = vset.pattern.permute.xlu0 0
        %2028 = vperm.xlu0 %2027, %v1683
        %v2029 = vpop.permute.xlu0 %2028
        %2030 = vset.pattern.permute.xlu0 0
        %2031 = vperm.xlu0 %2030, %v1684
        %v2032 = vpop.permute.xlu0 %2031
        %2033 = vset.pattern.permute.xlu0 0
        %2034 = vperm.xlu0 %2033, %v1685
        %v2035 = vpop.permute.xlu0 %2034
        %2036 = vset.pattern.permute.xlu0 0
        %2037 = vperm.xlu0 %2036, %v1686
        %v2038 = vpop.permute.xlu0 %2037
        %2039 = vset.pattern.permute.xlu0 0
        %2040 = vperm.xlu0 %2039, %v1687
        %v2041 = vpop.permute.xlu0 %2040
        %2042 = vset.pattern.permute.xlu0 0
        %2043 = vperm.xlu0 %2042, %v1688
        %v2044 = vpop.permute.xlu0 %2043
        %2045 = vset.pattern.permute.xlu0 0
        %2046 = vperm.xlu0 %2045, %v1689
        %v2047 = vpop.permute.xlu0 %2046
        %2048 = vset.pattern.permute.xlu0 0
        %2049 = vperm.xlu0 %2048, %v1690
        %v2050 = vpop.permute.xlu0 %2049
        %2051 = vset.pattern.permute.xlu0 0
        %2052 = vperm.xlu0 %2051, %v1691
        %v2053 = vpop.permute.xlu0 %2052
        %2054 = vset.pattern.permute.xlu0 0
        %2055 = vperm.xlu0 %2054, %v1692
        %v2056 = vpop.permute.xlu0 %2055
        %2057 = vset.pattern.permute.xlu0 0
        %2058 = vperm.xlu0 %2057, %v1693
        %v2059 = vpop.permute.xlu0 %2058
        %2060 = vset.pattern.permute.xlu0 0
        %2061 = vperm.xlu0 %2060, %v1694
        %v2062 = vpop.permute.xlu0 %2061
        %2063 = vset.pattern.permute.xlu0 0
        %2064 = vperm.xlu0 %2063, %v1695
        %v2065 = vpop.permute.xlu0 %2064
        %2066 = vset.pattern.permute.xlu0 0
        %2067 = vperm.xlu0 %2066, %v1696
        %v2068 = vpop.permute.xlu0 %2067
        %2069 = vset.pattern.permute.xlu0 0
        %2070 = vperm.xlu0 %2069, %v1697
        %v2071 = vpop.permute.xlu0 %2070
        %2072 = vset.pattern.permute.xlu0 0
        %2073 = vperm.xlu0 %2072, %v1698
        %v2074 = vpop.permute.xlu0 %2073
        %2075 = vset.pattern.permute.xlu0 0
        %2076 = vperm.xlu0 %2075, %v1699
        %v2077 = vpop.permute.xlu0 %2076
        %2078 = vset.pattern.permute.xlu0 0
        %2079 = vperm.xlu0 %2078, %v1700
        %v2080 = vpop.permute.xlu0 %2079
        %2081 = vset.pattern.permute.xlu0 0
        %2082 = vperm.xlu0 %2081, %v1701
        %v2083 = vpop.permute.xlu0 %2082
        %2084 = vset.pattern.permute.xlu0 0
        %2085 = vperm.xlu0 %2084, %v1702
        %v2086 = vpop.permute.xlu0 %2085
        %2087 = vset.pattern.permute.xlu0 0
        %2088 = vperm.xlu0 %2087, %v1703
        %v2089 = vpop.permute.xlu0 %2088
        %2090 = vset.pattern.permute.xlu0 0
        %2091 = vperm.xlu0 %2090, %v1704
        %v2092 = vpop.permute.xlu0 %2091
        %2093 = vset.pattern.permute.xlu0 0
        %2094 = vperm.xlu0 %2093, %v1705
        %v2095 = vpop.permute.xlu0 %2094
        %2096 = vset.pattern.permute.xlu0 0
        %2097 = vperm.xlu0 %2096, %v1706
        %v2098 = vpop.permute.xlu0 %2097
        %2099 = vset.pattern.permute.xlu0 0
        %2100 = vperm.xlu0 %2099, %v1707
        %v2101 = vpop.permute.xlu0 %2100
        %2102 = vset.pattern.permute.xlu0 0
        %2103 = vperm.xlu0 %2102, %v1708
        %v2104 = vpop.permute.xlu0 %2103
        %2105 = vset.pattern.permute.xlu0 0
        %2106 = vperm.xlu0 %2105, %v1709
        %v2107 = vpop.permute.xlu0 %2106
        %2108 = vset.pattern.permute.xlu0 0
        %2109 = vperm.xlu0 %2108, %v1710
        %v2110 = vpop.permute.xlu0 %2109
        %2111 = vset.pattern.permute.xlu0 0
        %2112 = vperm.xlu0 %2111, %v1711
        %v2113 = vpop.permute.xlu0 %2112
        %2114 = vset.pattern.permute.xlu0 0
        %2115 = vperm.xlu0 %2114, %v1712
        %v2116 = vpop.permute.xlu0 %2115
        %2117 = vset.pattern.permute.xlu0 0
        %2118 = vperm.xlu0 %2117, %v1713
        %v2119 = vpop.permute.xlu0 %2118
        %2120 = vset.pattern.permute.xlu0 0
        %2121 = vperm.xlu0 %2120, %v1714
        %v2122 = vpop.permute.xlu0 %2121
        %2123 = vset.pattern.permute.xlu0 0
        %2124 = vperm.xlu0 %2123, %v1715
        %v2125 = vpop.permute.xlu0 %2124
        %2126 = vset.pattern.permute.xlu0 0
        %2127 = vperm.xlu0 %2126, %v1716
        %v2128 = vpop.permute.xlu0 %2127
        %2129 = vset.pattern.permute.xlu0 0
        %2130 = vperm.xlu0 %2129, %v1717
        %v2131 = vpop.permute.xlu0 %2130
        %2132 = vset.pattern.permute.xlu0 0
        %2133 = vperm.xlu0 %2132, %v1718
        %v2134 = vpop.permute.xlu0 %2133
        %2135 = vset.pattern.permute.xlu0 0
        %2136 = vperm.xlu0 %2135, %v1719
        %v2137 = vpop.permute.xlu0 %2136
        %2138 = vset.pattern.permute.xlu0 0
        %2139 = vperm.xlu0 %2138, %v1720
        %v2140 = vpop.permute.xlu0 %2139
        %2141 = vset.pattern.permute.xlu0 0
        %2142 = vperm.xlu0 %2141, %v1721
        %v2143 = vpop.permute.xlu0 %2142
        %2144 = vset.pattern.permute.xlu0 0
        %2145 = vperm.xlu0 %2144, %v1722
        %v2146 = vpop.permute.xlu0 %2145
        %2147 = vset.pattern.permute.xlu0 0
        %2148 = vperm.xlu0 %2147, %v1723
        %v2149 = vpop.permute.xlu0 %2148
        %2150 = vset.pattern.permute.xlu0 0
        %2151 = vperm.xlu0 %2150, %v1724
        %v2152 = vpop.permute.xlu0 %2151
        %2153 = vset.pattern.permute.xlu0 0
        %2154 = vperm.xlu0 %2153, %v1725
        %v2155 = vpop.permute.xlu0 %2154
        %2156 = vset.pattern.permute.xlu0 0
        %2157 = vperm.xlu0 %2156, %v1726
        %v2158 = vpop.permute.xlu0 %2157
        %2159 = vset.pattern.permute.xlu0 0
        %2160 = vperm.xlu0 %2159, %v1727
        %v2161 = vpop.permute.xlu0 %2160
        %2162 = vset.pattern.permute.xlu0 0
        %2163 = vperm.xlu0 %2162, %v1728
        %v2164 = vpop.permute.xlu0 %2163
        %2165 = vset.pattern.permute.xlu0 0
        %2166 = vperm.xlu0 %2165, %v1729
        %v2167 = vpop.permute.xlu0 %2166
        %2168 = vset.pattern.permute.xlu0 0
        %2169 = vperm.xlu0 %2168, %v1730
        %v2170 = vpop.permute.xlu0 %2169
        %2171 = vset.pattern.permute.xlu0 0
        %2172 = vperm.xlu0 %2171, %v1731
        %v2173 = vpop.permute.xlu0 %2172
        %2174 = vset.pattern.permute.xlu0 0
        %2175 = vperm.xlu0 %2174, %v1732
        %v2176 = vpop.permute.xlu0 %2175
        %2177 = vset.pattern.permute.xlu0 0
        %2178 = vperm.xlu0 %2177, %v1733
        %v2179 = vpop.permute.xlu0 %2178
        %2180 = vset.pattern.permute.xlu0 0
        %2181 = vperm.xlu0 %2180, %v1734
        %v2182 = vpop.permute.xlu0 %2181
        %2183 = vset.pattern.permute.xlu0 0
        %2184 = vperm.xlu0 %2183, %v1735
        %v2185 = vpop.permute.xlu0 %2184
        %2186 = vset.pattern.permute.xlu0 0
        %2187 = vperm.xlu0 %2186, %v1736
        %v2188 = vpop.permute.xlu0 %2187
        %2189 = vset.pattern.permute.xlu0 0
        %2190 = vperm.xlu0 %2189, %v1737
        %v2191 = vpop.permute.xlu0 %2190
        %2192 = vset.pattern.permute.xlu0 0
        %2193 = vperm.xlu0 %2192, %v1738
        %v2194 = vpop.permute.xlu0 %2193
        %2195 = vset.pattern.permute.xlu0 0
        %2196 = vperm.xlu0 %2195, %v1739
        %v2197 = vpop.permute.xlu0 %2196
        %2198 = vset.pattern.permute.xlu0 0
        %2199 = vperm.xlu0 %2198, %v1740
        %v2200 = vpop.permute.xlu0 %2199
        %2201 = vset.pattern.permute.xlu0 0
        %2202 = vperm.xlu0 %2201, %v1741
        %v2203 = vpop.permute.xlu0 %2202
        %2204 = vset.pattern.permute.xlu0 0
        %2205 = vperm.xlu0 %2204, %v1742
        %v2206 = vpop.permute.xlu0 %2205
        %2207 = vset.pattern.permute.xlu0 0
        %2208 = vperm.xlu0 %2207, %v1743
        %v2209 = vpop.permute.xlu0 %2208
        %2210 = vset.pattern.permute.xlu0 0
        %2211 = vperm.xlu0 %2210, %v1744
        %v2212 = vpop.permute.xlu0 %2211
        %2213 = vset.pattern.permute.xlu0 0
        %2214 = vperm.xlu0 %2213, %v1745
        %v2215 = vpop.permute.xlu0 %2214
        %2216 = vset.pattern.permute.xlu0 0
        %2217 = vperm.xlu0 %2216, %v1746
        %v2218 = vpop.permute.xlu0 %2217
        %2219 = vset.pattern.permute.xlu0 0
        %2220 = vperm.xlu0 %2219, %v1747
        %v2221 = vpop.permute.xlu0 %2220
        %2222 = vset.pattern.permute.xlu0 0
        %2223 = vperm.xlu0 %2222, %v1748
        %v2224 = vpop.permute.xlu0 %2223
        %2225 = vset.pattern.permute.xlu0 0
        %2226 = vperm.xlu0 %2225, %v1749
        %v2227 = vpop.permute.xlu0 %2226
        %2228 = vset.pattern.permute.xlu0 0
        %2229 = vperm.xlu0 %2228, %v1750
        %v2230 = vpop.permute.xlu0 %2229
        %2231 = vset.pattern.permute.xlu0 0
        %2232 = vperm.xlu0 %2231, %v1751
        %v2233 = vpop.permute.xlu0 %2232
        %2234 = vset.pattern.permute.xlu0 0
        %2235 = vperm.xlu0 %2234, %v1752
        %v2236 = vpop.permute.xlu0 %2235
        %2237 = vset.pattern.permute.xlu0 0
        %2238 = vperm.xlu0 %2237, %v1753
        %v2239 = vpop.permute.xlu0 %2238
        %2240 = vset.pattern.permute.xlu0 0
        %2241 = vperm.xlu0 %2240, %v1754
        %v2242 = vpop.permute.xlu0 %2241
        %2243 = vset.pattern.permute.xlu0 0
        %2244 = vperm.xlu0 %2243, %v1755
        %v2245 = vpop.permute.xlu0 %2244
        %2246 = vset.pattern.permute.xlu0 0
        %2247 = vperm.xlu0 %2246, %v1756
        %v2248 = vpop.permute.xlu0 %2247
        %2249 = vset.pattern.permute.xlu0 0
        %2250 = vperm.xlu0 %2249, %v1757
        %v2251 = vpop.permute.xlu0 %2250
        %2252 = vset.pattern.permute.xlu0 0
        %2253 = vperm.xlu0 %2252, %v1758
        %v2254 = vpop.permute.xlu0 %2253
        %2255 = vset.pattern.permute.xlu0 0
        %2256 = vperm.xlu0 %2255, %v1759
        %v2257 = vpop.permute.xlu0 %2256
        %2258 = vset.pattern.permute.xlu0 0
        %2259 = vperm.xlu0 %2258, %v1760
        %v2260 = vpop.permute.xlu0 %2259
        %2261 = vset.pattern.permute.xlu0 0
        %2262 = vperm.xlu0 %2261, %v1761
        %v2263 = vpop.permute.xlu0 %2262
        %2264 = vset.pattern.permute.xlu0 0
        %2265 = vperm.xlu0 %2264, %v1762
        %v2266 = vpop.permute.xlu0 %2265
        %2267 = vset.pattern.permute.xlu0 0
        %2268 = vperm.xlu0 %2267, %v1763
        %v2269 = vpop.permute.xlu0 %2268
        %2270 = vset.pattern.permute.xlu0 0
        %2271 = vperm.xlu0 %2270, %v1764
        %v2272 = vpop.permute.xlu0 %2271
        %2273 = vset.pattern.permute.xlu0 0
        %2274 = vperm.xlu0 %2273, %v1765
        %v2275 = vpop.permute.xlu0 %2274
        %2276 = vset.pattern.permute.xlu0 0
        %2277 = vperm.xlu0 %2276, %v1766
        %v2278 = vpop.permute.xlu0 %2277
        %v2279 = vlaneseq
        %v2280 = vand.u32 %v2279, 127
        %v2281 = vperm.slane %v1897, %v2280
        %v2282 = vperm.slane %v1900, %v2280
        %v2283 = vperm.slane %v1903, %v2280
        %v2284 = vperm.slane %v1906, %v2280
        %v2285 = vperm.slane %v1909, %v2280
        %v2286 = vperm.slane %v1912, %v2280
        %v2287 = vperm.slane %v1915, %v2280
        %v2288 = vperm.slane %v1918, %v2280
        %v2289 = vperm.slane %v1921, %v2280
        %v2290 = vperm.slane %v1924, %v2280
        %v2291 = vperm.slane %v1927, %v2280
        %v2292 = vperm.slane %v1930, %v2280
        %v2293 = vperm.slane %v1933, %v2280
        %v2294 = vperm.slane %v1936, %v2280
        %v2295 = vperm.slane %v1939, %v2280
        %v2296 = vperm.slane %v1942, %v2280
        %v2297 = vperm.slane %v1945, %v2280
        %v2298 = vperm.slane %v1948, %v2280
        %v2299 = vperm.slane %v1951, %v2280
        %v2300 = vperm.slane %v1954, %v2280
        %v2301 = vperm.slane %v1957, %v2280
        %v2302 = vperm.slane %v1960, %v2280
        %v2303 = vperm.slane %v1963, %v2280
        %v2304 = vperm.slane %v1966, %v2280
        %v2305 = vperm.slane %v1969, %v2280
        %v2306 = vperm.slane %v1972, %v2280
        %v2307 = vperm.slane %v1975, %v2280
        %v2308 = vperm.slane %v1978, %v2280
        %v2309 = vperm.slane %v1981, %v2280
        %v2310 = vperm.slane %v1984, %v2280
        %v2311 = vperm.slane %v1987, %v2280
        %v2312 = vperm.slane %v1990, %v2280
        %v2313 = vperm.slane %v1993, %v2280
        %v2314 = vperm.slane %v1996, %v2280
        %v2315 = vperm.slane %v1999, %v2280
        %v2316 = vperm.slane %v2002, %v2280
        %v2317 = vperm.slane %v2005, %v2280
        %v2318 = vperm.slane %v2008, %v2280
        %v2319 = vperm.slane %v2011, %v2280
        %v2320 = vperm.slane %v2014, %v2280
        %v2321 = vperm.slane %v2017, %v2280
        %v2322 = vperm.slane %v2020, %v2280
        %v2323 = vperm.slane %v2023, %v2280
        %v2324 = vperm.slane %v2026, %v2280
        %v2325 = vperm.slane %v2029, %v2280
        %v2326 = vperm.slane %v2032, %v2280
        %v2327 = vperm.slane %v2035, %v2280
        %v2328 = vperm.slane %v2038, %v2280
        %v2329 = vperm.slane %v2041, %v2280
        %v2330 = vperm.slane %v2044, %v2280
        %v2331 = vperm.slane %v2047, %v2280
        %v2332 = vperm.slane %v2050, %v2280
        %v2333 = vperm.slane %v2053, %v2280
        %v2334 = vperm.slane %v2056, %v2280
        %v2335 = vperm.slane %v2059, %v2280
        %v2336 = vperm.slane %v2062, %v2280
        %v2337 = vperm.slane %v2065, %v2280
        %v2338 = vperm.slane %v2068, %v2280
        %v2339 = vperm.slane %v2071, %v2280
        %v2340 = vperm.slane %v2074, %v2280
        %v2341 = vperm.slane %v2077, %v2280
        %v2342 = vperm.slane %v2080, %v2280
        %v2343 = vperm.slane %v2083, %v2280
        %v2344 = vperm.slane %v2086, %v2280
        %v2345 = vperm.slane %v2089, %v2280
        %v2346 = vperm.slane %v2092, %v2280
        %v2347 = vperm.slane %v2095, %v2280
        %v2348 = vperm.slane %v2098, %v2280
        %v2349 = vperm.slane %v2101, %v2280
        %v2350 = vperm.slane %v2104, %v2280
        %v2351 = vperm.slane %v2107, %v2280
        %v2352 = vperm.slane %v2110, %v2280
        %v2353 = vperm.slane %v2113, %v2280
        %v2354 = vperm.slane %v2116, %v2280
        %v2355 = vperm.slane %v2119, %v2280
        %v2356 = vperm.slane %v2122, %v2280
        %v2357 = vperm.slane %v2125, %v2280
        %v2358 = vperm.slane %v2128, %v2280
        %v2359 = vperm.slane %v2131, %v2280
        %v2360 = vperm.slane %v2134, %v2280
        %v2361 = vperm.slane %v2137, %v2280
        %v2362 = vperm.slane %v2140, %v2280
        %v2363 = vperm.slane %v2143, %v2280
        %v2364 = vperm.slane %v2146, %v2280
        %v2365 = vperm.slane %v2149, %v2280
        %v2366 = vperm.slane %v2152, %v2280
        %v2367 = vperm.slane %v2155, %v2280
        %v2368 = vperm.slane %v2158, %v2280
        %v2369 = vperm.slane %v2161, %v2280
        %v2370 = vperm.slane %v2164, %v2280
        %v2371 = vperm.slane %v2167, %v2280
        %v2372 = vperm.slane %v2170, %v2280
        %v2373 = vperm.slane %v2173, %v2280
        %v2374 = vperm.slane %v2176, %v2280
        %v2375 = vperm.slane %v2179, %v2280
        %v2376 = vperm.slane %v2182, %v2280
        %v2377 = vperm.slane %v2185, %v2280
        %v2378 = vperm.slane %v2188, %v2280
        %v2379 = vperm.slane %v2191, %v2280
        %v2380 = vperm.slane %v2194, %v2280
        %v2381 = vperm.slane %v2197, %v2280
        %v2382 = vperm.slane %v2200, %v2280
        %v2383 = vperm.slane %v2203, %v2280
        %v2384 = vperm.slane %v2206, %v2280
        %v2385 = vperm.slane %v2209, %v2280
        %v2386 = vperm.slane %v2212, %v2280
        %v2387 = vperm.slane %v2215, %v2280
        %v2388 = vperm.slane %v2218, %v2280
        %v2389 = vperm.slane %v2221, %v2280
        %v2390 = vperm.slane %v2224, %v2280
        %v2391 = vperm.slane %v2227, %v2280
        %v2392 = vperm.slane %v2230, %v2280
        %v2393 = vperm.slane %v2233, %v2280
        %v2394 = vperm.slane %v2236, %v2280
        %v2395 = vperm.slane %v2239, %v2280
        %v2396 = vperm.slane %v2242, %v2280
        %v2397 = vperm.slane %v2245, %v2280
        %v2398 = vperm.slane %v2248, %v2280
        %v2399 = vperm.slane %v2251, %v2280
        %v2400 = vperm.slane %v2254, %v2280
        %v2401 = vperm.slane %v2257, %v2280
        %v2402 = vperm.slane %v2260, %v2280
        %v2403 = vperm.slane %v2263, %v2280
        %v2404 = vperm.slane %v2266, %v2280
        %v2405 = vperm.slane %v2269, %v2280
        %v2406 = vperm.slane %v2272, %v2280
        %v2407 = vperm.slane %v2275, %v2280
        %v2408 = vperm.slane %v2278, %v2280
        %v2409 = vsel %vm492, %v2282, %v2281
        %v2410 = vsel %vm495, %v2283, %v2409
        %v2411 = vsel %vm498, %v2284, %v2410
        %v2412 = vsel %vm492, %v2286, %v2285
        %v2413 = vsel %vm495, %v2287, %v2412
        %v2414 = vsel %vm498, %v2288, %v2413
        %v2415 = vsel %vm492, %v2290, %v2289
        %v2416 = vsel %vm495, %v2291, %v2415
        %v2417 = vsel %vm498, %v2292, %v2416
        %v2418 = vsel %vm492, %v2294, %v2293
        %v2419 = vsel %vm495, %v2295, %v2418
        %v2420 = vsel %vm498, %v2296, %v2419
        %v2421 = vsel %vm492, %v2298, %v2297
        %v2422 = vsel %vm495, %v2299, %v2421
        %v2423 = vsel %vm498, %v2300, %v2422
        %v2424 = vsel %vm492, %v2302, %v2301
        %v2425 = vsel %vm495, %v2303, %v2424
        %v2426 = vsel %vm498, %v2304, %v2425
        %v2427 = vsel %vm492, %v2306, %v2305
        %v2428 = vsel %vm495, %v2307, %v2427
        %v2429 = vsel %vm498, %v2308, %v2428
        %v2430 = vsel %vm492, %v2310, %v2309
        %v2431 = vsel %vm495, %v2311, %v2430
        %v2432 = vsel %vm498, %v2312, %v2431
        %v2433 = vsel %vm492, %v2314, %v2313
        %v2434 = vsel %vm495, %v2315, %v2433
        %v2435 = vsel %vm498, %v2316, %v2434
        %v2436 = vsel %vm492, %v2318, %v2317
        %v2437 = vsel %vm495, %v2319, %v2436
        %v2438 = vsel %vm498, %v2320, %v2437
        %v2439 = vsel %vm492, %v2322, %v2321
        %v2440 = vsel %vm495, %v2323, %v2439
        %v2441 = vsel %vm498, %v2324, %v2440
        %v2442 = vsel %vm492, %v2326, %v2325
        %v2443 = vsel %vm495, %v2327, %v2442
        %v2444 = vsel %vm498, %v2328, %v2443
        %v2445 = vsel %vm492, %v2330, %v2329
        %v2446 = vsel %vm495, %v2331, %v2445
        %v2447 = vsel %vm498, %v2332, %v2446
        %v2448 = vsel %vm492, %v2334, %v2333
        %v2449 = vsel %vm495, %v2335, %v2448
        %v2450 = vsel %vm498, %v2336, %v2449
        %v2451 = vsel %vm492, %v2338, %v2337
        %v2452 = vsel %vm495, %v2339, %v2451
        %v2453 = vsel %vm498, %v2340, %v2452
        %v2454 = vsel %vm492, %v2342, %v2341
        %v2455 = vsel %vm495, %v2343, %v2454
        %v2456 = vsel %vm498, %v2344, %v2455
        %v2457 = vsel %vm492, %v2346, %v2345
        %v2458 = vsel %vm495, %v2347, %v2457
        %v2459 = vsel %vm498, %v2348, %v2458
        %v2460 = vsel %vm492, %v2350, %v2349
        %v2461 = vsel %vm495, %v2351, %v2460
        %v2462 = vsel %vm498, %v2352, %v2461
        %v2463 = vsel %vm492, %v2354, %v2353
        %v2464 = vsel %vm495, %v2355, %v2463
        %v2465 = vsel %vm498, %v2356, %v2464
        %v2466 = vsel %vm492, %v2358, %v2357
        %v2467 = vsel %vm495, %v2359, %v2466
        %v2468 = vsel %vm498, %v2360, %v2467
        %v2469 = vsel %vm492, %v2362, %v2361
        %v2470 = vsel %vm495, %v2363, %v2469
        %v2471 = vsel %vm498, %v2364, %v2470
        %v2472 = vsel %vm492, %v2366, %v2365
        %v2473 = vsel %vm495, %v2367, %v2472
        %v2474 = vsel %vm498, %v2368, %v2473
        %v2475 = vsel %vm492, %v2370, %v2369
        %v2476 = vsel %vm495, %v2371, %v2475
        %v2477 = vsel %vm498, %v2372, %v2476
        %v2478 = vsel %vm492, %v2374, %v2373
        %v2479 = vsel %vm495, %v2375, %v2478
        %v2480 = vsel %vm498, %v2376, %v2479
        %v2481 = vsel %vm492, %v2378, %v2377
        %v2482 = vsel %vm495, %v2379, %v2481
        %v2483 = vsel %vm498, %v2380, %v2482
        %v2484 = vsel %vm492, %v2382, %v2381
        %v2485 = vsel %vm495, %v2383, %v2484
        %v2486 = vsel %vm498, %v2384, %v2485
        %v2487 = vsel %vm492, %v2386, %v2385
        %v2488 = vsel %vm495, %v2387, %v2487
        %v2489 = vsel %vm498, %v2388, %v2488
        %v2490 = vsel %vm492, %v2390, %v2389
        %v2491 = vsel %vm495, %v2391, %v2490
        %v2492 = vsel %vm498, %v2392, %v2491
        %v2493 = vsel %vm492, %v2394, %v2393
        %v2494 = vsel %vm495, %v2395, %v2493
        %v2495 = vsel %vm498, %v2396, %v2494
        %v2496 = vsel %vm492, %v2398, %v2397
        %v2497 = vsel %vm495, %v2399, %v2496
        %v2498 = vsel %vm498, %v2400, %v2497
        %v2499 = vsel %vm492, %v2402, %v2401
        %v2500 = vsel %vm495, %v2403, %v2499
        %v2501 = vsel %vm498, %v2404, %v2500
        %v2502 = vsel %vm492, %v2406, %v2405
        %v2503 = vsel %vm495, %v2407, %v2502
        %v2504 = vsel %vm498, %v2408, %v2503
        %vm2537 = vcmask 60416
        %v2538 = vsel %vm2537, %v2411, -inf
        %2539 = vmax.xlane.f32.xlu0 %v2538
        %v2540 = vpop.xlane.xlu0 %2539
        %v2541 = vsel %vm2537, %v2414, -inf
        %2542 = vmax.xlane.f32.xlu0 %v2541
        %v2543 = vpop.xlane.xlu0 %2542
        %v2544 = vsel %vm2537, %v2417, -inf
        %2545 = vmax.xlane.f32.xlu0 %v2544
        %v2546 = vpop.xlane.xlu0 %2545
        %v2547 = vsel %vm2537, %v2420, -inf
        %2548 = vmax.xlane.f32.xlu0 %v2547
        %v2549 = vpop.xlane.xlu0 %2548
        %v2550 = vsel %vm2537, %v2423, -inf
        %2551 = vmax.xlane.f32.xlu0 %v2550
        %v2552 = vpop.xlane.xlu0 %2551
        %v2553 = vsel %vm2537, %v2426, -inf
        %2554 = vmax.xlane.f32.xlu0 %v2553
        %v2555 = vpop.xlane.xlu0 %2554
        %v2556 = vsel %vm2537, %v2429, -inf
        %2557 = vmax.xlane.f32.xlu0 %v2556
        %v2558 = vpop.xlane.xlu0 %2557
        %v2559 = vsel %vm2537, %v2432, -inf
        %2560 = vmax.xlane.f32.xlu0 %v2559
        %v2561 = vpop.xlane.xlu0 %2560
        %v2562 = vsel %vm2537, %v2435, -inf
        %2563 = vmax.xlane.f32.xlu0 %v2562
        %v2564 = vpop.xlane.xlu0 %2563
        %v2565 = vsel %vm2537, %v2438, -inf
        %2566 = vmax.xlane.f32.xlu0 %v2565
        %v2567 = vpop.xlane.xlu0 %2566
        %v2568 = vsel %vm2537, %v2441, -inf
        %2569 = vmax.xlane.f32.xlu0 %v2568
        %v2570 = vpop.xlane.xlu0 %2569
        %v2571 = vsel %vm2537, %v2444, -inf
        %2572 = vmax.xlane.f32.xlu0 %v2571
        %v2573 = vpop.xlane.xlu0 %2572
        %v2574 = vsel %vm2537, %v2447, -inf
        %2575 = vmax.xlane.f32.xlu0 %v2574
        %v2576 = vpop.xlane.xlu0 %2575
        %v2577 = vsel %vm2537, %v2450, -inf
        %2578 = vmax.xlane.f32.xlu0 %v2577
        %v2579 = vpop.xlane.xlu0 %2578
        %v2580 = vsel %vm2537, %v2453, -inf
        %2581 = vmax.xlane.f32.xlu0 %v2580
        %v2582 = vpop.xlane.xlu0 %2581
        %v2583 = vsel %vm2537, %v2456, -inf
        %2584 = vmax.xlane.f32.xlu0 %v2583
        %v2585 = vpop.xlane.xlu0 %2584
        %v2586 = vsel %vm2537, %v2459, -inf
        %2587 = vmax.xlane.f32.xlu0 %v2586
        %v2588 = vpop.xlane.xlu0 %2587
        %v2589 = vsel %vm2537, %v2462, -inf
        %2590 = vmax.xlane.f32.xlu0 %v2589
        %v2591 = vpop.xlane.xlu0 %2590
        %v2592 = vsel %vm2537, %v2465, -inf
        %2593 = vmax.xlane.f32.xlu0 %v2592
        %v2594 = vpop.xlane.xlu0 %2593
        %v2595 = vsel %vm2537, %v2468, -inf
        %2596 = vmax.xlane.f32.xlu0 %v2595
        %v2597 = vpop.xlane.xlu0 %2596
        %v2598 = vsel %vm2537, %v2471, -inf
        %2599 = vmax.xlane.f32.xlu0 %v2598
        %v2600 = vpop.xlane.xlu0 %2599
        %v2601 = vsel %vm2537, %v2474, -inf
        %2602 = vmax.xlane.f32.xlu0 %v2601
        %v2603 = vpop.xlane.xlu0 %2602
        %v2604 = vsel %vm2537, %v2477, -inf
        %2605 = vmax.xlane.f32.xlu0 %v2604
        %v2606 = vpop.xlane.xlu0 %2605
        %v2607 = vsel %vm2537, %v2480, -inf
        %2608 = vmax.xlane.f32.xlu0 %v2607
        %v2609 = vpop.xlane.xlu0 %2608
        %v2610 = vsel %vm2537, %v2483, -inf
        %2611 = vmax.xlane.f32.xlu0 %v2610
        %v2612 = vpop.xlane.xlu0 %2611
        %v2613 = vsel %vm2537, %v2486, -inf
        %2614 = vmax.xlane.f32.xlu0 %v2613
        %v2615 = vpop.xlane.xlu0 %2614
        %v2616 = vsel %vm2537, %v2489, -inf
        %2617 = vmax.xlane.f32.xlu0 %v2616
        %v2618 = vpop.xlane.xlu0 %2617
        %v2619 = vsel %vm2537, %v2492, -inf
        %2620 = vmax.xlane.f32.xlu0 %v2619
        %v2621 = vpop.xlane.xlu0 %2620
        %v2622 = vsel %vm2537, %v2495, -inf
        %2623 = vmax.xlane.f32.xlu0 %v2622
        %v2624 = vpop.xlane.xlu0 %2623
        %v2625 = vsel %vm2537, %v2498, -inf
        %2626 = vmax.xlane.f32.xlu0 %v2625
        %v2627 = vpop.xlane.xlu0 %2626
        %v2628 = vsel %vm2537, %v2501, -inf
        %2629 = vmax.xlane.f32.xlu0 %v2628
        %v2630 = vpop.xlane.xlu0 %2629
        %v2631 = vsel %vm2537, %v2504, -inf
        %2632 = vmax.xlane.f32.xlu0 %v2631
        %v2633 = vpop.xlane.xlu0 %2632
        %v2666 = vperm.slane %v2540, 0
        %v2667 = vperm.slane %v2540, 1
        %v2668 = vperm.slane %v2540, 2
        %v2669 = vperm.slane %v2540, 3
        %v2670 = vperm.slane %v2543, 0
        %v2671 = vperm.slane %v2543, 1
        %v2672 = vperm.slane %v2543, 2
        %v2673 = vperm.slane %v2543, 3
        %v2674 = vperm.slane %v2546, 0
        %v2675 = vperm.slane %v2546, 1
        %v2676 = vperm.slane %v2546, 2
        %v2677 = vperm.slane %v2546, 3
        %v2678 = vperm.slane %v2549, 0
        %v2679 = vperm.slane %v2549, 1
        %v2680 = vperm.slane %v2549, 2
        %v2681 = vperm.slane %v2549, 3
        %v2682 = vperm.slane %v2552, 0
        %v2683 = vperm.slane %v2552, 1
        %v2684 = vperm.slane %v2552, 2
        %v2685 = vperm.slane %v2552, 3
        %v2686 = vperm.slane %v2555, 0
        %v2687 = vperm.slane %v2555, 1
        %v2688 = vperm.slane %v2555, 2
        %v2689 = vperm.slane %v2555, 3
        %v2690 = vperm.slane %v2558, 0
        %v2691 = vperm.slane %v2558, 1
        %v2692 = vperm.slane %v2558, 2
        %v2693 = vperm.slane %v2558, 3
        %v2694 = vperm.slane %v2561, 0
        %v2695 = vperm.slane %v2561, 1
        %v2696 = vperm.slane %v2561, 2
        %v2697 = vperm.slane %v2561, 3
        %v2698 = vperm.slane %v2564, 0
        %v2699 = vperm.slane %v2564, 1
        %v2700 = vperm.slane %v2564, 2
        %v2701 = vperm.slane %v2564, 3
        %v2702 = vperm.slane %v2567, 0
        %v2703 = vperm.slane %v2567, 1
        %v2704 = vperm.slane %v2567, 2
        %v2705 = vperm.slane %v2567, 3
        %v2706 = vperm.slane %v2570, 0
        %v2707 = vperm.slane %v2570, 1
        %v2708 = vperm.slane %v2570, 2
        %v2709 = vperm.slane %v2570, 3
        %v2710 = vperm.slane %v2573, 0
        %v2711 = vperm.slane %v2573, 1
        %v2712 = vperm.slane %v2573, 2
        %v2713 = vperm.slane %v2573, 3
        %v2714 = vperm.slane %v2576, 0
        %v2715 = vperm.slane %v2576, 1
        %v2716 = vperm.slane %v2576, 2
        %v2717 = vperm.slane %v2576, 3
        %v2718 = vperm.slane %v2579, 0
        %v2719 = vperm.slane %v2579, 1
        %v2720 = vperm.slane %v2579, 2
        %v2721 = vperm.slane %v2579, 3
        %v2722 = vperm.slane %v2582, 0
        %v2723 = vperm.slane %v2582, 1
        %v2724 = vperm.slane %v2582, 2
        %v2725 = vperm.slane %v2582, 3
        %v2726 = vperm.slane %v2585, 0
        %v2727 = vperm.slane %v2585, 1
        %v2728 = vperm.slane %v2585, 2
        %v2729 = vperm.slane %v2585, 3
        %v2730 = vperm.slane %v2588, 0
        %v2731 = vperm.slane %v2588, 1
        %v2732 = vperm.slane %v2588, 2
        %v2733 = vperm.slane %v2588, 3
        %v2734 = vperm.slane %v2591, 0
        %v2735 = vperm.slane %v2591, 1
        %v2736 = vperm.slane %v2591, 2
        %v2737 = vperm.slane %v2591, 3
        %v2738 = vperm.slane %v2594, 0
        %v2739 = vperm.slane %v2594, 1
        %v2740 = vperm.slane %v2594, 2
        %v2741 = vperm.slane %v2594, 3
        %v2742 = vperm.slane %v2597, 0
        %v2743 = vperm.slane %v2597, 1
        %v2744 = vperm.slane %v2597, 2
        %v2745 = vperm.slane %v2597, 3
        %v2746 = vperm.slane %v2600, 0
        %v2747 = vperm.slane %v2600, 1
        %v2748 = vperm.slane %v2600, 2
        %v2749 = vperm.slane %v2600, 3
        %v2750 = vperm.slane %v2603, 0
        %v2751 = vperm.slane %v2603, 1
        %v2752 = vperm.slane %v2603, 2
        %v2753 = vperm.slane %v2603, 3
        %v2754 = vperm.slane %v2606, 0
        %v2755 = vperm.slane %v2606, 1
        %v2756 = vperm.slane %v2606, 2
        %v2757 = vperm.slane %v2606, 3
        %v2758 = vperm.slane %v2609, 0
        %v2759 = vperm.slane %v2609, 1
        %v2760 = vperm.slane %v2609, 2
        %v2761 = vperm.slane %v2609, 3
        %v2762 = vperm.slane %v2612, 0
        %v2763 = vperm.slane %v2612, 1
        %v2764 = vperm.slane %v2612, 2
        %v2765 = vperm.slane %v2612, 3
        %v2766 = vperm.slane %v2615, 0
        %v2767 = vperm.slane %v2615, 1
        %v2768 = vperm.slane %v2615, 2
        %v2769 = vperm.slane %v2615, 3
        %v2770 = vperm.slane %v2618, 0
        %v2771 = vperm.slane %v2618, 1
        %v2772 = vperm.slane %v2618, 2
        %v2773 = vperm.slane %v2618, 3
        %v2774 = vperm.slane %v2621, 0
        %v2775 = vperm.slane %v2621, 1
        %v2776 = vperm.slane %v2621, 2
        %v2777 = vperm.slane %v2621, 3
        %v2778 = vperm.slane %v2624, 0
        %v2779 = vperm.slane %v2624, 1
        %v2780 = vperm.slane %v2624, 2
        %v2781 = vperm.slane %v2624, 3
        %v2782 = vperm.slane %v2627, 0
        %v2783 = vperm.slane %v2627, 1
        %v2784 = vperm.slane %v2627, 2
        %v2785 = vperm.slane %v2627, 3
        %v2786 = vperm.slane %v2630, 0
        %v2787 = vperm.slane %v2630, 1
        %v2788 = vperm.slane %v2630, 2
        %v2789 = vperm.slane %v2630, 3
        %v2790 = vperm.slane %v2633, 0
        %v2791 = vperm.slane %v2633, 1
        %v2792 = vperm.slane %v2633, 2
        %v2793 = vperm.slane %v2633, 3
        %v2922 = vsub.f32 %v1639, %v2666
        %v2923 = vsub.f32 %v1640, %v2667
        %v2924 = vsub.f32 %v1641, %v2668
        %v2925 = vsub.f32 %v1642, %v2669
        %v2926 = vsub.f32 %v1643, %v2670
        %v2927 = vsub.f32 %v1644, %v2671
        %v2928 = vsub.f32 %v1645, %v2672
        %v2929 = vsub.f32 %v1646, %v2673
        %v2930 = vsub.f32 %v1647, %v2674
        %v2931 = vsub.f32 %v1648, %v2675
        %v2932 = vsub.f32 %v1649, %v2676
        %v2933 = vsub.f32 %v1650, %v2677
        %v2934 = vsub.f32 %v1651, %v2678
        %v2935 = vsub.f32 %v1652, %v2679
        %v2936 = vsub.f32 %v1653, %v2680
        %v2937 = vsub.f32 %v1654, %v2681
        %v2938 = vsub.f32 %v1655, %v2682
        %v2939 = vsub.f32 %v1656, %v2683
        %v2940 = vsub.f32 %v1657, %v2684
        %v2941 = vsub.f32 %v1658, %v2685
        %v2942 = vsub.f32 %v1659, %v2686
        %v2943 = vsub.f32 %v1660, %v2687
        %v2944 = vsub.f32 %v1661, %v2688
        %v2945 = vsub.f32 %v1662, %v2689
        %v2946 = vsub.f32 %v1663, %v2690
        %v2947 = vsub.f32 %v1664, %v2691
        %v2948 = vsub.f32 %v1665, %v2692
        %v2949 = vsub.f32 %v1666, %v2693
        %v2950 = vsub.f32 %v1667, %v2694
        %v2951 = vsub.f32 %v1668, %v2695
        %v2952 = vsub.f32 %v1669, %v2696
        %v2953 = vsub.f32 %v1670, %v2697
        %v2954 = vsub.f32 %v1671, %v2698
        %v2955 = vsub.f32 %v1672, %v2699
        %v2956 = vsub.f32 %v1673, %v2700
        %v2957 = vsub.f32 %v1674, %v2701
        %v2958 = vsub.f32 %v1675, %v2702
        %v2959 = vsub.f32 %v1676, %v2703
        %v2960 = vsub.f32 %v1677, %v2704
        %v2961 = vsub.f32 %v1678, %v2705
        %v2962 = vsub.f32 %v1679, %v2706
        %v2963 = vsub.f32 %v1680, %v2707
        %v2964 = vsub.f32 %v1681, %v2708
        %v2965 = vsub.f32 %v1682, %v2709
        %v2966 = vsub.f32 %v1683, %v2710
        %v2967 = vsub.f32 %v1684, %v2711
        %v2968 = vsub.f32 %v1685, %v2712
        %v2969 = vsub.f32 %v1686, %v2713
        %v2970 = vsub.f32 %v1687, %v2714
        %v2971 = vsub.f32 %v1688, %v2715
        %v2972 = vsub.f32 %v1689, %v2716
        %v2973 = vsub.f32 %v1690, %v2717
        %v2974 = vsub.f32 %v1691, %v2718
        %v2975 = vsub.f32 %v1692, %v2719
        %v2976 = vsub.f32 %v1693, %v2720
        %v2977 = vsub.f32 %v1694, %v2721
        %v2978 = vsub.f32 %v1695, %v2722
        %v2979 = vsub.f32 %v1696, %v2723
        %v2980 = vsub.f32 %v1697, %v2724
        %v2981 = vsub.f32 %v1698, %v2725
        %v2982 = vsub.f32 %v1699, %v2726
        %v2983 = vsub.f32 %v1700, %v2727
        %v2984 = vsub.f32 %v1701, %v2728
        %v2985 = vsub.f32 %v1702, %v2729
        %v2986 = vsub.f32 %v1703, %v2730
        %v2987 = vsub.f32 %v1704, %v2731
        %v2988 = vsub.f32 %v1705, %v2732
        %v2989 = vsub.f32 %v1706, %v2733
        %v2990 = vsub.f32 %v1707, %v2734
        %v2991 = vsub.f32 %v1708, %v2735
        %v2992 = vsub.f32 %v1709, %v2736
        %v2993 = vsub.f32 %v1710, %v2737
        %v2994 = vsub.f32 %v1711, %v2738
        %v2995 = vsub.f32 %v1712, %v2739
        %v2996 = vsub.f32 %v1713, %v2740
        %v2997 = vsub.f32 %v1714, %v2741
        %v2998 = vsub.f32 %v1715, %v2742
        %v2999 = vsub.f32 %v1716, %v2743
        %v3000 = vsub.f32 %v1717, %v2744
        %v3001 = vsub.f32 %v1718, %v2745
        %v3002 = vsub.f32 %v1719, %v2746
        %v3003 = vsub.f32 %v1720, %v2747
        %v3004 = vsub.f32 %v1721, %v2748
        %v3005 = vsub.f32 %v1722, %v2749
        %v3006 = vsub.f32 %v1723, %v2750
        %v3007 = vsub.f32 %v1724, %v2751
        %v3008 = vsub.f32 %v1725, %v2752
        %v3009 = vsub.f32 %v1726, %v2753
        %v3010 = vsub.f32 %v1727, %v2754
        %v3011 = vsub.f32 %v1728, %v2755
        %v3012 = vsub.f32 %v1729, %v2756
        %v3013 = vsub.f32 %v1730, %v2757
        %v3014 = vsub.f32 %v1731, %v2758
        %v3015 = vsub.f32 %v1732, %v2759
        %v3016 = vsub.f32 %v1733, %v2760
        %v3017 = vsub.f32 %v1734, %v2761
        %v3018 = vsub.f32 %v1735, %v2762
        %v3019 = vsub.f32 %v1736, %v2763
        %v3020 = vsub.f32 %v1737, %v2764
        %v3021 = vsub.f32 %v1738, %v2765
        %v3022 = vsub.f32 %v1739, %v2766
        %v3023 = vsub.f32 %v1740, %v2767
        %v3024 = vsub.f32 %v1741, %v2768
        %v3025 = vsub.f32 %v1742, %v2769
        %v3026 = vsub.f32 %v1743, %v2770
        %v3027 = vsub.f32 %v1744, %v2771
        %v3028 = vsub.f32 %v1745, %v2772
        %v3029 = vsub.f32 %v1746, %v2773
        %v3030 = vsub.f32 %v1747, %v2774
        %v3031 = vsub.f32 %v1748, %v2775
        %v3032 = vsub.f32 %v1749, %v2776
        %v3033 = vsub.f32 %v1750, %v2777
        %v3034 = vsub.f32 %v1751, %v2778
        %v3035 = vsub.f32 %v1752, %v2779
        %v3036 = vsub.f32 %v1753, %v2780
        %v3037 = vsub.f32 %v1754, %v2781
        %v3038 = vsub.f32 %v1755, %v2782
        %v3039 = vsub.f32 %v1756, %v2783
        %v3040 = vsub.f32 %v1757, %v2784
        %v3041 = vsub.f32 %v1758, %v2785
        %v3042 = vsub.f32 %v1759, %v2786
        %v3043 = vsub.f32 %v1760, %v2787
        %v3044 = vsub.f32 %v1761, %v2788
        %v3045 = vsub.f32 %v1762, %v2789
        %v3046 = vsub.f32 %v1763, %v2790
        %v3047 = vsub.f32 %v1764, %v2791
        %v3048 = vsub.f32 %v1765, %v2792
        %v3049 = vsub.f32 %v1766, %v2793
        %v3050 = vmul.f32 %v2922, 1.442695
        %v3051 = vpow.pop %v3050
        %v3052 = vmul.f32 %v2923, 1.442695
        %v3053 = vpow.pop %v3052
        %v3054 = vmul.f32 %v2924, 1.442695
        %v3055 = vpow.pop %v3054
        %v3056 = vmul.f32 %v2925, 1.442695
        %v3057 = vpow.pop %v3056
        %v3058 = vmul.f32 %v2926, 1.442695
        %v3059 = vpow.pop %v3058
        %v3060 = vmul.f32 %v2927, 1.442695
        %v3061 = vpow.pop %v3060
        %v3062 = vmul.f32 %v2928, 1.442695
        %v3063 = vpow.pop %v3062
        %v3064 = vmul.f32 %v2929, 1.442695
        %v3065 = vpow.pop %v3064
        %v3066 = vmul.f32 %v2930, 1.442695
        %v3067 = vpow.pop %v3066
        %v3068 = vmul.f32 %v2931, 1.442695
        %v3069 = vpow.pop %v3068
        %v3070 = vmul.f32 %v2932, 1.442695
        %v3071 = vpow.pop %v3070
        %v3072 = vmul.f32 %v2933, 1.442695
        %v3073 = vpow.pop %v3072
        %v3074 = vmul.f32 %v2934, 1.442695
        %v3075 = vpow.pop %v3074
        %v3076 = vmul.f32 %v2935, 1.442695
        %v3077 = vpow.pop %v3076
        %v3078 = vmul.f32 %v2936, 1.442695
        %v3079 = vpow.pop %v3078
        %v3080 = vmul.f32 %v2937, 1.442695
        %v3081 = vpow.pop %v3080
        %v3082 = vmul.f32 %v2938, 1.442695
        %v3083 = vpow.pop %v3082
        %v3084 = vmul.f32 %v2939, 1.442695
        %v3085 = vpow.pop %v3084
        %v3086 = vmul.f32 %v2940, 1.442695
        %v3087 = vpow.pop %v3086
        %v3088 = vmul.f32 %v2941, 1.442695
        %v3089 = vpow.pop %v3088
        %v3090 = vmul.f32 %v2942, 1.442695
        %v3091 = vpow.pop %v3090
        %v3092 = vmul.f32 %v2943, 1.442695
        %v3093 = vpow.pop %v3092
        %v3094 = vmul.f32 %v2944, 1.442695
        %v3095 = vpow.pop %v3094
        %v3096 = vmul.f32 %v2945, 1.442695
        %v3097 = vpow.pop %v3096
        %v3098 = vmul.f32 %v2946, 1.442695
        %v3099 = vpow.pop %v3098
        %v3100 = vmul.f32 %v2947, 1.442695
        %v3101 = vpow.pop %v3100
        %v3102 = vmul.f32 %v2948, 1.442695
        %v3103 = vpow.pop %v3102
        %v3104 = vmul.f32 %v2949, 1.442695
        %v3105 = vpow.pop %v3104
        %v3106 = vmul.f32 %v2950, 1.442695
        %v3107 = vpow.pop %v3106
        %v3108 = vmul.f32 %v2951, 1.442695
        %v3109 = vpow.pop %v3108
        %v3110 = vmul.f32 %v2952, 1.442695
        %v3111 = vpow.pop %v3110
        %v3112 = vmul.f32 %v2953, 1.442695
        %v3113 = vpow.pop %v3112
        %v3114 = vmul.f32 %v2954, 1.442695
        %v3115 = vpow.pop %v3114
        %v3116 = vmul.f32 %v2955, 1.442695
        %v3117 = vpow.pop %v3116
        %v3118 = vmul.f32 %v2956, 1.442695
        %v3119 = vpow.pop %v3118
        %v3120 = vmul.f32 %v2957, 1.442695
        %v3121 = vpow.pop %v3120
        %v3122 = vmul.f32 %v2958, 1.442695
        %v3123 = vpow.pop %v3122
        %v3124 = vmul.f32 %v2959, 1.442695
        %v3125 = vpow.pop %v3124
        %v3126 = vmul.f32 %v2960, 1.442695
        %v3127 = vpow.pop %v3126
        %v3128 = vmul.f32 %v2961, 1.442695
        %v3129 = vpow.pop %v3128
        %v3130 = vmul.f32 %v2962, 1.442695
        %v3131 = vpow.pop %v3130
        %v3132 = vmul.f32 %v2963, 1.442695
        %v3133 = vpow.pop %v3132
        %v3134 = vmul.f32 %v2964, 1.442695
        %v3135 = vpow.pop %v3134
        %v3136 = vmul.f32 %v2965, 1.442695
        %v3137 = vpow.pop %v3136
        %v3138 = vmul.f32 %v2966, 1.442695
        %v3139 = vpow.pop %v3138
        %v3140 = vmul.f32 %v2967, 1.442695
        %v3141 = vpow.pop %v3140
        %v3142 = vmul.f32 %v2968, 1.442695
        %v3143 = vpow.pop %v3142
        %v3144 = vmul.f32 %v2969, 1.442695
        %v3145 = vpow.pop %v3144
        %v3146 = vmul.f32 %v2970, 1.442695
        %v3147 = vpow.pop %v3146
        %v3148 = vmul.f32 %v2971, 1.442695
        %v3149 = vpow.pop %v3148
        %v3150 = vmul.f32 %v2972, 1.442695
        %v3151 = vpow.pop %v3150
        %v3152 = vmul.f32 %v2973, 1.442695
        %v3153 = vpow.pop %v3152
        %v3154 = vmul.f32 %v2974, 1.442695
        %v3155 = vpow.pop %v3154
        %v3156 = vmul.f32 %v2975, 1.442695
        %v3157 = vpow.pop %v3156
        %v3158 = vmul.f32 %v2976, 1.442695
        %v3159 = vpow.pop %v3158
        %v3160 = vmul.f32 %v2977, 1.442695
        %v3161 = vpow.pop %v3160
        %v3162 = vmul.f32 %v2978, 1.442695
        %v3163 = vpow.pop %v3162
        %v3164 = vmul.f32 %v2979, 1.442695
        %v3165 = vpow.pop %v3164
        %v3166 = vmul.f32 %v2980, 1.442695
        %v3167 = vpow.pop %v3166
        %v3168 = vmul.f32 %v2981, 1.442695
        %v3169 = vpow.pop %v3168
        %v3170 = vmul.f32 %v2982, 1.442695
        %v3171 = vpow.pop %v3170
        %v3172 = vmul.f32 %v2983, 1.442695
        %v3173 = vpow.pop %v3172
        %v3174 = vmul.f32 %v2984, 1.442695
        %v3175 = vpow.pop %v3174
        %v3176 = vmul.f32 %v2985, 1.442695
        %v3177 = vpow.pop %v3176
        %v3178 = vmul.f32 %v2986, 1.442695
        %v3179 = vpow.pop %v3178
        %v3180 = vmul.f32 %v2987, 1.442695
        %v3181 = vpow.pop %v3180
        %v3182 = vmul.f32 %v2988, 1.442695
        %v3183 = vpow.pop %v3182
        %v3184 = vmul.f32 %v2989, 1.442695
        %v3185 = vpow.pop %v3184
        %v3186 = vmul.f32 %v2990, 1.442695
        %v3187 = vpow.pop %v3186
        %v3188 = vmul.f32 %v2991, 1.442695
        %v3189 = vpow.pop %v3188
        %v3190 = vmul.f32 %v2992, 1.442695
        %v3191 = vpow.pop %v3190
        %v3192 = vmul.f32 %v2993, 1.442695
        %v3193 = vpow.pop %v3192
        %v3194 = vmul.f32 %v2994, 1.442695
        %v3195 = vpow.pop %v3194
        %v3196 = vmul.f32 %v2995, 1.442695
        %v3197 = vpow.pop %v3196
        %v3198 = vmul.f32 %v2996, 1.442695
        %v3199 = vpow.pop %v3198
        %v3200 = vmul.f32 %v2997, 1.442695
        %v3201 = vpow.pop %v3200
        %v3202 = vmul.f32 %v2998, 1.442695
        %v3203 = vpow.pop %v3202
        %v3204 = vmul.f32 %v2999, 1.442695
        %v3205 = vpow.pop %v3204
        %v3206 = vmul.f32 %v3000, 1.442695
        %v3207 = vpow.pop %v3206
        %v3208 = vmul.f32 %v3001, 1.442695
        %v3209 = vpow.pop %v3208
        %v3210 = vmul.f32 %v3002, 1.442695
        %v3211 = vpow.pop %v3210
        %v3212 = vmul.f32 %v3003, 1.442695
        %v3213 = vpow.pop %v3212
        %v3214 = vmul.f32 %v3004, 1.442695
        %v3215 = vpow.pop %v3214
        %v3216 = vmul.f32 %v3005, 1.442695
        %v3217 = vpow.pop %v3216
        %v3218 = vmul.f32 %v3006, 1.442695
        %v3219 = vpow.pop %v3218
        %v3220 = vmul.f32 %v3007, 1.442695
        %v3221 = vpow.pop %v3220
        %v3222 = vmul.f32 %v3008, 1.442695
        %v3223 = vpow.pop %v3222
        %v3224 = vmul.f32 %v3009, 1.442695
        %v3225 = vpow.pop %v3224
        %v3226 = vmul.f32 %v3010, 1.442695
        %v3227 = vpow.pop %v3226
        %v3228 = vmul.f32 %v3011, 1.442695
        %v3229 = vpow.pop %v3228
        %v3230 = vmul.f32 %v3012, 1.442695
        %v3231 = vpow.pop %v3230
        %v3232 = vmul.f32 %v3013, 1.442695
        %v3233 = vpow.pop %v3232
        %v3234 = vmul.f32 %v3014, 1.442695
        %v3235 = vpow.pop %v3234
        %v3236 = vmul.f32 %v3015, 1.442695
        %v3237 = vpow.pop %v3236
        %v3238 = vmul.f32 %v3016, 1.442695
        %v3239 = vpow.pop %v3238
        %v3240 = vmul.f32 %v3017, 1.442695
        %v3241 = vpow.pop %v3240
        %v3242 = vmul.f32 %v3018, 1.442695
        %v3243 = vpow.pop %v3242
        %v3244 = vmul.f32 %v3019, 1.442695
        %v3245 = vpow.pop %v3244
        %v3246 = vmul.f32 %v3020, 1.442695
        %v3247 = vpow.pop %v3246
        %v3248 = vmul.f32 %v3021, 1.442695
        %v3249 = vpow.pop %v3248
        %v3250 = vmul.f32 %v3022, 1.442695
        %v3251 = vpow.pop %v3250
        %v3252 = vmul.f32 %v3023, 1.442695
        %v3253 = vpow.pop %v3252
        %v3254 = vmul.f32 %v3024, 1.442695
        %v3255 = vpow.pop %v3254
        %v3256 = vmul.f32 %v3025, 1.442695
        %v3257 = vpow.pop %v3256
        %v3258 = vmul.f32 %v3026, 1.442695
        %v3259 = vpow.pop %v3258
        %v3260 = vmul.f32 %v3027, 1.442695
        %v3261 = vpow.pop %v3260
        %v3262 = vmul.f32 %v3028, 1.442695
        %v3263 = vpow.pop %v3262
        %v3264 = vmul.f32 %v3029, 1.442695
        %v3265 = vpow.pop %v3264
        %v3266 = vmul.f32 %v3030, 1.442695
        %v3267 = vpow.pop %v3266
        %v3268 = vmul.f32 %v3031, 1.442695
        %v3269 = vpow.pop %v3268
        %v3270 = vmul.f32 %v3032, 1.442695
        %v3271 = vpow.pop %v3270
        %v3272 = vmul.f32 %v3033, 1.442695
        %v3273 = vpow.pop %v3272
        %v3274 = vmul.f32 %v3034, 1.442695
        %v3275 = vpow.pop %v3274
        %v3276 = vmul.f32 %v3035, 1.442695
        %v3277 = vpow.pop %v3276
        %v3278 = vmul.f32 %v3036, 1.442695
        %v3279 = vpow.pop %v3278
        %v3280 = vmul.f32 %v3037, 1.442695
        %v3281 = vpow.pop %v3280
        %v3282 = vmul.f32 %v3038, 1.442695
        %v3283 = vpow.pop %v3282
        %v3284 = vmul.f32 %v3039, 1.442695
        %v3285 = vpow.pop %v3284
        %v3286 = vmul.f32 %v3040, 1.442695
        %v3287 = vpow.pop %v3286
        %v3288 = vmul.f32 %v3041, 1.442695
        %v3289 = vpow.pop %v3288
        %v3290 = vmul.f32 %v3042, 1.442695
        %v3291 = vpow.pop %v3290
        %v3292 = vmul.f32 %v3043, 1.442695
        %v3293 = vpow.pop %v3292
        %v3294 = vmul.f32 %v3044, 1.442695
        %v3295 = vpow.pop %v3294
        %v3296 = vmul.f32 %v3045, 1.442695
        %v3297 = vpow.pop %v3296
        %v3298 = vmul.f32 %v3046, 1.442695
        %v3299 = vpow.pop %v3298
        %v3300 = vmul.f32 %v3047, 1.442695
        %v3301 = vpow.pop %v3300
        %v3302 = vmul.f32 %v3048, 1.442695
        %v3303 = vpow.pop %v3302
        %v3304 = vmul.f32 %v3049, 1.442695
        %v3305 = vpow.pop %v3304
        %v3314 = vperm.slane %v1359, 0
        %v3315 = vlaneseq
        %v3316 = vshrl.u32 %v3315, 7
        %3318 = vset.pattern.permute.xlu0 %v3316
        %3319 = vperm.xlu0 %3318, %v3314
        %v3320 = vpop.permute.xlu0 %3319
        %v3321 = vperm.slane %v1359, 1
        %v3322 = vlaneseq
        %v3323 = vshrl.u32 %v3322, 7
        %3325 = vset.pattern.permute.xlu0 %v3323
        %3326 = vperm.xlu0 %3325, %v3321
        %v3327 = vpop.permute.xlu0 %3326
        %v3328 = vperm.slane %v1359, 2
        %v3329 = vlaneseq
        %v3330 = vshrl.u32 %v3329, 7
        %3332 = vset.pattern.permute.xlu0 %v3330
        %3333 = vperm.xlu0 %3332, %v3328
        %v3334 = vpop.permute.xlu0 %3333
        %v3335 = vperm.slane %v1359, 3
        %v3336 = vlaneseq
        %v3337 = vshrl.u32 %v3336, 7
        %3339 = vset.pattern.permute.xlu0 %v3337
        %3340 = vperm.xlu0 %3339, %v3335
        %v3341 = vpop.permute.xlu0 %3340
        %v3342 = vperm.slane %v1360, 0
        %v3343 = vlaneseq
        %v3344 = vshrl.u32 %v3343, 7
        %3346 = vset.pattern.permute.xlu0 %v3344
        %3347 = vperm.xlu0 %3346, %v3342
        %v3348 = vpop.permute.xlu0 %3347
        %v3349 = vperm.slane %v1360, 1
        %v3350 = vlaneseq
        %v3351 = vshrl.u32 %v3350, 7
        %3353 = vset.pattern.permute.xlu0 %v3351
        %3354 = vperm.xlu0 %3353, %v3349
        %v3355 = vpop.permute.xlu0 %3354
        %v3356 = vperm.slane %v1360, 2
        %v3357 = vlaneseq
        %v3358 = vshrl.u32 %v3357, 7
        %3360 = vset.pattern.permute.xlu0 %v3358
        %3361 = vperm.xlu0 %3360, %v3356
        %v3362 = vpop.permute.xlu0 %3361
        %v3363 = vperm.slane %v1360, 3
        %v3364 = vlaneseq
        %v3365 = vshrl.u32 %v3364, 7
        %3367 = vset.pattern.permute.xlu0 %v3365
        %3368 = vperm.xlu0 %3367, %v3363
        %v3369 = vpop.permute.xlu0 %3368
        %v3370 = vperm.slane %v1361, 0
        %v3371 = vlaneseq
        %v3372 = vshrl.u32 %v3371, 7
        %3374 = vset.pattern.permute.xlu0 %v3372
        %3375 = vperm.xlu0 %3374, %v3370
        %v3376 = vpop.permute.xlu0 %3375
        %v3377 = vperm.slane %v1361, 1
        %v3378 = vlaneseq
        %v3379 = vshrl.u32 %v3378, 7
        %3381 = vset.pattern.permute.xlu0 %v3379
        %3382 = vperm.xlu0 %3381, %v3377
        %v3383 = vpop.permute.xlu0 %3382
        %v3384 = vperm.slane %v1361, 2
        %v3385 = vlaneseq
        %v3386 = vshrl.u32 %v3385, 7
        %3388 = vset.pattern.permute.xlu0 %v3386
        %3389 = vperm.xlu0 %3388, %v3384
        %v3390 = vpop.permute.xlu0 %3389
        %v3391 = vperm.slane %v1361, 3
        %v3392 = vlaneseq
        %v3393 = vshrl.u32 %v3392, 7
        %3395 = vset.pattern.permute.xlu0 %v3393
        %3396 = vperm.xlu0 %3395, %v3391
        %v3397 = vpop.permute.xlu0 %3396
        %v3398 = vperm.slane %v1362, 0
        %v3399 = vlaneseq
        %v3400 = vshrl.u32 %v3399, 7
        %3402 = vset.pattern.permute.xlu0 %v3400
        %3403 = vperm.xlu0 %3402, %v3398
        %v3404 = vpop.permute.xlu0 %3403
        %v3405 = vperm.slane %v1362, 1
        %v3406 = vlaneseq
        %v3407 = vshrl.u32 %v3406, 7
        %3409 = vset.pattern.permute.xlu0 %v3407
        %3410 = vperm.xlu0 %3409, %v3405
        %v3411 = vpop.permute.xlu0 %3410
        %v3412 = vperm.slane %v1362, 2
        %v3413 = vlaneseq
        %v3414 = vshrl.u32 %v3413, 7
        %3416 = vset.pattern.permute.xlu0 %v3414
        %3417 = vperm.xlu0 %3416, %v3412
        %v3418 = vpop.permute.xlu0 %3417
        %v3419 = vperm.slane %v1362, 3
        %v3420 = vlaneseq
        %v3421 = vshrl.u32 %v3420, 7
        %3423 = vset.pattern.permute.xlu0 %v3421
        %3424 = vperm.xlu0 %3423, %v3419
        %v3425 = vpop.permute.xlu0 %3424
        %v3426 = vperm.slane %v1363, 0
        %v3427 = vlaneseq
        %v3428 = vshrl.u32 %v3427, 7
        %3430 = vset.pattern.permute.xlu0 %v3428
        %3431 = vperm.xlu0 %3430, %v3426
        %v3432 = vpop.permute.xlu0 %3431
        %v3433 = vperm.slane %v1363, 1
        %v3434 = vlaneseq
        %v3435 = vshrl.u32 %v3434, 7
        %3437 = vset.pattern.permute.xlu0 %v3435
        %3438 = vperm.xlu0 %3437, %v3433
        %v3439 = vpop.permute.xlu0 %3438
        %v3440 = vperm.slane %v1363, 2
        %v3441 = vlaneseq
        %v3442 = vshrl.u32 %v3441, 7
        %3444 = vset.pattern.permute.xlu0 %v3442
        %3445 = vperm.xlu0 %3444, %v3440
        %v3446 = vpop.permute.xlu0 %3445
        %v3447 = vperm.slane %v1363, 3
        %v3448 = vlaneseq
        %v3449 = vshrl.u32 %v3448, 7
        %3451 = vset.pattern.permute.xlu0 %v3449
        %3452 = vperm.xlu0 %3451, %v3447
        %v3453 = vpop.permute.xlu0 %3452
        %v3454 = vperm.slane %v1364, 0
        %v3455 = vlaneseq
        %v3456 = vshrl.u32 %v3455, 7
        %3458 = vset.pattern.permute.xlu0 %v3456
        %3459 = vperm.xlu0 %3458, %v3454
        %v3460 = vpop.permute.xlu0 %3459
        %v3461 = vperm.slane %v1364, 1
        %v3462 = vlaneseq
        %v3463 = vshrl.u32 %v3462, 7
        %3465 = vset.pattern.permute.xlu0 %v3463
        %3466 = vperm.xlu0 %3465, %v3461
        %v3467 = vpop.permute.xlu0 %3466
        %v3468 = vperm.slane %v1364, 2
        %v3469 = vlaneseq
        %v3470 = vshrl.u32 %v3469, 7
        %3472 = vset.pattern.permute.xlu0 %v3470
        %3473 = vperm.xlu0 %3472, %v3468
        %v3474 = vpop.permute.xlu0 %3473
        %v3475 = vperm.slane %v1364, 3
        %v3476 = vlaneseq
        %v3477 = vshrl.u32 %v3476, 7
        %3479 = vset.pattern.permute.xlu0 %v3477
        %3480 = vperm.xlu0 %3479, %v3475
        %v3481 = vpop.permute.xlu0 %3480
        %v3482 = vperm.slane %v1365, 0
        %v3483 = vlaneseq
        %v3484 = vshrl.u32 %v3483, 7
        %3486 = vset.pattern.permute.xlu0 %v3484
        %3487 = vperm.xlu0 %3486, %v3482
        %v3488 = vpop.permute.xlu0 %3487
        %v3489 = vperm.slane %v1365, 1
        %v3490 = vlaneseq
        %v3491 = vshrl.u32 %v3490, 7
        %3493 = vset.pattern.permute.xlu0 %v3491
        %3494 = vperm.xlu0 %3493, %v3489
        %v3495 = vpop.permute.xlu0 %3494
        %v3496 = vperm.slane %v1365, 2
        %v3497 = vlaneseq
        %v3498 = vshrl.u32 %v3497, 7
        %3500 = vset.pattern.permute.xlu0 %v3498
        %3501 = vperm.xlu0 %3500, %v3496
        %v3502 = vpop.permute.xlu0 %3501
        %v3503 = vperm.slane %v1365, 3
        %v3504 = vlaneseq
        %v3505 = vshrl.u32 %v3504, 7
        %3507 = vset.pattern.permute.xlu0 %v3505
        %3508 = vperm.xlu0 %3507, %v3503
        %v3509 = vpop.permute.xlu0 %3508
        %v3510 = vperm.slane %v1366, 0
        %v3511 = vlaneseq
        %v3512 = vshrl.u32 %v3511, 7
        %3514 = vset.pattern.permute.xlu0 %v3512
        %3515 = vperm.xlu0 %3514, %v3510
        %v3516 = vpop.permute.xlu0 %3515
        %v3517 = vperm.slane %v1366, 1
        %v3518 = vlaneseq
        %v3519 = vshrl.u32 %v3518, 7
        %3521 = vset.pattern.permute.xlu0 %v3519
        %3522 = vperm.xlu0 %3521, %v3517
        %v3523 = vpop.permute.xlu0 %3522
        %v3524 = vperm.slane %v1366, 2
        %v3525 = vlaneseq
        %v3526 = vshrl.u32 %v3525, 7
        %3528 = vset.pattern.permute.xlu0 %v3526
        %3529 = vperm.xlu0 %3528, %v3524
        %v3530 = vpop.permute.xlu0 %3529
        %v3531 = vperm.slane %v1366, 3
        %v3532 = vlaneseq
        %v3533 = vshrl.u32 %v3532, 7
        %3535 = vset.pattern.permute.xlu0 %v3533
        %3536 = vperm.xlu0 %3535, %v3531
        %v3537 = vpop.permute.xlu0 %3536
        %v3570 = vmul.f32 %v3051, %v3320
        %v3571 = vmul.f32 %v3053, %v3327
        %v3572 = vmul.f32 %v3055, %v3334
        %v3573 = vmul.f32 %v3057, %v3341
        %v3574 = vmul.f32 %v3059, %v3320
        %v3575 = vmul.f32 %v3061, %v3327
        %v3576 = vmul.f32 %v3063, %v3334
        %v3577 = vmul.f32 %v3065, %v3341
        %v3578 = vmul.f32 %v3067, %v3320
        %v3579 = vmul.f32 %v3069, %v3327
        %v3580 = vmul.f32 %v3071, %v3334
        %v3581 = vmul.f32 %v3073, %v3341
        %v3582 = vmul.f32 %v3075, %v3320
        %v3583 = vmul.f32 %v3077, %v3327
        %v3584 = vmul.f32 %v3079, %v3334
        %v3585 = vmul.f32 %v3081, %v3341
        %v3586 = vmul.f32 %v3083, %v3348
        %v3587 = vmul.f32 %v3085, %v3355
        %v3588 = vmul.f32 %v3087, %v3362
        %v3589 = vmul.f32 %v3089, %v3369
        %v3590 = vmul.f32 %v3091, %v3348
        %v3591 = vmul.f32 %v3093, %v3355
        %v3592 = vmul.f32 %v3095, %v3362
        %v3593 = vmul.f32 %v3097, %v3369
        %v3594 = vmul.f32 %v3099, %v3348
        %v3595 = vmul.f32 %v3101, %v3355
        %v3596 = vmul.f32 %v3103, %v3362
        %v3597 = vmul.f32 %v3105, %v3369
        %v3598 = vmul.f32 %v3107, %v3348
        %v3599 = vmul.f32 %v3109, %v3355
        %v3600 = vmul.f32 %v3111, %v3362
        %v3601 = vmul.f32 %v3113, %v3369
        %v3602 = vmul.f32 %v3115, %v3376
        %v3603 = vmul.f32 %v3117, %v3383
        %v3604 = vmul.f32 %v3119, %v3390
        %v3605 = vmul.f32 %v3121, %v3397
        %v3606 = vmul.f32 %v3123, %v3376
        %v3607 = vmul.f32 %v3125, %v3383
        %v3608 = vmul.f32 %v3127, %v3390
        %v3609 = vmul.f32 %v3129, %v3397
        %v3610 = vmul.f32 %v3131, %v3376
        %v3611 = vmul.f32 %v3133, %v3383
        %v3612 = vmul.f32 %v3135, %v3390
        %v3613 = vmul.f32 %v3137, %v3397
        %v3614 = vmul.f32 %v3139, %v3376
        %v3615 = vmul.f32 %v3141, %v3383
        %v3616 = vmul.f32 %v3143, %v3390
        %v3617 = vmul.f32 %v3145, %v3397
        %v3618 = vmul.f32 %v3147, %v3404
        %v3619 = vmul.f32 %v3149, %v3411
        %v3620 = vmul.f32 %v3151, %v3418
        %v3621 = vmul.f32 %v3153, %v3425
        %v3622 = vmul.f32 %v3155, %v3404
        %v3623 = vmul.f32 %v3157, %v3411
        %v3624 = vmul.f32 %v3159, %v3418
        %v3625 = vmul.f32 %v3161, %v3425
        %v3626 = vmul.f32 %v3163, %v3404
        %v3627 = vmul.f32 %v3165, %v3411
        %v3628 = vmul.f32 %v3167, %v3418
        %v3629 = vmul.f32 %v3169, %v3425
        %v3630 = vmul.f32 %v3171, %v3404
        %v3631 = vmul.f32 %v3173, %v3411
        %v3632 = vmul.f32 %v3175, %v3418
        %v3633 = vmul.f32 %v3177, %v3425
        %v3634 = vmul.f32 %v3179, %v3432
        %v3635 = vmul.f32 %v3181, %v3439
        %v3636 = vmul.f32 %v3183, %v3446
        %v3637 = vmul.f32 %v3185, %v3453
        %v3638 = vmul.f32 %v3187, %v3432
        %v3639 = vmul.f32 %v3189, %v3439
        %v3640 = vmul.f32 %v3191, %v3446
        %v3641 = vmul.f32 %v3193, %v3453
        %v3642 = vmul.f32 %v3195, %v3432
        %v3643 = vmul.f32 %v3197, %v3439
        %v3644 = vmul.f32 %v3199, %v3446
        %v3645 = vmul.f32 %v3201, %v3453
        %v3646 = vmul.f32 %v3203, %v3432
        %v3647 = vmul.f32 %v3205, %v3439
        %v3648 = vmul.f32 %v3207, %v3446
        %v3649 = vmul.f32 %v3209, %v3453
        %v3650 = vmul.f32 %v3211, %v3460
        %v3651 = vmul.f32 %v3213, %v3467
        %v3652 = vmul.f32 %v3215, %v3474
        %v3653 = vmul.f32 %v3217, %v3481
        %v3654 = vmul.f32 %v3219, %v3460
        %v3655 = vmul.f32 %v3221, %v3467
        %v3656 = vmul.f32 %v3223, %v3474
        %v3657 = vmul.f32 %v3225, %v3481
        %v3658 = vmul.f32 %v3227, %v3460
        %v3659 = vmul.f32 %v3229, %v3467
        %v3660 = vmul.f32 %v3231, %v3474
        %v3661 = vmul.f32 %v3233, %v3481
        %v3662 = vmul.f32 %v3235, %v3460
        %v3663 = vmul.f32 %v3237, %v3467
        %v3664 = vmul.f32 %v3239, %v3474
        %v3665 = vmul.f32 %v3241, %v3481
        %v3666 = vmul.f32 %v3243, %v3488
        %v3667 = vmul.f32 %v3245, %v3495
        %v3668 = vmul.f32 %v3247, %v3502
        %v3669 = vmul.f32 %v3249, %v3509
        %v3670 = vmul.f32 %v3251, %v3488
        %v3671 = vmul.f32 %v3253, %v3495
        %v3672 = vmul.f32 %v3255, %v3502
        %v3673 = vmul.f32 %v3257, %v3509
        %v3674 = vmul.f32 %v3259, %v3488
        %v3675 = vmul.f32 %v3261, %v3495
        %v3676 = vmul.f32 %v3263, %v3502
        %v3677 = vmul.f32 %v3265, %v3509
        %v3678 = vmul.f32 %v3267, %v3488
        %v3679 = vmul.f32 %v3269, %v3495
        %v3680 = vmul.f32 %v3271, %v3502
        %v3681 = vmul.f32 %v3273, %v3509
        %v3682 = vmul.f32 %v3275, %v3516
        %v3683 = vmul.f32 %v3277, %v3523
        %v3684 = vmul.f32 %v3279, %v3530
        %v3685 = vmul.f32 %v3281, %v3537
        %v3686 = vmul.f32 %v3283, %v3516
        %v3687 = vmul.f32 %v3285, %v3523
        %v3688 = vmul.f32 %v3287, %v3530
        %v3689 = vmul.f32 %v3289, %v3537
        %v3690 = vmul.f32 %v3291, %v3516
        %v3691 = vmul.f32 %v3293, %v3523
        %v3692 = vmul.f32 %v3295, %v3530
        %v3693 = vmul.f32 %v3297, %v3537
        %v3694 = vmul.f32 %v3299, %v3516
        %v3695 = vmul.f32 %v3301, %v3523
        %v3696 = vmul.f32 %v3303, %v3530
        %v3697 = vmul.f32 %v3305, %v3537
        %3826 = vset.pattern.permute.xlu0 0
        %3827 = vperm.xlu0 %3826, %v3570
        %v3828 = vpop.permute.xlu0 %3827
        %3829 = vset.pattern.permute.xlu0 0
        %3830 = vperm.xlu0 %3829, %v3571
        %v3831 = vpop.permute.xlu0 %3830
        %3832 = vset.pattern.permute.xlu0 0
        %3833 = vperm.xlu0 %3832, %v3572
        %v3834 = vpop.permute.xlu0 %3833
        %3835 = vset.pattern.permute.xlu0 0
        %3836 = vperm.xlu0 %3835, %v3573
        %v3837 = vpop.permute.xlu0 %3836
        %3838 = vset.pattern.permute.xlu0 0
        %3839 = vperm.xlu0 %3838, %v3574
        %v3840 = vpop.permute.xlu0 %3839
        %3841 = vset.pattern.permute.xlu0 0
        %3842 = vperm.xlu0 %3841, %v3575
        %v3843 = vpop.permute.xlu0 %3842
        %3844 = vset.pattern.permute.xlu0 0
        %3845 = vperm.xlu0 %3844, %v3576
        %v3846 = vpop.permute.xlu0 %3845
        %3847 = vset.pattern.permute.xlu0 0
        %3848 = vperm.xlu0 %3847, %v3577
        %v3849 = vpop.permute.xlu0 %3848
        %3850 = vset.pattern.permute.xlu0 0
        %3851 = vperm.xlu0 %3850, %v3578
        %v3852 = vpop.permute.xlu0 %3851
        %3853 = vset.pattern.permute.xlu0 0
        %3854 = vperm.xlu0 %3853, %v3579
        %v3855 = vpop.permute.xlu0 %3854
        %3856 = vset.pattern.permute.xlu0 0
        %3857 = vperm.xlu0 %3856, %v3580
        %v3858 = vpop.permute.xlu0 %3857
        %3859 = vset.pattern.permute.xlu0 0
        %3860 = vperm.xlu0 %3859, %v3581
        %v3861 = vpop.permute.xlu0 %3860
        %3862 = vset.pattern.permute.xlu0 0
        %3863 = vperm.xlu0 %3862, %v3582
        %v3864 = vpop.permute.xlu0 %3863
        %3865 = vset.pattern.permute.xlu0 0
        %3866 = vperm.xlu0 %3865, %v3583
        %v3867 = vpop.permute.xlu0 %3866
        %3868 = vset.pattern.permute.xlu0 0
        %3869 = vperm.xlu0 %3868, %v3584
        %v3870 = vpop.permute.xlu0 %3869
        %3871 = vset.pattern.permute.xlu0 0
        %3872 = vperm.xlu0 %3871, %v3585
        %v3873 = vpop.permute.xlu0 %3872
        %3874 = vset.pattern.permute.xlu0 0
        %3875 = vperm.xlu0 %3874, %v3586
        %v3876 = vpop.permute.xlu0 %3875
        %3877 = vset.pattern.permute.xlu0 0
        %3878 = vperm.xlu0 %3877, %v3587
        %v3879 = vpop.permute.xlu0 %3878
        %3880 = vset.pattern.permute.xlu0 0
        %3881 = vperm.xlu0 %3880, %v3588
        %v3882 = vpop.permute.xlu0 %3881
        %3883 = vset.pattern.permute.xlu0 0
        %3884 = vperm.xlu0 %3883, %v3589
        %v3885 = vpop.permute.xlu0 %3884
        %3886 = vset.pattern.permute.xlu0 0
        %3887 = vperm.xlu0 %3886, %v3590
        %v3888 = vpop.permute.xlu0 %3887
        %3889 = vset.pattern.permute.xlu0 0
        %3890 = vperm.xlu0 %3889, %v3591
        %v3891 = vpop.permute.xlu0 %3890
        %3892 = vset.pattern.permute.xlu0 0
        %3893 = vperm.xlu0 %3892, %v3592
        %v3894 = vpop.permute.xlu0 %3893
        %3895 = vset.pattern.permute.xlu0 0
        %3896 = vperm.xlu0 %3895, %v3593
        %v3897 = vpop.permute.xlu0 %3896
        %3898 = vset.pattern.permute.xlu0 0
        %3899 = vperm.xlu0 %3898, %v3594
        %v3900 = vpop.permute.xlu0 %3899
        %3901 = vset.pattern.permute.xlu0 0
        %3902 = vperm.xlu0 %3901, %v3595
        %v3903 = vpop.permute.xlu0 %3902
        %3904 = vset.pattern.permute.xlu0 0
        %3905 = vperm.xlu0 %3904, %v3596
        %v3906 = vpop.permute.xlu0 %3905
        %3907 = vset.pattern.permute.xlu0 0
        %3908 = vperm.xlu0 %3907, %v3597
        %v3909 = vpop.permute.xlu0 %3908
        %3910 = vset.pattern.permute.xlu0 0
        %3911 = vperm.xlu0 %3910, %v3598
        %v3912 = vpop.permute.xlu0 %3911
        %3913 = vset.pattern.permute.xlu0 0
        %3914 = vperm.xlu0 %3913, %v3599
        %v3915 = vpop.permute.xlu0 %3914
        %3916 = vset.pattern.permute.xlu0 0
        %3917 = vperm.xlu0 %3916, %v3600
        %v3918 = vpop.permute.xlu0 %3917
        %3919 = vset.pattern.permute.xlu0 0
        %3920 = vperm.xlu0 %3919, %v3601
        %v3921 = vpop.permute.xlu0 %3920
        %3922 = vset.pattern.permute.xlu0 0
        %3923 = vperm.xlu0 %3922, %v3602
        %v3924 = vpop.permute.xlu0 %3923
        %3925 = vset.pattern.permute.xlu0 0
        %3926 = vperm.xlu0 %3925, %v3603
        %v3927 = vpop.permute.xlu0 %3926
        %3928 = vset.pattern.permute.xlu0 0
        %3929 = vperm.xlu0 %3928, %v3604
        %v3930 = vpop.permute.xlu0 %3929
        %3931 = vset.pattern.permute.xlu0 0
        %3932 = vperm.xlu0 %3931, %v3605
        %v3933 = vpop.permute.xlu0 %3932
        %3934 = vset.pattern.permute.xlu0 0
        %3935 = vperm.xlu0 %3934, %v3606
        %v3936 = vpop.permute.xlu0 %3935
        %3937 = vset.pattern.permute.xlu0 0
        %3938 = vperm.xlu0 %3937, %v3607
        %v3939 = vpop.permute.xlu0 %3938
        %3940 = vset.pattern.permute.xlu0 0
        %3941 = vperm.xlu0 %3940, %v3608
        %v3942 = vpop.permute.xlu0 %3941
        %3943 = vset.pattern.permute.xlu0 0
        %3944 = vperm.xlu0 %3943, %v3609
        %v3945 = vpop.permute.xlu0 %3944
        %3946 = vset.pattern.permute.xlu0 0
        %3947 = vperm.xlu0 %3946, %v3610
        %v3948 = vpop.permute.xlu0 %3947
        %3949 = vset.pattern.permute.xlu0 0
        %3950 = vperm.xlu0 %3949, %v3611
        %v3951 = vpop.permute.xlu0 %3950
        %3952 = vset.pattern.permute.xlu0 0
        %3953 = vperm.xlu0 %3952, %v3612
        %v3954 = vpop.permute.xlu0 %3953
        %3955 = vset.pattern.permute.xlu0 0
        %3956 = vperm.xlu0 %3955, %v3613
        %v3957 = vpop.permute.xlu0 %3956
        %3958 = vset.pattern.permute.xlu0 0
        %3959 = vperm.xlu0 %3958, %v3614
        %v3960 = vpop.permute.xlu0 %3959
        %3961 = vset.pattern.permute.xlu0 0
        %3962 = vperm.xlu0 %3961, %v3615
        %v3963 = vpop.permute.xlu0 %3962
        %3964 = vset.pattern.permute.xlu0 0
        %3965 = vperm.xlu0 %3964, %v3616
        %v3966 = vpop.permute.xlu0 %3965
        %3967 = vset.pattern.permute.xlu0 0
        %3968 = vperm.xlu0 %3967, %v3617
        %v3969 = vpop.permute.xlu0 %3968
        %3970 = vset.pattern.permute.xlu0 0
        %3971 = vperm.xlu0 %3970, %v3618
        %v3972 = vpop.permute.xlu0 %3971
        %3973 = vset.pattern.permute.xlu0 0
        %3974 = vperm.xlu0 %3973, %v3619
        %v3975 = vpop.permute.xlu0 %3974
        %3976 = vset.pattern.permute.xlu0 0
        %3977 = vperm.xlu0 %3976, %v3620
        %v3978 = vpop.permute.xlu0 %3977
        %3979 = vset.pattern.permute.xlu0 0
        %3980 = vperm.xlu0 %3979, %v3621
        %v3981 = vpop.permute.xlu0 %3980
        %3982 = vset.pattern.permute.xlu0 0
        %3983 = vperm.xlu0 %3982, %v3622
        %v3984 = vpop.permute.xlu0 %3983
        %3985 = vset.pattern.permute.xlu0 0
        %3986 = vperm.xlu0 %3985, %v3623
        %v3987 = vpop.permute.xlu0 %3986
        %3988 = vset.pattern.permute.xlu0 0
        %3989 = vperm.xlu0 %3988, %v3624
        %v3990 = vpop.permute.xlu0 %3989
        %3991 = vset.pattern.permute.xlu0 0
        %3992 = vperm.xlu0 %3991, %v3625
        %v3993 = vpop.permute.xlu0 %3992
        %3994 = vset.pattern.permute.xlu0 0
        %3995 = vperm.xlu0 %3994, %v3626
        %v3996 = vpop.permute.xlu0 %3995
        %3997 = vset.pattern.permute.xlu0 0
        %3998 = vperm.xlu0 %3997, %v3627
        %v3999 = vpop.permute.xlu0 %3998
        %4000 = vset.pattern.permute.xlu0 0
        %4001 = vperm.xlu0 %4000, %v3628
        %v4002 = vpop.permute.xlu0 %4001
        %4003 = vset.pattern.permute.xlu0 0
        %4004 = vperm.xlu0 %4003, %v3629
        %v4005 = vpop.permute.xlu0 %4004
        %4006 = vset.pattern.permute.xlu0 0
        %4007 = vperm.xlu0 %4006, %v3630
        %v4008 = vpop.permute.xlu0 %4007
        %4009 = vset.pattern.permute.xlu0 0
        %4010 = vperm.xlu0 %4009, %v3631
        %v4011 = vpop.permute.xlu0 %4010
        %4012 = vset.pattern.permute.xlu0 0
        %4013 = vperm.xlu0 %4012, %v3632
        %v4014 = vpop.permute.xlu0 %4013
        %4015 = vset.pattern.permute.xlu0 0
        %4016 = vperm.xlu0 %4015, %v3633
        %v4017 = vpop.permute.xlu0 %4016
        %4018 = vset.pattern.permute.xlu0 0
        %4019 = vperm.xlu0 %4018, %v3634
        %v4020 = vpop.permute.xlu0 %4019
        %4021 = vset.pattern.permute.xlu0 0
        %4022 = vperm.xlu0 %4021, %v3635
        %v4023 = vpop.permute.xlu0 %4022
        %4024 = vset.pattern.permute.xlu0 0
        %4025 = vperm.xlu0 %4024, %v3636
        %v4026 = vpop.permute.xlu0 %4025
        %4027 = vset.pattern.permute.xlu0 0
        %4028 = vperm.xlu0 %4027, %v3637
        %v4029 = vpop.permute.xlu0 %4028
        %4030 = vset.pattern.permute.xlu0 0
        %4031 = vperm.xlu0 %4030, %v3638
        %v4032 = vpop.permute.xlu0 %4031
        %4033 = vset.pattern.permute.xlu0 0
        %4034 = vperm.xlu0 %4033, %v3639
        %v4035 = vpop.permute.xlu0 %4034
        %4036 = vset.pattern.permute.xlu0 0
        %4037 = vperm.xlu0 %4036, %v3640
        %v4038 = vpop.permute.xlu0 %4037
        %4039 = vset.pattern.permute.xlu0 0
        %4040 = vperm.xlu0 %4039, %v3641
        %v4041 = vpop.permute.xlu0 %4040
        %4042 = vset.pattern.permute.xlu0 0
        %4043 = vperm.xlu0 %4042, %v3642
        %v4044 = vpop.permute.xlu0 %4043
        %4045 = vset.pattern.permute.xlu0 0
        %4046 = vperm.xlu0 %4045, %v3643
        %v4047 = vpop.permute.xlu0 %4046
        %4048 = vset.pattern.permute.xlu0 0
        %4049 = vperm.xlu0 %4048, %v3644
        %v4050 = vpop.permute.xlu0 %4049
        %4051 = vset.pattern.permute.xlu0 0
        %4052 = vperm.xlu0 %4051, %v3645
        %v4053 = vpop.permute.xlu0 %4052
        %4054 = vset.pattern.permute.xlu0 0
        %4055 = vperm.xlu0 %4054, %v3646
        %v4056 = vpop.permute.xlu0 %4055
        %4057 = vset.pattern.permute.xlu0 0
        %4058 = vperm.xlu0 %4057, %v3647
        %v4059 = vpop.permute.xlu0 %4058
        %4060 = vset.pattern.permute.xlu0 0
        %4061 = vperm.xlu0 %4060, %v3648
        %v4062 = vpop.permute.xlu0 %4061
        %4063 = vset.pattern.permute.xlu0 0
        %4064 = vperm.xlu0 %4063, %v3649
        %v4065 = vpop.permute.xlu0 %4064
        %4066 = vset.pattern.permute.xlu0 0
        %4067 = vperm.xlu0 %4066, %v3650
        %v4068 = vpop.permute.xlu0 %4067
        %4069 = vset.pattern.permute.xlu0 0
        %4070 = vperm.xlu0 %4069, %v3651
        %v4071 = vpop.permute.xlu0 %4070
        %4072 = vset.pattern.permute.xlu0 0
        %4073 = vperm.xlu0 %4072, %v3652
        %v4074 = vpop.permute.xlu0 %4073
        %4075 = vset.pattern.permute.xlu0 0
        %4076 = vperm.xlu0 %4075, %v3653
        %v4077 = vpop.permute.xlu0 %4076
        %4078 = vset.pattern.permute.xlu0 0
        %4079 = vperm.xlu0 %4078, %v3654
        %v4080 = vpop.permute.xlu0 %4079
        %4081 = vset.pattern.permute.xlu0 0
        %4082 = vperm.xlu0 %4081, %v3655
        %v4083 = vpop.permute.xlu0 %4082
        %4084 = vset.pattern.permute.xlu0 0
        %4085 = vperm.xlu0 %4084, %v3656
        %v4086 = vpop.permute.xlu0 %4085
        %4087 = vset.pattern.permute.xlu0 0
        %4088 = vperm.xlu0 %4087, %v3657
        %v4089 = vpop.permute.xlu0 %4088
        %4090 = vset.pattern.permute.xlu0 0
        %4091 = vperm.xlu0 %4090, %v3658
        %v4092 = vpop.permute.xlu0 %4091
        %4093 = vset.pattern.permute.xlu0 0
        %4094 = vperm.xlu0 %4093, %v3659
        %v4095 = vpop.permute.xlu0 %4094
        %4096 = vset.pattern.permute.xlu0 0
        %4097 = vperm.xlu0 %4096, %v3660
        %v4098 = vpop.permute.xlu0 %4097
        %4099 = vset.pattern.permute.xlu0 0
        %4100 = vperm.xlu0 %4099, %v3661
        %v4101 = vpop.permute.xlu0 %4100
        %4102 = vset.pattern.permute.xlu0 0
        %4103 = vperm.xlu0 %4102, %v3662
        %v4104 = vpop.permute.xlu0 %4103
        %4105 = vset.pattern.permute.xlu0 0
        %4106 = vperm.xlu0 %4105, %v3663
        %v4107 = vpop.permute.xlu0 %4106
        %4108 = vset.pattern.permute.xlu0 0
        %4109 = vperm.xlu0 %4108, %v3664
        %v4110 = vpop.permute.xlu0 %4109
        %4111 = vset.pattern.permute.xlu0 0
        %4112 = vperm.xlu0 %4111, %v3665
        %v4113 = vpop.permute.xlu0 %4112
        %4114 = vset.pattern.permute.xlu0 0
        %4115 = vperm.xlu0 %4114, %v3666
        %v4116 = vpop.permute.xlu0 %4115
        %4117 = vset.pattern.permute.xlu0 0
        %4118 = vperm.xlu0 %4117, %v3667
        %v4119 = vpop.permute.xlu0 %4118
        %4120 = vset.pattern.permute.xlu0 0
        %4121 = vperm.xlu0 %4120, %v3668
        %v4122 = vpop.permute.xlu0 %4121
        %4123 = vset.pattern.permute.xlu0 0
        %4124 = vperm.xlu0 %4123, %v3669
        %v4125 = vpop.permute.xlu0 %4124
        %4126 = vset.pattern.permute.xlu0 0
        %4127 = vperm.xlu0 %4126, %v3670
        %v4128 = vpop.permute.xlu0 %4127
        %4129 = vset.pattern.permute.xlu0 0
        %4130 = vperm.xlu0 %4129, %v3671
        %v4131 = vpop.permute.xlu0 %4130
        %4132 = vset.pattern.permute.xlu0 0
        %4133 = vperm.xlu0 %4132, %v3672
        %v4134 = vpop.permute.xlu0 %4133
        %4135 = vset.pattern.permute.xlu0 0
        %4136 = vperm.xlu0 %4135, %v3673
        %v4137 = vpop.permute.xlu0 %4136
        %4138 = vset.pattern.permute.xlu0 0
        %4139 = vperm.xlu0 %4138, %v3674
        %v4140 = vpop.permute.xlu0 %4139
        %4141 = vset.pattern.permute.xlu0 0
        %4142 = vperm.xlu0 %4141, %v3675
        %v4143 = vpop.permute.xlu0 %4142
        %4144 = vset.pattern.permute.xlu0 0
        %4145 = vperm.xlu0 %4144, %v3676
        %v4146 = vpop.permute.xlu0 %4145
        %4147 = vset.pattern.permute.xlu0 0
        %4148 = vperm.xlu0 %4147, %v3677
        %v4149 = vpop.permute.xlu0 %4148
        %4150 = vset.pattern.permute.xlu0 0
        %4151 = vperm.xlu0 %4150, %v3678
        %v4152 = vpop.permute.xlu0 %4151
        %4153 = vset.pattern.permute.xlu0 0
        %4154 = vperm.xlu0 %4153, %v3679
        %v4155 = vpop.permute.xlu0 %4154
        %4156 = vset.pattern.permute.xlu0 0
        %4157 = vperm.xlu0 %4156, %v3680
        %v4158 = vpop.permute.xlu0 %4157
        %4159 = vset.pattern.permute.xlu0 0
        %4160 = vperm.xlu0 %4159, %v3681
        %v4161 = vpop.permute.xlu0 %4160
        %4162 = vset.pattern.permute.xlu0 0
        %4163 = vperm.xlu0 %4162, %v3682
        %v4164 = vpop.permute.xlu0 %4163
        %4165 = vset.pattern.permute.xlu0 0
        %4166 = vperm.xlu0 %4165, %v3683
        %v4167 = vpop.permute.xlu0 %4166
        %4168 = vset.pattern.permute.xlu0 0
        %4169 = vperm.xlu0 %4168, %v3684
        %v4170 = vpop.permute.xlu0 %4169
        %4171 = vset.pattern.permute.xlu0 0
        %4172 = vperm.xlu0 %4171, %v3685
        %v4173 = vpop.permute.xlu0 %4172
        %4174 = vset.pattern.permute.xlu0 0
        %4175 = vperm.xlu0 %4174, %v3686
        %v4176 = vpop.permute.xlu0 %4175
        %4177 = vset.pattern.permute.xlu0 0
        %4178 = vperm.xlu0 %4177, %v3687
        %v4179 = vpop.permute.xlu0 %4178
        %4180 = vset.pattern.permute.xlu0 0
        %4181 = vperm.xlu0 %4180, %v3688
        %v4182 = vpop.permute.xlu0 %4181
        %4183 = vset.pattern.permute.xlu0 0
        %4184 = vperm.xlu0 %4183, %v3689
        %v4185 = vpop.permute.xlu0 %4184
        %4186 = vset.pattern.permute.xlu0 0
        %4187 = vperm.xlu0 %4186, %v3690
        %v4188 = vpop.permute.xlu0 %4187
        %4189 = vset.pattern.permute.xlu0 0
        %4190 = vperm.xlu0 %4189, %v3691
        %v4191 = vpop.permute.xlu0 %4190
        %4192 = vset.pattern.permute.xlu0 0
        %4193 = vperm.xlu0 %4192, %v3692
        %v4194 = vpop.permute.xlu0 %4193
        %4195 = vset.pattern.permute.xlu0 0
        %4196 = vperm.xlu0 %4195, %v3693
        %v4197 = vpop.permute.xlu0 %4196
        %4198 = vset.pattern.permute.xlu0 0
        %4199 = vperm.xlu0 %4198, %v3694
        %v4200 = vpop.permute.xlu0 %4199
        %4201 = vset.pattern.permute.xlu0 0
        %4202 = vperm.xlu0 %4201, %v3695
        %v4203 = vpop.permute.xlu0 %4202
        %4204 = vset.pattern.permute.xlu0 0
        %4205 = vperm.xlu0 %4204, %v3696
        %v4206 = vpop.permute.xlu0 %4205
        %4207 = vset.pattern.permute.xlu0 0
        %4208 = vperm.xlu0 %4207, %v3697
        %v4209 = vpop.permute.xlu0 %4208
        %v4210 = vperm.slane %v3828, %v2280
        %v4211 = vperm.slane %v3831, %v2280
        %v4212 = vperm.slane %v3834, %v2280
        %v4213 = vperm.slane %v3837, %v2280
        %v4214 = vperm.slane %v3840, %v2280
        %v4215 = vperm.slane %v3843, %v2280
        %v4216 = vperm.slane %v3846, %v2280
        %v4217 = vperm.slane %v3849, %v2280
        %v4218 = vperm.slane %v3852, %v2280
        %v4219 = vperm.slane %v3855, %v2280
        %v4220 = vperm.slane %v3858, %v2280
        %v4221 = vperm.slane %v3861, %v2280
        %v4222 = vperm.slane %v3864, %v2280
        %v4223 = vperm.slane %v3867, %v2280
        %v4224 = vperm.slane %v3870, %v2280
        %v4225 = vperm.slane %v3873, %v2280
        %v4226 = vperm.slane %v3876, %v2280
        %v4227 = vperm.slane %v3879, %v2280
        %v4228 = vperm.slane %v3882, %v2280
        %v4229 = vperm.slane %v3885, %v2280
        %v4230 = vperm.slane %v3888, %v2280
        %v4231 = vperm.slane %v3891, %v2280
        %v4232 = vperm.slane %v3894, %v2280
        %v4233 = vperm.slane %v3897, %v2280
        %v4234 = vperm.slane %v3900, %v2280
        %v4235 = vperm.slane %v3903, %v2280
        %v4236 = vperm.slane %v3906, %v2280
        %v4237 = vperm.slane %v3909, %v2280
        %v4238 = vperm.slane %v3912, %v2280
        %v4239 = vperm.slane %v3915, %v2280
        %v4240 = vperm.slane %v3918, %v2280
        %v4241 = vperm.slane %v3921, %v2280
        %v4242 = vperm.slane %v3924, %v2280
        %v4243 = vperm.slane %v3927, %v2280
        %v4244 = vperm.slane %v3930, %v2280
        %v4245 = vperm.slane %v3933, %v2280
        %v4246 = vperm.slane %v3936, %v2280
        %v4247 = vperm.slane %v3939, %v2280
        %v4248 = vperm.slane %v3942, %v2280
        %v4249 = vperm.slane %v3945, %v2280
        %v4250 = vperm.slane %v3948, %v2280
        %v4251 = vperm.slane %v3951, %v2280
        %v4252 = vperm.slane %v3954, %v2280
        %v4253 = vperm.slane %v3957, %v2280
        %v4254 = vperm.slane %v3960, %v2280
        %v4255 = vperm.slane %v3963, %v2280
        %v4256 = vperm.slane %v3966, %v2280
        %v4257 = vperm.slane %v3969, %v2280
        %v4258 = vperm.slane %v3972, %v2280
        %v4259 = vperm.slane %v3975, %v2280
        %v4260 = vperm.slane %v3978, %v2280
        %v4261 = vperm.slane %v3981, %v2280
        %v4262 = vperm.slane %v3984, %v2280
        %v4263 = vperm.slane %v3987, %v2280
        %v4264 = vperm.slane %v3990, %v2280
        %v4265 = vperm.slane %v3993, %v2280
        %v4266 = vperm.slane %v3996, %v2280
        %v4267 = vperm.slane %v3999, %v2280
        %v4268 = vperm.slane %v4002, %v2280
        %v4269 = vperm.slane %v4005, %v2280
        %v4270 = vperm.slane %v4008, %v2280
        %v4271 = vperm.slane %v4011, %v2280
        %v4272 = vperm.slane %v4014, %v2280
        %v4273 = vperm.slane %v4017, %v2280
        %v4274 = vperm.slane %v4020, %v2280
        %v4275 = vperm.slane %v4023, %v2280
        %v4276 = vperm.slane %v4026, %v2280
        %v4277 = vperm.slane %v4029, %v2280
        %v4278 = vperm.slane %v4032, %v2280
        %v4279 = vperm.slane %v4035, %v2280
        %v4280 = vperm.slane %v4038, %v2280
        %v4281 = vperm.slane %v4041, %v2280
        %v4282 = vperm.slane %v4044, %v2280
        %v4283 = vperm.slane %v4047, %v2280
        %v4284 = vperm.slane %v4050, %v2280
        %v4285 = vperm.slane %v4053, %v2280
        %v4286 = vperm.slane %v4056, %v2280
        %v4287 = vperm.slane %v4059, %v2280
        %v4288 = vperm.slane %v4062, %v2280
        %v4289 = vperm.slane %v4065, %v2280
        %v4290 = vperm.slane %v4068, %v2280
        %v4291 = vperm.slane %v4071, %v2280
        %v4292 = vperm.slane %v4074, %v2280
        %v4293 = vperm.slane %v4077, %v2280
        %v4294 = vperm.slane %v4080, %v2280
        %v4295 = vperm.slane %v4083, %v2280
        %v4296 = vperm.slane %v4086, %v2280
        %v4297 = vperm.slane %v4089, %v2280
        %v4298 = vperm.slane %v4092, %v2280
        %v4299 = vperm.slane %v4095, %v2280
        %v4300 = vperm.slane %v4098, %v2280
        %v4301 = vperm.slane %v4101, %v2280
        %v4302 = vperm.slane %v4104, %v2280
        %v4303 = vperm.slane %v4107, %v2280
        %v4304 = vperm.slane %v4110, %v2280
        %v4305 = vperm.slane %v4113, %v2280
        %v4306 = vperm.slane %v4116, %v2280
        %v4307 = vperm.slane %v4119, %v2280
        %v4308 = vperm.slane %v4122, %v2280
        %v4309 = vperm.slane %v4125, %v2280
        %v4310 = vperm.slane %v4128, %v2280
        %v4311 = vperm.slane %v4131, %v2280
        %v4312 = vperm.slane %v4134, %v2280
        %v4313 = vperm.slane %v4137, %v2280
        %v4314 = vperm.slane %v4140, %v2280
        %v4315 = vperm.slane %v4143, %v2280
        %v4316 = vperm.slane %v4146, %v2280
        %v4317 = vperm.slane %v4149, %v2280
        %v4318 = vperm.slane %v4152, %v2280
        %v4319 = vperm.slane %v4155, %v2280
        %v4320 = vperm.slane %v4158, %v2280
        %v4321 = vperm.slane %v4161, %v2280
        %v4322 = vperm.slane %v4164, %v2280
        %v4323 = vperm.slane %v4167, %v2280
        %v4324 = vperm.slane %v4170, %v2280
        %v4325 = vperm.slane %v4173, %v2280
        %v4326 = vperm.slane %v4176, %v2280
        %v4327 = vperm.slane %v4179, %v2280
        %v4328 = vperm.slane %v4182, %v2280
        %v4329 = vperm.slane %v4185, %v2280
        %v4330 = vperm.slane %v4188, %v2280
        %v4331 = vperm.slane %v4191, %v2280
        %v4332 = vperm.slane %v4194, %v2280
        %v4333 = vperm.slane %v4197, %v2280
        %v4334 = vperm.slane %v4200, %v2280
        %v4335 = vperm.slane %v4203, %v2280
        %v4336 = vperm.slane %v4206, %v2280
        %v4337 = vperm.slane %v4209, %v2280
        %v4338 = vsel %vm492, %v4211, %v4210
        %v4339 = vsel %vm495, %v4212, %v4338
        %v4340 = vsel %vm498, %v4213, %v4339
        %v4341 = vsel %vm492, %v4215, %v4214
        %v4342 = vsel %vm495, %v4216, %v4341
        %v4343 = vsel %vm498, %v4217, %v4342
        %v4344 = vsel %vm492, %v4219, %v4218
        %v4345 = vsel %vm495, %v4220, %v4344
        %v4346 = vsel %vm498, %v4221, %v4345
        %v4347 = vsel %vm492, %v4223, %v4222
        %v4348 = vsel %vm495, %v4224, %v4347
        %v4349 = vsel %vm498, %v4225, %v4348
        %v4350 = vsel %vm492, %v4227, %v4226
        %v4351 = vsel %vm495, %v4228, %v4350
        %v4352 = vsel %vm498, %v4229, %v4351
        %v4353 = vsel %vm492, %v4231, %v4230
        %v4354 = vsel %vm495, %v4232, %v4353
        %v4355 = vsel %vm498, %v4233, %v4354
        %v4356 = vsel %vm492, %v4235, %v4234
        %v4357 = vsel %vm495, %v4236, %v4356
        %v4358 = vsel %vm498, %v4237, %v4357
        %v4359 = vsel %vm492, %v4239, %v4238
        %v4360 = vsel %vm495, %v4240, %v4359
        %v4361 = vsel %vm498, %v4241, %v4360
        %v4362 = vsel %vm492, %v4243, %v4242
        %v4363 = vsel %vm495, %v4244, %v4362
        %v4364 = vsel %vm498, %v4245, %v4363
        %v4365 = vsel %vm492, %v4247, %v4246
        %v4366 = vsel %vm495, %v4248, %v4365
        %v4367 = vsel %vm498, %v4249, %v4366
        %v4368 = vsel %vm492, %v4251, %v4250
        %v4369 = vsel %vm495, %v4252, %v4368
        %v4370 = vsel %vm498, %v4253, %v4369
        %v4371 = vsel %vm492, %v4255, %v4254
        %v4372 = vsel %vm495, %v4256, %v4371
        %v4373 = vsel %vm498, %v4257, %v4372
        %v4374 = vsel %vm492, %v4259, %v4258
        %v4375 = vsel %vm495, %v4260, %v4374
        %v4376 = vsel %vm498, %v4261, %v4375
        %v4377 = vsel %vm492, %v4263, %v4262
        %v4378 = vsel %vm495, %v4264, %v4377
        %v4379 = vsel %vm498, %v4265, %v4378
        %v4380 = vsel %vm492, %v4267, %v4266
        %v4381 = vsel %vm495, %v4268, %v4380
        %v4382 = vsel %vm498, %v4269, %v4381
        %v4383 = vsel %vm492, %v4271, %v4270
        %v4384 = vsel %vm495, %v4272, %v4383
        %v4385 = vsel %vm498, %v4273, %v4384
        %v4386 = vsel %vm492, %v4275, %v4274
        %v4387 = vsel %vm495, %v4276, %v4386
        %v4388 = vsel %vm498, %v4277, %v4387
        %v4389 = vsel %vm492, %v4279, %v4278
        %v4390 = vsel %vm495, %v4280, %v4389
        %v4391 = vsel %vm498, %v4281, %v4390
        %v4392 = vsel %vm492, %v4283, %v4282
        %v4393 = vsel %vm495, %v4284, %v4392
        %v4394 = vsel %vm498, %v4285, %v4393
        %v4395 = vsel %vm492, %v4287, %v4286
        %v4396 = vsel %vm495, %v4288, %v4395
        %v4397 = vsel %vm498, %v4289, %v4396
        %v4398 = vsel %vm492, %v4291, %v4290
        %v4399 = vsel %vm495, %v4292, %v4398
        %v4400 = vsel %vm498, %v4293, %v4399
        %v4401 = vsel %vm492, %v4295, %v4294
        %v4402 = vsel %vm495, %v4296, %v4401
        %v4403 = vsel %vm498, %v4297, %v4402
        %v4404 = vsel %vm492, %v4299, %v4298
        %v4405 = vsel %vm495, %v4300, %v4404
        %v4406 = vsel %vm498, %v4301, %v4405
        %v4407 = vsel %vm492, %v4303, %v4302
        %v4408 = vsel %vm495, %v4304, %v4407
        %v4409 = vsel %vm498, %v4305, %v4408
        %v4410 = vsel %vm492, %v4307, %v4306
        %v4411 = vsel %vm495, %v4308, %v4410
        %v4412 = vsel %vm498, %v4309, %v4411
        %v4413 = vsel %vm492, %v4311, %v4310
        %v4414 = vsel %vm495, %v4312, %v4413
        %v4415 = vsel %vm498, %v4313, %v4414
        %v4416 = vsel %vm492, %v4315, %v4314
        %v4417 = vsel %vm495, %v4316, %v4416
        %v4418 = vsel %vm498, %v4317, %v4417
        %v4419 = vsel %vm492, %v4319, %v4318
        %v4420 = vsel %vm495, %v4320, %v4419
        %v4421 = vsel %vm498, %v4321, %v4420
        %v4422 = vsel %vm492, %v4323, %v4322
        %v4423 = vsel %vm495, %v4324, %v4422
        %v4424 = vsel %vm498, %v4325, %v4423
        %v4425 = vsel %vm492, %v4327, %v4326
        %v4426 = vsel %vm495, %v4328, %v4425
        %v4427 = vsel %vm498, %v4329, %v4426
        %v4428 = vsel %vm492, %v4331, %v4330
        %v4429 = vsel %vm495, %v4332, %v4428
        %v4430 = vsel %vm498, %v4333, %v4429
        %v4431 = vsel %vm492, %v4335, %v4334
        %v4432 = vsel %vm495, %v4336, %v4431
        %v4433 = vsel %vm498, %v4337, %v4432
        %v4466 = vsel %vm2537, %v4340, 0.0
        %4467 = vadd.xlane.f32.xlu0 %v4466
        %v4468 = vpop.xlane.xlu0 %4467
        %v4469 = vsel %vm2537, %v4343, 0.0
        %4470 = vadd.xlane.f32.xlu0 %v4469
        %v4471 = vpop.xlane.xlu0 %4470
        %v4472 = vsel %vm2537, %v4346, 0.0
        %4473 = vadd.xlane.f32.xlu0 %v4472
        %v4474 = vpop.xlane.xlu0 %4473
        %v4475 = vsel %vm2537, %v4349, 0.0
        %4476 = vadd.xlane.f32.xlu0 %v4475
        %v4477 = vpop.xlane.xlu0 %4476
        %v4478 = vsel %vm2537, %v4352, 0.0
        %4479 = vadd.xlane.f32.xlu0 %v4478
        %v4480 = vpop.xlane.xlu0 %4479
        %v4481 = vsel %vm2537, %v4355, 0.0
        %4482 = vadd.xlane.f32.xlu0 %v4481
        %v4483 = vpop.xlane.xlu0 %4482
        %v4484 = vsel %vm2537, %v4358, 0.0
        %4485 = vadd.xlane.f32.xlu0 %v4484
        %v4486 = vpop.xlane.xlu0 %4485
        %v4487 = vsel %vm2537, %v4361, 0.0
        %4488 = vadd.xlane.f32.xlu0 %v4487
        %v4489 = vpop.xlane.xlu0 %4488
        %v4490 = vsel %vm2537, %v4364, 0.0
        %4491 = vadd.xlane.f32.xlu0 %v4490
        %v4492 = vpop.xlane.xlu0 %4491
        %v4493 = vsel %vm2537, %v4367, 0.0
        %4494 = vadd.xlane.f32.xlu0 %v4493
        %v4495 = vpop.xlane.xlu0 %4494
        %v4496 = vsel %vm2537, %v4370, 0.0
        %4497 = vadd.xlane.f32.xlu0 %v4496
        %v4498 = vpop.xlane.xlu0 %4497
        %v4499 = vsel %vm2537, %v4373, 0.0
        %4500 = vadd.xlane.f32.xlu0 %v4499
        %v4501 = vpop.xlane.xlu0 %4500
        %v4502 = vsel %vm2537, %v4376, 0.0
        %4503 = vadd.xlane.f32.xlu0 %v4502
        %v4504 = vpop.xlane.xlu0 %4503
        %v4505 = vsel %vm2537, %v4379, 0.0
        %4506 = vadd.xlane.f32.xlu0 %v4505
        %v4507 = vpop.xlane.xlu0 %4506
        %v4508 = vsel %vm2537, %v4382, 0.0
        %4509 = vadd.xlane.f32.xlu0 %v4508
        %v4510 = vpop.xlane.xlu0 %4509
        %v4511 = vsel %vm2537, %v4385, 0.0
        %4512 = vadd.xlane.f32.xlu0 %v4511
        %v4513 = vpop.xlane.xlu0 %4512
        %v4514 = vsel %vm2537, %v4388, 0.0
        %4515 = vadd.xlane.f32.xlu0 %v4514
        %v4516 = vpop.xlane.xlu0 %4515
        %v4517 = vsel %vm2537, %v4391, 0.0
        %4518 = vadd.xlane.f32.xlu0 %v4517
        %v4519 = vpop.xlane.xlu0 %4518
        %v4520 = vsel %vm2537, %v4394, 0.0
        %4521 = vadd.xlane.f32.xlu0 %v4520
        %v4522 = vpop.xlane.xlu0 %4521
        %v4523 = vsel %vm2537, %v4397, 0.0
        %4524 = vadd.xlane.f32.xlu0 %v4523
        %v4525 = vpop.xlane.xlu0 %4524
        %v4526 = vsel %vm2537, %v4400, 0.0
        %4527 = vadd.xlane.f32.xlu0 %v4526
        %v4528 = vpop.xlane.xlu0 %4527
        %v4529 = vsel %vm2537, %v4403, 0.0
        %4530 = vadd.xlane.f32.xlu0 %v4529
        %v4531 = vpop.xlane.xlu0 %4530
        %v4532 = vsel %vm2537, %v4406, 0.0
        %4533 = vadd.xlane.f32.xlu0 %v4532
        %v4534 = vpop.xlane.xlu0 %4533
        %v4535 = vsel %vm2537, %v4409, 0.0
        %4536 = vadd.xlane.f32.xlu0 %v4535
        %v4537 = vpop.xlane.xlu0 %4536
        %v4538 = vsel %vm2537, %v4412, 0.0
        %4539 = vadd.xlane.f32.xlu0 %v4538
        %v4540 = vpop.xlane.xlu0 %4539
        %v4541 = vsel %vm2537, %v4415, 0.0
        %4542 = vadd.xlane.f32.xlu0 %v4541
        %v4543 = vpop.xlane.xlu0 %4542
        %v4544 = vsel %vm2537, %v4418, 0.0
        %4545 = vadd.xlane.f32.xlu0 %v4544
        %v4546 = vpop.xlane.xlu0 %4545
        %v4547 = vsel %vm2537, %v4421, 0.0
        %4548 = vadd.xlane.f32.xlu0 %v4547
        %v4549 = vpop.xlane.xlu0 %4548
        %v4550 = vsel %vm2537, %v4424, 0.0
        %4551 = vadd.xlane.f32.xlu0 %v4550
        %v4552 = vpop.xlane.xlu0 %4551
        %v4553 = vsel %vm2537, %v4427, 0.0
        %4554 = vadd.xlane.f32.xlu0 %v4553
        %v4555 = vpop.xlane.xlu0 %4554
        %v4556 = vsel %vm2537, %v4430, 0.0
        %4557 = vadd.xlane.f32.xlu0 %v4556
        %v4558 = vpop.xlane.xlu0 %4557
        %v4559 = vsel %vm2537, %v4433, 0.0
        %4560 = vadd.xlane.f32.xlu0 %v4559
        %v4561 = vpop.xlane.xlu0 %4560
        %v4562 = vmax.f32 %v4468, 1e-30
        %v4563 = vmax.f32 %v4471, 1e-30
        %v4564 = vmax.f32 %v4474, 1e-30
        %v4565 = vmax.f32 %v4477, 1e-30
        %v4566 = vmax.f32 %v4480, 1e-30
        %v4567 = vmax.f32 %v4483, 1e-30
        %v4568 = vmax.f32 %v4486, 1e-30
        %v4569 = vmax.f32 %v4489, 1e-30
        %v4570 = vmax.f32 %v4492, 1e-30
        %v4571 = vmax.f32 %v4495, 1e-30
        %v4572 = vmax.f32 %v4498, 1e-30
        %v4573 = vmax.f32 %v4501, 1e-30
        %v4574 = vmax.f32 %v4504, 1e-30
        %v4575 = vmax.f32 %v4507, 1e-30
        %v4576 = vmax.f32 %v4510, 1e-30
        %v4577 = vmax.f32 %v4513, 1e-30
        %v4578 = vmax.f32 %v4516, 1e-30
        %v4579 = vmax.f32 %v4519, 1e-30
        %v4580 = vmax.f32 %v4522, 1e-30
        %v4581 = vmax.f32 %v4525, 1e-30
        %v4582 = vmax.f32 %v4528, 1e-30
        %v4583 = vmax.f32 %v4531, 1e-30
        %v4584 = vmax.f32 %v4534, 1e-30
        %v4585 = vmax.f32 %v4537, 1e-30
        %v4586 = vmax.f32 %v4540, 1e-30
        %v4587 = vmax.f32 %v4543, 1e-30
        %v4588 = vmax.f32 %v4546, 1e-30
        %v4589 = vmax.f32 %v4549, 1e-30
        %v4590 = vmax.f32 %v4552, 1e-30
        %v4591 = vmax.f32 %v4555, 1e-30
        %v4592 = vmax.f32 %v4558, 1e-30
        %v4593 = vmax.f32 %v4561, 1e-30
        %v4594 = vrcp.pop %v4562
        %v4595 = vrcp.pop %v4563
        %v4596 = vrcp.pop %v4564
        %v4597 = vrcp.pop %v4565
        %v4598 = vrcp.pop %v4566
        %v4599 = vrcp.pop %v4567
        %v4600 = vrcp.pop %v4568
        %v4601 = vrcp.pop %v4569
        %v4602 = vrcp.pop %v4570
        %v4603 = vrcp.pop %v4571
        %v4604 = vrcp.pop %v4572
        %v4605 = vrcp.pop %v4573
        %v4606 = vrcp.pop %v4574
        %v4607 = vrcp.pop %v4575
        %v4608 = vrcp.pop %v4576
        %v4609 = vrcp.pop %v4577
        %v4610 = vrcp.pop %v4578
        %v4611 = vrcp.pop %v4579
        %v4612 = vrcp.pop %v4580
        %v4613 = vrcp.pop %v4581
        %v4614 = vrcp.pop %v4582
        %v4615 = vrcp.pop %v4583
        %v4616 = vrcp.pop %v4584
        %v4617 = vrcp.pop %v4585
        %v4618 = vrcp.pop %v4586
        %v4619 = vrcp.pop %v4587
        %v4620 = vrcp.pop %v4588
        %v4621 = vrcp.pop %v4589
        %v4622 = vrcp.pop %v4590
        %v4623 = vrcp.pop %v4591
        %v4624 = vrcp.pop %v4592
        %v4625 = vrcp.pop %v4593
        %v4626 = vmul.f32 %v4562, %v4594
        %v4627 = vmul.f32 %v4563, %v4595
        %v4628 = vmul.f32 %v4564, %v4596
        %v4629 = vmul.f32 %v4565, %v4597
        %v4630 = vmul.f32 %v4566, %v4598
        %v4631 = vmul.f32 %v4567, %v4599
        %v4632 = vmul.f32 %v4568, %v4600
        %v4633 = vmul.f32 %v4569, %v4601
        %v4634 = vmul.f32 %v4570, %v4602
        %v4635 = vmul.f32 %v4571, %v4603
        %v4636 = vmul.f32 %v4572, %v4604
        %v4637 = vmul.f32 %v4573, %v4605
        %v4638 = vmul.f32 %v4574, %v4606
        %v4639 = vmul.f32 %v4575, %v4607
        %v4640 = vmul.f32 %v4576, %v4608
        %v4641 = vmul.f32 %v4577, %v4609
        %v4642 = vmul.f32 %v4578, %v4610
        %v4643 = vmul.f32 %v4579, %v4611
        %v4644 = vmul.f32 %v4580, %v4612
        %v4645 = vmul.f32 %v4581, %v4613
        %v4646 = vmul.f32 %v4582, %v4614
        %v4647 = vmul.f32 %v4583, %v4615
        %v4648 = vmul.f32 %v4584, %v4616
        %v4649 = vmul.f32 %v4585, %v4617
        %v4650 = vmul.f32 %v4586, %v4618
        %v4651 = vmul.f32 %v4587, %v4619
        %v4652 = vmul.f32 %v4588, %v4620
        %v4653 = vmul.f32 %v4589, %v4621
        %v4654 = vmul.f32 %v4590, %v4622
        %v4655 = vmul.f32 %v4591, %v4623
        %v4656 = vmul.f32 %v4592, %v4624
        %v4657 = vmul.f32 %v4593, %v4625
        %v4658 = vsub.f32 2.0, %v4626
        %v4659 = vsub.f32 2.0, %v4627
        %v4660 = vsub.f32 2.0, %v4628
        %v4661 = vsub.f32 2.0, %v4629
        %v4662 = vsub.f32 2.0, %v4630
        %v4663 = vsub.f32 2.0, %v4631
        %v4664 = vsub.f32 2.0, %v4632
        %v4665 = vsub.f32 2.0, %v4633
        %v4666 = vsub.f32 2.0, %v4634
        %v4667 = vsub.f32 2.0, %v4635
        %v4668 = vsub.f32 2.0, %v4636
        %v4669 = vsub.f32 2.0, %v4637
        %v4670 = vsub.f32 2.0, %v4638
        %v4671 = vsub.f32 2.0, %v4639
        %v4672 = vsub.f32 2.0, %v4640
        %v4673 = vsub.f32 2.0, %v4641
        %v4674 = vsub.f32 2.0, %v4642
        %v4675 = vsub.f32 2.0, %v4643
        %v4676 = vsub.f32 2.0, %v4644
        %v4677 = vsub.f32 2.0, %v4645
        %v4678 = vsub.f32 2.0, %v4646
        %v4679 = vsub.f32 2.0, %v4647
        %v4680 = vsub.f32 2.0, %v4648
        %v4681 = vsub.f32 2.0, %v4649
        %v4682 = vsub.f32 2.0, %v4650
        %v4683 = vsub.f32 2.0, %v4651
        %v4684 = vsub.f32 2.0, %v4652
        %v4685 = vsub.f32 2.0, %v4653
        %v4686 = vsub.f32 2.0, %v4654
        %v4687 = vsub.f32 2.0, %v4655
        %v4688 = vsub.f32 2.0, %v4656
        %v4689 = vsub.f32 2.0, %v4657
        %v4690 = vmul.f32 %v4594, %v4658
        %v4691 = vmul.f32 %v4595, %v4659
        %v4692 = vmul.f32 %v4596, %v4660
        %v4693 = vmul.f32 %v4597, %v4661
        %v4694 = vmul.f32 %v4598, %v4662
        %v4695 = vmul.f32 %v4599, %v4663
        %v4696 = vmul.f32 %v4600, %v4664
        %v4697 = vmul.f32 %v4601, %v4665
        %v4698 = vmul.f32 %v4602, %v4666
        %v4699 = vmul.f32 %v4603, %v4667
        %v4700 = vmul.f32 %v4604, %v4668
        %v4701 = vmul.f32 %v4605, %v4669
        %v4702 = vmul.f32 %v4606, %v4670
        %v4703 = vmul.f32 %v4607, %v4671
        %v4704 = vmul.f32 %v4608, %v4672
        %v4705 = vmul.f32 %v4609, %v4673
        %v4706 = vmul.f32 %v4610, %v4674
        %v4707 = vmul.f32 %v4611, %v4675
        %v4708 = vmul.f32 %v4612, %v4676
        %v4709 = vmul.f32 %v4613, %v4677
        %v4710 = vmul.f32 %v4614, %v4678
        %v4711 = vmul.f32 %v4615, %v4679
        %v4712 = vmul.f32 %v4616, %v4680
        %v4713 = vmul.f32 %v4617, %v4681
        %v4714 = vmul.f32 %v4618, %v4682
        %v4715 = vmul.f32 %v4619, %v4683
        %v4716 = vmul.f32 %v4620, %v4684
        %v4717 = vmul.f32 %v4621, %v4685
        %v4718 = vmul.f32 %v4622, %v4686
        %v4719 = vmul.f32 %v4623, %v4687
        %v4720 = vmul.f32 %v4624, %v4688
        %v4721 = vmul.f32 %v4625, %v4689
        %vm4722 = vcmp.gt.f32.partialorder %v4468, 0.0
        %vm4723 = vcmp.gt.f32.partialorder %v4471, 0.0
        %vm4724 = vcmp.gt.f32.partialorder %v4474, 0.0
        %vm4725 = vcmp.gt.f32.partialorder %v4477, 0.0
        %vm4726 = vcmp.gt.f32.partialorder %v4480, 0.0
        %vm4727 = vcmp.gt.f32.partialorder %v4483, 0.0
        %vm4728 = vcmp.gt.f32.partialorder %v4486, 0.0
        %vm4729 = vcmp.gt.f32.partialorder %v4489, 0.0
        %vm4730 = vcmp.gt.f32.partialorder %v4492, 0.0
        %vm4731 = vcmp.gt.f32.partialorder %v4495, 0.0
        %vm4732 = vcmp.gt.f32.partialorder %v4498, 0.0
        %vm4733 = vcmp.gt.f32.partialorder %v4501, 0.0
        %vm4734 = vcmp.gt.f32.partialorder %v4504, 0.0
        %vm4735 = vcmp.gt.f32.partialorder %v4507, 0.0
        %vm4736 = vcmp.gt.f32.partialorder %v4510, 0.0
        %vm4737 = vcmp.gt.f32.partialorder %v4513, 0.0
        %vm4738 = vcmp.gt.f32.partialorder %v4516, 0.0
        %vm4739 = vcmp.gt.f32.partialorder %v4519, 0.0
        %vm4740 = vcmp.gt.f32.partialorder %v4522, 0.0
        %vm4741 = vcmp.gt.f32.partialorder %v4525, 0.0
        %vm4742 = vcmp.gt.f32.partialorder %v4528, 0.0
        %vm4743 = vcmp.gt.f32.partialorder %v4531, 0.0
        %vm4744 = vcmp.gt.f32.partialorder %v4534, 0.0
        %vm4745 = vcmp.gt.f32.partialorder %v4537, 0.0
        %vm4746 = vcmp.gt.f32.partialorder %v4540, 0.0
        %vm4747 = vcmp.gt.f32.partialorder %v4543, 0.0
        %vm4748 = vcmp.gt.f32.partialorder %v4546, 0.0
        %vm4749 = vcmp.gt.f32.partialorder %v4549, 0.0
        %vm4750 = vcmp.gt.f32.partialorder %v4552, 0.0
        %vm4751 = vcmp.gt.f32.partialorder %v4555, 0.0
        %vm4752 = vcmp.gt.f32.partialorder %v4558, 0.0
        %vm4753 = vcmp.gt.f32.partialorder %v4561, 0.0
        %v4754 = vsel %vm4722, %v4690, 0.0
        %v4755 = vsel %vm4723, %v4691, 0.0
        %v4756 = vsel %vm4724, %v4692, 0.0
        %v4757 = vsel %vm4725, %v4693, 0.0
        %v4758 = vsel %vm4726, %v4694, 0.0
        %v4759 = vsel %vm4727, %v4695, 0.0
        %v4760 = vsel %vm4728, %v4696, 0.0
        %v4761 = vsel %vm4729, %v4697, 0.0
        %v4762 = vsel %vm4730, %v4698, 0.0
        %v4763 = vsel %vm4731, %v4699, 0.0
        %v4764 = vsel %vm4732, %v4700, 0.0
        %v4765 = vsel %vm4733, %v4701, 0.0
        %v4766 = vsel %vm4734, %v4702, 0.0
        %v4767 = vsel %vm4735, %v4703, 0.0
        %v4768 = vsel %vm4736, %v4704, 0.0
        %v4769 = vsel %vm4737, %v4705, 0.0
        %v4770 = vsel %vm4738, %v4706, 0.0
        %v4771 = vsel %vm4739, %v4707, 0.0
        %v4772 = vsel %vm4740, %v4708, 0.0
        %v4773 = vsel %vm4741, %v4709, 0.0
        %v4774 = vsel %vm4742, %v4710, 0.0
        %v4775 = vsel %vm4743, %v4711, 0.0
        %v4776 = vsel %vm4744, %v4712, 0.0
        %v4777 = vsel %vm4745, %v4713, 0.0
        %v4778 = vsel %vm4746, %v4714, 0.0
        %v4779 = vsel %vm4747, %v4715, 0.0
        %v4780 = vsel %vm4748, %v4716, 0.0
        %v4781 = vsel %vm4749, %v4717, 0.0
        %v4782 = vsel %vm4750, %v4718, 0.0
        %v4783 = vsel %vm4751, %v4719, 0.0
        %v4784 = vsel %vm4752, %v4720, 0.0
        %v4785 = vsel %vm4753, %v4721, 0.0
        %v4818 = vperm.slane %v4754, 0
        %v4819 = vperm.slane %v4754, 1
        %v4820 = vperm.slane %v4754, 2
        %v4821 = vperm.slane %v4754, 3
        %v4822 = vperm.slane %v4755, 0
        %v4823 = vperm.slane %v4755, 1
        %v4824 = vperm.slane %v4755, 2
        %v4825 = vperm.slane %v4755, 3
        %v4826 = vperm.slane %v4756, 0
        %v4827 = vperm.slane %v4756, 1
        %v4828 = vperm.slane %v4756, 2
        %v4829 = vperm.slane %v4756, 3
        %v4830 = vperm.slane %v4757, 0
        %v4831 = vperm.slane %v4757, 1
        %v4832 = vperm.slane %v4757, 2
        %v4833 = vperm.slane %v4757, 3
        %v4834 = vperm.slane %v4758, 0
        %v4835 = vperm.slane %v4758, 1
        %v4836 = vperm.slane %v4758, 2
        %v4837 = vperm.slane %v4758, 3
        %v4838 = vperm.slane %v4759, 0
        %v4839 = vperm.slane %v4759, 1
        %v4840 = vperm.slane %v4759, 2
        %v4841 = vperm.slane %v4759, 3
        %v4842 = vperm.slane %v4760, 0
        %v4843 = vperm.slane %v4760, 1
        %v4844 = vperm.slane %v4760, 2
        %v4845 = vperm.slane %v4760, 3
        %v4846 = vperm.slane %v4761, 0
        %v4847 = vperm.slane %v4761, 1
        %v4848 = vperm.slane %v4761, 2
        %v4849 = vperm.slane %v4761, 3
        %v4850 = vperm.slane %v4762, 0
        %v4851 = vperm.slane %v4762, 1
        %v4852 = vperm.slane %v4762, 2
        %v4853 = vperm.slane %v4762, 3
        %v4854 = vperm.slane %v4763, 0
        %v4855 = vperm.slane %v4763, 1
        %v4856 = vperm.slane %v4763, 2
        %v4857 = vperm.slane %v4763, 3
        %v4858 = vperm.slane %v4764, 0
        %v4859 = vperm.slane %v4764, 1
        %v4860 = vperm.slane %v4764, 2
        %v4861 = vperm.slane %v4764, 3
        %v4862 = vperm.slane %v4765, 0
        %v4863 = vperm.slane %v4765, 1
        %v4864 = vperm.slane %v4765, 2
        %v4865 = vperm.slane %v4765, 3
        %v4866 = vperm.slane %v4766, 0
        %v4867 = vperm.slane %v4766, 1
        %v4868 = vperm.slane %v4766, 2
        %v4869 = vperm.slane %v4766, 3
        %v4870 = vperm.slane %v4767, 0
        %v4871 = vperm.slane %v4767, 1
        %v4872 = vperm.slane %v4767, 2
        %v4873 = vperm.slane %v4767, 3
        %v4874 = vperm.slane %v4768, 0
        %v4875 = vperm.slane %v4768, 1
        %v4876 = vperm.slane %v4768, 2
        %v4877 = vperm.slane %v4768, 3
        %v4878 = vperm.slane %v4769, 0
        %v4879 = vperm.slane %v4769, 1
        %v4880 = vperm.slane %v4769, 2
        %v4881 = vperm.slane %v4769, 3
        %v4882 = vperm.slane %v4770, 0
        %v4883 = vperm.slane %v4770, 1
        %v4884 = vperm.slane %v4770, 2
        %v4885 = vperm.slane %v4770, 3
        %v4886 = vperm.slane %v4771, 0
        %v4887 = vperm.slane %v4771, 1
        %v4888 = vperm.slane %v4771, 2
        %v4889 = vperm.slane %v4771, 3
        %v4890 = vperm.slane %v4772, 0
        %v4891 = vperm.slane %v4772, 1
        %v4892 = vperm.slane %v4772, 2
        %v4893 = vperm.slane %v4772, 3
        %v4894 = vperm.slane %v4773, 0
        %v4895 = vperm.slane %v4773, 1
        %v4896 = vperm.slane %v4773, 2
        %v4897 = vperm.slane %v4773, 3
        %v4898 = vperm.slane %v4774, 0
        %v4899 = vperm.slane %v4774, 1
        %v4900 = vperm.slane %v4774, 2
        %v4901 = vperm.slane %v4774, 3
        %v4902 = vperm.slane %v4775, 0
        %v4903 = vperm.slane %v4775, 1
        %v4904 = vperm.slane %v4775, 2
        %v4905 = vperm.slane %v4775, 3
        %v4906 = vperm.slane %v4776, 0
        %v4907 = vperm.slane %v4776, 1
        %v4908 = vperm.slane %v4776, 2
        %v4909 = vperm.slane %v4776, 3
        %v4910 = vperm.slane %v4777, 0
        %v4911 = vperm.slane %v4777, 1
        %v4912 = vperm.slane %v4777, 2
        %v4913 = vperm.slane %v4777, 3
        %v4914 = vperm.slane %v4778, 0
        %v4915 = vperm.slane %v4778, 1
        %v4916 = vperm.slane %v4778, 2
        %v4917 = vperm.slane %v4778, 3
        %v4918 = vperm.slane %v4779, 0
        %v4919 = vperm.slane %v4779, 1
        %v4920 = vperm.slane %v4779, 2
        %v4921 = vperm.slane %v4779, 3
        %v4922 = vperm.slane %v4780, 0
        %v4923 = vperm.slane %v4780, 1
        %v4924 = vperm.slane %v4780, 2
        %v4925 = vperm.slane %v4780, 3
        %v4926 = vperm.slane %v4781, 0
        %v4927 = vperm.slane %v4781, 1
        %v4928 = vperm.slane %v4781, 2
        %v4929 = vperm.slane %v4781, 3
        %v4930 = vperm.slane %v4782, 0
        %v4931 = vperm.slane %v4782, 1
        %v4932 = vperm.slane %v4782, 2
        %v4933 = vperm.slane %v4782, 3
        %v4934 = vperm.slane %v4783, 0
        %v4935 = vperm.slane %v4783, 1
        %v4936 = vperm.slane %v4783, 2
        %v4937 = vperm.slane %v4783, 3
        %v4938 = vperm.slane %v4784, 0
        %v4939 = vperm.slane %v4784, 1
        %v4940 = vperm.slane %v4784, 2
        %v4941 = vperm.slane %v4784, 3
        %v4942 = vperm.slane %v4785, 0
        %v4943 = vperm.slane %v4785, 1
        %v4944 = vperm.slane %v4785, 2
        %v4945 = vperm.slane %v4785, 3
        %v5074 = vmul.f32 %v3570, %v4818
        %v5075 = vmul.f32 %v3571, %v4819
        %v5076 = vmul.f32 %v3572, %v4820
        %v5077 = vmul.f32 %v3573, %v4821
        %v5078 = vmul.f32 %v3574, %v4822
        %v5079 = vmul.f32 %v3575, %v4823
        %v5080 = vmul.f32 %v3576, %v4824
        %v5081 = vmul.f32 %v3577, %v4825
        %v5082 = vmul.f32 %v3578, %v4826
        %v5083 = vmul.f32 %v3579, %v4827
        %v5084 = vmul.f32 %v3580, %v4828
        %v5085 = vmul.f32 %v3581, %v4829
        %v5086 = vmul.f32 %v3582, %v4830
        %v5087 = vmul.f32 %v3583, %v4831
        %v5088 = vmul.f32 %v3584, %v4832
        %v5089 = vmul.f32 %v3585, %v4833
        %v5090 = vmul.f32 %v3586, %v4834
        %v5091 = vmul.f32 %v3587, %v4835
        %v5092 = vmul.f32 %v3588, %v4836
        %v5093 = vmul.f32 %v3589, %v4837
        %v5094 = vmul.f32 %v3590, %v4838
        %v5095 = vmul.f32 %v3591, %v4839
        %v5096 = vmul.f32 %v3592, %v4840
        %v5097 = vmul.f32 %v3593, %v4841
        %v5098 = vmul.f32 %v3594, %v4842
        %v5099 = vmul.f32 %v3595, %v4843
        %v5100 = vmul.f32 %v3596, %v4844
        %v5101 = vmul.f32 %v3597, %v4845
        %v5102 = vmul.f32 %v3598, %v4846
        %v5103 = vmul.f32 %v3599, %v4847
        %v5104 = vmul.f32 %v3600, %v4848
        %v5105 = vmul.f32 %v3601, %v4849
        %v5106 = vmul.f32 %v3602, %v4850
        %v5107 = vmul.f32 %v3603, %v4851
        %v5108 = vmul.f32 %v3604, %v4852
        %v5109 = vmul.f32 %v3605, %v4853
        %v5110 = vmul.f32 %v3606, %v4854
        %v5111 = vmul.f32 %v3607, %v4855
        %v5112 = vmul.f32 %v3608, %v4856
        %v5113 = vmul.f32 %v3609, %v4857
        %v5114 = vmul.f32 %v3610, %v4858
        %v5115 = vmul.f32 %v3611, %v4859
        %v5116 = vmul.f32 %v3612, %v4860
        %v5117 = vmul.f32 %v3613, %v4861
        %v5118 = vmul.f32 %v3614, %v4862
        %v5119 = vmul.f32 %v3615, %v4863
        %v5120 = vmul.f32 %v3616, %v4864
        %v5121 = vmul.f32 %v3617, %v4865
        %v5122 = vmul.f32 %v3618, %v4866
        %v5123 = vmul.f32 %v3619, %v4867
        %v5124 = vmul.f32 %v3620, %v4868
        %v5125 = vmul.f32 %v3621, %v4869
        %v5126 = vmul.f32 %v3622, %v4870
        %v5127 = vmul.f32 %v3623, %v4871
        %v5128 = vmul.f32 %v3624, %v4872
        %v5129 = vmul.f32 %v3625, %v4873
        %v5130 = vmul.f32 %v3626, %v4874
        %v5131 = vmul.f32 %v3627, %v4875
        %v5132 = vmul.f32 %v3628, %v4876
        %v5133 = vmul.f32 %v3629, %v4877
        %v5134 = vmul.f32 %v3630, %v4878
        %v5135 = vmul.f32 %v3631, %v4879
        %v5136 = vmul.f32 %v3632, %v4880
        %v5137 = vmul.f32 %v3633, %v4881
        %v5138 = vmul.f32 %v3634, %v4882
        %v5139 = vmul.f32 %v3635, %v4883
        %v5140 = vmul.f32 %v3636, %v4884
        %v5141 = vmul.f32 %v3637, %v4885
        %v5142 = vmul.f32 %v3638, %v4886
        %v5143 = vmul.f32 %v3639, %v4887
        %v5144 = vmul.f32 %v3640, %v4888
        %v5145 = vmul.f32 %v3641, %v4889
        %v5146 = vmul.f32 %v3642, %v4890
        %v5147 = vmul.f32 %v3643, %v4891
        %v5148 = vmul.f32 %v3644, %v4892
        %v5149 = vmul.f32 %v3645, %v4893
        %v5150 = vmul.f32 %v3646, %v4894
        %v5151 = vmul.f32 %v3647, %v4895
        %v5152 = vmul.f32 %v3648, %v4896
        %v5153 = vmul.f32 %v3649, %v4897
        %v5154 = vmul.f32 %v3650, %v4898
        %v5155 = vmul.f32 %v3651, %v4899
        %v5156 = vmul.f32 %v3652, %v4900
        %v5157 = vmul.f32 %v3653, %v4901
        %v5158 = vmul.f32 %v3654, %v4902
        %v5159 = vmul.f32 %v3655, %v4903
        %v5160 = vmul.f32 %v3656, %v4904
        %v5161 = vmul.f32 %v3657, %v4905
        %v5162 = vmul.f32 %v3658, %v4906
        %v5163 = vmul.f32 %v3659, %v4907
        %v5164 = vmul.f32 %v3660, %v4908
        %v5165 = vmul.f32 %v3661, %v4909
        %v5166 = vmul.f32 %v3662, %v4910
        %v5167 = vmul.f32 %v3663, %v4911
        %v5168 = vmul.f32 %v3664, %v4912
        %v5169 = vmul.f32 %v3665, %v4913
        %v5170 = vmul.f32 %v3666, %v4914
        %v5171 = vmul.f32 %v3667, %v4915
        %v5172 = vmul.f32 %v3668, %v4916
        %v5173 = vmul.f32 %v3669, %v4917
        %v5174 = vmul.f32 %v3670, %v4918
        %v5175 = vmul.f32 %v3671, %v4919
        %v5176 = vmul.f32 %v3672, %v4920
        %v5177 = vmul.f32 %v3673, %v4921
        %v5178 = vmul.f32 %v3674, %v4922
        %v5179 = vmul.f32 %v3675, %v4923
        %v5180 = vmul.f32 %v3676, %v4924
        %v5181 = vmul.f32 %v3677, %v4925
        %v5182 = vmul.f32 %v3678, %v4926
        %v5183 = vmul.f32 %v3679, %v4927
        %v5184 = vmul.f32 %v3680, %v4928
        %v5185 = vmul.f32 %v3681, %v4929
        %v5186 = vmul.f32 %v3682, %v4930
        %v5187 = vmul.f32 %v3683, %v4931
        %v5188 = vmul.f32 %v3684, %v4932
        %v5189 = vmul.f32 %v3685, %v4933
        %v5190 = vmul.f32 %v3686, %v4934
        %v5191 = vmul.f32 %v3687, %v4935
        %v5192 = vmul.f32 %v3688, %v4936
        %v5193 = vmul.f32 %v3689, %v4937
        %v5194 = vmul.f32 %v3690, %v4938
        %v5195 = vmul.f32 %v3691, %v4939
        %v5196 = vmul.f32 %v3692, %v4940
        %v5197 = vmul.f32 %v3693, %v4941
        %v5198 = vmul.f32 %v3694, %v4942
        %v5199 = vmul.f32 %v3695, %v4943
        %v5200 = vmul.f32 %v3696, %v4944
        %v5201 = vmul.f32 %v3697, %v4945
        %5203 = vset.pattern.permute.xlu0 0
        %5204 = vperm.xlu0 %5203, %v5074
        %v5205 = vpop.permute.xlu0 %5204
        %5208 = vset.pattern.permute.xlu0 0
        %5209 = vperm.xlu0 %5208, %v5075
        %v5210 = vpop.permute.xlu0 %5209
        %5213 = vset.pattern.permute.xlu0 0
        %5214 = vperm.xlu0 %5213, %v5076
        %v5215 = vpop.permute.xlu0 %5214
        %5218 = vset.pattern.permute.xlu0 0
        %5219 = vperm.xlu0 %5218, %v5077
        %v5220 = vpop.permute.xlu0 %5219
        %5223 = vset.pattern.permute.xlu0 0
        %5224 = vperm.xlu0 %5223, %v5090
        %v5225 = vpop.permute.xlu0 %5224
        %5228 = vset.pattern.permute.xlu0 0
        %5229 = vperm.xlu0 %5228, %v5091
        %v5230 = vpop.permute.xlu0 %5229
        %5233 = vset.pattern.permute.xlu0 0
        %5234 = vperm.xlu0 %5233, %v5092
        %v5235 = vpop.permute.xlu0 %5234
        %5238 = vset.pattern.permute.xlu0 0
        %5239 = vperm.xlu0 %5238, %v5093
        %v5240 = vpop.permute.xlu0 %5239
        %5243 = vset.pattern.permute.xlu0 0
        %5244 = vperm.xlu0 %5243, %v5106
        %v5245 = vpop.permute.xlu0 %5244
        %5248 = vset.pattern.permute.xlu0 0
        %5249 = vperm.xlu0 %5248, %v5107
        %v5250 = vpop.permute.xlu0 %5249
        %5253 = vset.pattern.permute.xlu0 0
        %5254 = vperm.xlu0 %5253, %v5108
        %v5255 = vpop.permute.xlu0 %5254
        %5258 = vset.pattern.permute.xlu0 0
        %5259 = vperm.xlu0 %5258, %v5109
        %v5260 = vpop.permute.xlu0 %5259
        %5263 = vset.pattern.permute.xlu0 0
        %5264 = vperm.xlu0 %5263, %v5122
        %v5265 = vpop.permute.xlu0 %5264
        %5268 = vset.pattern.permute.xlu0 0
        %5269 = vperm.xlu0 %5268, %v5123
        %v5270 = vpop.permute.xlu0 %5269
        %5273 = vset.pattern.permute.xlu0 0
        %5274 = vperm.xlu0 %5273, %v5124
        %v5275 = vpop.permute.xlu0 %5274
        %5278 = vset.pattern.permute.xlu0 0
        %5279 = vperm.xlu0 %5278, %v5125
        %v5280 = vpop.permute.xlu0 %5279
        %5283 = vset.pattern.permute.xlu0 0
        %5284 = vperm.xlu0 %5283, %v5138
        %v5285 = vpop.permute.xlu0 %5284
        %5288 = vset.pattern.permute.xlu0 0
        %5289 = vperm.xlu0 %5288, %v5139
        %v5290 = vpop.permute.xlu0 %5289
        %5293 = vset.pattern.permute.xlu0 0
        %5294 = vperm.xlu0 %5293, %v5140
        %v5295 = vpop.permute.xlu0 %5294
        %5298 = vset.pattern.permute.xlu0 0
        %5299 = vperm.xlu0 %5298, %v5141
        %v5300 = vpop.permute.xlu0 %5299
        %5303 = vset.pattern.permute.xlu0 0
        %5304 = vperm.xlu0 %5303, %v5154
        %v5305 = vpop.permute.xlu0 %5304
        %5308 = vset.pattern.permute.xlu0 0
        %5309 = vperm.xlu0 %5308, %v5155
        %v5310 = vpop.permute.xlu0 %5309
        %5313 = vset.pattern.permute.xlu0 0
        %5314 = vperm.xlu0 %5313, %v5156
        %v5315 = vpop.permute.xlu0 %5314
        %5318 = vset.pattern.permute.xlu0 0
        %5319 = vperm.xlu0 %5318, %v5157
        %v5320 = vpop.permute.xlu0 %5319
        %5323 = vset.pattern.permute.xlu0 0
        %5324 = vperm.xlu0 %5323, %v5170
        %v5325 = vpop.permute.xlu0 %5324
        %5328 = vset.pattern.permute.xlu0 0
        %5329 = vperm.xlu0 %5328, %v5171
        %v5330 = vpop.permute.xlu0 %5329
        %5333 = vset.pattern.permute.xlu0 0
        %5334 = vperm.xlu0 %5333, %v5172
        %v5335 = vpop.permute.xlu0 %5334
        %5338 = vset.pattern.permute.xlu0 0
        %5339 = vperm.xlu0 %5338, %v5173
        %v5340 = vpop.permute.xlu0 %5339
        %5343 = vset.pattern.permute.xlu0 0
        %5344 = vperm.xlu0 %5343, %v5186
        %v5345 = vpop.permute.xlu0 %5344
        %5348 = vset.pattern.permute.xlu0 0
        %5349 = vperm.xlu0 %5348, %v5187
        %v5350 = vpop.permute.xlu0 %5349
        %5353 = vset.pattern.permute.xlu0 0
        %5354 = vperm.xlu0 %5353, %v5188
        %v5355 = vpop.permute.xlu0 %5354
        %5358 = vset.pattern.permute.xlu0 0
        %5359 = vperm.xlu0 %5358, %v5189
        %v5360 = vpop.permute.xlu0 %5359
        %v5362 = vmul.f32 %v5205, %v391
        %v5363 = vmul.f32 %v5210, %v391
        %v5364 = vmul.f32 %v5215, %v391
        %v5365 = vmul.f32 %v5220, %v391
        %v5366 = vmul.f32 %v5225, %v393
        %v5367 = vmul.f32 %v5230, %v393
        %v5368 = vmul.f32 %v5235, %v393
        %v5369 = vmul.f32 %v5240, %v393
        %v5370 = vmul.f32 %v5245, %v396
        %v5371 = vmul.f32 %v5250, %v396
        %v5372 = vmul.f32 %v5255, %v396
        %v5373 = vmul.f32 %v5260, %v396
        %v5374 = vmul.f32 %v5265, %v398
        %v5375 = vmul.f32 %v5270, %v398
        %v5376 = vmul.f32 %v5275, %v398
        %v5377 = vmul.f32 %v5280, %v398
        %v5378 = vmul.f32 %v5285, %v401
        %v5379 = vmul.f32 %v5290, %v401
        %v5380 = vmul.f32 %v5295, %v401
        %v5381 = vmul.f32 %v5300, %v401
        %v5382 = vmul.f32 %v5305, %v403
        %v5383 = vmul.f32 %v5310, %v403
        %v5384 = vmul.f32 %v5315, %v403
        %v5385 = vmul.f32 %v5320, %v403
        %v5386 = vmul.f32 %v5325, %v406
        %v5387 = vmul.f32 %v5330, %v406
        %v5388 = vmul.f32 %v5335, %v406
        %v5389 = vmul.f32 %v5340, %v406
        %v5390 = vmul.f32 %v5345, %v408
        %v5391 = vmul.f32 %v5350, %v408
        %v5392 = vmul.f32 %v5355, %v408
        %v5393 = vmul.f32 %v5360, %v408
        %vm5394 = vcmask 326912
        %v5395 = vsel %vm5394, %v5362, 0.0
        %v5396 = vrot.slane %v5395, 4
        %v5397 = vadd.f32 %v5395, %v5396
        %v5398 = vrot.slane %v5397, 2
        %v5399 = vadd.f32 %v5397, %v5398
        %v5400 = vrot.slane %v5399, 1
        %v5401 = vadd.f32 %v5399, %v5400
        %v5402 = vsel %vm5394, %v5363, 0.0
        %v5403 = vrot.slane %v5402, 4
        %v5404 = vadd.f32 %v5402, %v5403
        %v5405 = vrot.slane %v5404, 2
        %v5406 = vadd.f32 %v5404, %v5405
        %v5407 = vrot.slane %v5406, 1
        %v5408 = vadd.f32 %v5406, %v5407
        %v5409 = vsel %vm5394, %v5364, 0.0
        %v5410 = vrot.slane %v5409, 4
        %v5411 = vadd.f32 %v5409, %v5410
        %v5412 = vrot.slane %v5411, 2
        %v5413 = vadd.f32 %v5411, %v5412
        %v5414 = vrot.slane %v5413, 1
        %v5415 = vadd.f32 %v5413, %v5414
        %v5416 = vsel %vm5394, %v5365, 0.0
        %v5417 = vrot.slane %v5416, 4
        %v5418 = vadd.f32 %v5416, %v5417
        %v5419 = vrot.slane %v5418, 2
        %v5420 = vadd.f32 %v5418, %v5419
        %v5421 = vrot.slane %v5420, 1
        %v5422 = vadd.f32 %v5420, %v5421
        %v5423 = vsel %vm5394, %v5366, 0.0
        %v5424 = vrot.slane %v5423, 4
        %v5425 = vadd.f32 %v5423, %v5424
        %v5426 = vrot.slane %v5425, 2
        %v5427 = vadd.f32 %v5425, %v5426
        %v5428 = vrot.slane %v5427, 1
        %v5429 = vadd.f32 %v5427, %v5428
        %v5430 = vsel %vm5394, %v5367, 0.0
        %v5431 = vrot.slane %v5430, 4
        %v5432 = vadd.f32 %v5430, %v5431
        %v5433 = vrot.slane %v5432, 2
        %v5434 = vadd.f32 %v5432, %v5433
        %v5435 = vrot.slane %v5434, 1
        %v5436 = vadd.f32 %v5434, %v5435
        %v5437 = vsel %vm5394, %v5368, 0.0
        %v5438 = vrot.slane %v5437, 4
        %v5439 = vadd.f32 %v5437, %v5438
        %v5440 = vrot.slane %v5439, 2
        %v5441 = vadd.f32 %v5439, %v5440
        %v5442 = vrot.slane %v5441, 1
        %v5443 = vadd.f32 %v5441, %v5442
        %v5444 = vsel %vm5394, %v5369, 0.0
        %v5445 = vrot.slane %v5444, 4
        %v5446 = vadd.f32 %v5444, %v5445
        %v5447 = vrot.slane %v5446, 2
        %v5448 = vadd.f32 %v5446, %v5447
        %v5449 = vrot.slane %v5448, 1
        %v5450 = vadd.f32 %v5448, %v5449
        %v5451 = vsel %vm5394, %v5370, 0.0
        %v5452 = vrot.slane %v5451, 4
        %v5453 = vadd.f32 %v5451, %v5452
        %v5454 = vrot.slane %v5453, 2
        %v5455 = vadd.f32 %v5453, %v5454
        %v5456 = vrot.slane %v5455, 1
        %v5457 = vadd.f32 %v5455, %v5456
        %v5458 = vsel %vm5394, %v5371, 0.0
        %v5459 = vrot.slane %v5458, 4
        %v5460 = vadd.f32 %v5458, %v5459
        %v5461 = vrot.slane %v5460, 2
        %v5462 = vadd.f32 %v5460, %v5461
        %v5463 = vrot.slane %v5462, 1
        %v5464 = vadd.f32 %v5462, %v5463
        %v5465 = vsel %vm5394, %v5372, 0.0
        %v5466 = vrot.slane %v5465, 4
        %v5467 = vadd.f32 %v5465, %v5466
        %v5468 = vrot.slane %v5467, 2
        %v5469 = vadd.f32 %v5467, %v5468
        %v5470 = vrot.slane %v5469, 1
        %v5471 = vadd.f32 %v5469, %v5470
        %v5472 = vsel %vm5394, %v5373, 0.0
        %v5473 = vrot.slane %v5472, 4
        %v5474 = vadd.f32 %v5472, %v5473
        %v5475 = vrot.slane %v5474, 2
        %v5476 = vadd.f32 %v5474, %v5475
        %v5477 = vrot.slane %v5476, 1
        %v5478 = vadd.f32 %v5476, %v5477
        %v5479 = vsel %vm5394, %v5374, 0.0
        %v5480 = vrot.slane %v5479, 4
        %v5481 = vadd.f32 %v5479, %v5480
        %v5482 = vrot.slane %v5481, 2
        %v5483 = vadd.f32 %v5481, %v5482
        %v5484 = vrot.slane %v5483, 1
        %v5485 = vadd.f32 %v5483, %v5484
        %v5486 = vsel %vm5394, %v5375, 0.0
        %v5487 = vrot.slane %v5486, 4
        %v5488 = vadd.f32 %v5486, %v5487
        %v5489 = vrot.slane %v5488, 2
        %v5490 = vadd.f32 %v5488, %v5489
        %v5491 = vrot.slane %v5490, 1
        %v5492 = vadd.f32 %v5490, %v5491
        %v5493 = vsel %vm5394, %v5376, 0.0
        %v5494 = vrot.slane %v5493, 4
        %v5495 = vadd.f32 %v5493, %v5494
        %v5496 = vrot.slane %v5495, 2
        %v5497 = vadd.f32 %v5495, %v5496
        %v5498 = vrot.slane %v5497, 1
        %v5499 = vadd.f32 %v5497, %v5498
        %v5500 = vsel %vm5394, %v5377, 0.0
        %v5501 = vrot.slane %v5500, 4
        %v5502 = vadd.f32 %v5500, %v5501
        %v5503 = vrot.slane %v5502, 2
        %v5504 = vadd.f32 %v5502, %v5503
        %v5505 = vrot.slane %v5504, 1
        %v5506 = vadd.f32 %v5504, %v5505
        %v5507 = vsel %vm5394, %v5378, 0.0
        %v5508 = vrot.slane %v5507, 4
        %v5509 = vadd.f32 %v5507, %v5508
        %v5510 = vrot.slane %v5509, 2
        %v5511 = vadd.f32 %v5509, %v5510
        %v5512 = vrot.slane %v5511, 1
        %v5513 = vadd.f32 %v5511, %v5512
        %v5514 = vsel %vm5394, %v5379, 0.0
        %v5515 = vrot.slane %v5514, 4
        %v5516 = vadd.f32 %v5514, %v5515
        %v5517 = vrot.slane %v5516, 2
        %v5518 = vadd.f32 %v5516, %v5517
        %v5519 = vrot.slane %v5518, 1
        %v5520 = vadd.f32 %v5518, %v5519
        %v5521 = vsel %vm5394, %v5380, 0.0
        %v5522 = vrot.slane %v5521, 4
        %v5523 = vadd.f32 %v5521, %v5522
        %v5524 = vrot.slane %v5523, 2
        %v5525 = vadd.f32 %v5523, %v5524
        %v5526 = vrot.slane %v5525, 1
        %v5527 = vadd.f32 %v5525, %v5526
        %v5528 = vsel %vm5394, %v5381, 0.0
        %v5529 = vrot.slane %v5528, 4
        %v5530 = vadd.f32 %v5528, %v5529
        %v5531 = vrot.slane %v5530, 2
        %v5532 = vadd.f32 %v5530, %v5531
        %v5533 = vrot.slane %v5532, 1
        %v5534 = vadd.f32 %v5532, %v5533
        %v5535 = vsel %vm5394, %v5382, 0.0
        %v5536 = vrot.slane %v5535, 4
        %v5537 = vadd.f32 %v5535, %v5536
        %v5538 = vrot.slane %v5537, 2
        %v5539 = vadd.f32 %v5537, %v5538
        %v5540 = vrot.slane %v5539, 1
        %v5541 = vadd.f32 %v5539, %v5540
        %v5542 = vsel %vm5394, %v5383, 0.0
        %v5543 = vrot.slane %v5542, 4
        %v5544 = vadd.f32 %v5542, %v5543
        %v5545 = vrot.slane %v5544, 2
        %v5546 = vadd.f32 %v5544, %v5545
        %v5547 = vrot.slane %v5546, 1
        %v5548 = vadd.f32 %v5546, %v5547
        %v5549 = vsel %vm5394, %v5384, 0.0
        %v5550 = vrot.slane %v5549, 4
        %v5551 = vadd.f32 %v5549, %v5550
        %v5552 = vrot.slane %v5551, 2
        %v5553 = vadd.f32 %v5551, %v5552
        %v5554 = vrot.slane %v5553, 1
        %v5555 = vadd.f32 %v5553, %v5554
        %v5556 = vsel %vm5394, %v5385, 0.0
        %v5557 = vrot.slane %v5556, 4
        %v5558 = vadd.f32 %v5556, %v5557
        %v5559 = vrot.slane %v5558, 2
        %v5560 = vadd.f32 %v5558, %v5559
        %v5561 = vrot.slane %v5560, 1
        %v5562 = vadd.f32 %v5560, %v5561
        %v5563 = vsel %vm5394, %v5386, 0.0
        %v5564 = vrot.slane %v5563, 4
        %v5565 = vadd.f32 %v5563, %v5564
        %v5566 = vrot.slane %v5565, 2
        %v5567 = vadd.f32 %v5565, %v5566
        %v5568 = vrot.slane %v5567, 1
        %v5569 = vadd.f32 %v5567, %v5568
        %v5570 = vsel %vm5394, %v5387, 0.0
        %v5571 = vrot.slane %v5570, 4
        %v5572 = vadd.f32 %v5570, %v5571
        %v5573 = vrot.slane %v5572, 2
        %v5574 = vadd.f32 %v5572, %v5573
        %v5575 = vrot.slane %v5574, 1
        %v5576 = vadd.f32 %v5574, %v5575
        %v5577 = vsel %vm5394, %v5388, 0.0
        %v5578 = vrot.slane %v5577, 4
        %v5579 = vadd.f32 %v5577, %v5578
        %v5580 = vrot.slane %v5579, 2
        %v5581 = vadd.f32 %v5579, %v5580
        %v5582 = vrot.slane %v5581, 1
        %v5583 = vadd.f32 %v5581, %v5582
        %v5584 = vsel %vm5394, %v5389, 0.0
        %v5585 = vrot.slane %v5584, 4
        %v5586 = vadd.f32 %v5584, %v5585
        %v5587 = vrot.slane %v5586, 2
        %v5588 = vadd.f32 %v5586, %v5587
        %v5589 = vrot.slane %v5588, 1
        %v5590 = vadd.f32 %v5588, %v5589
        %v5591 = vsel %vm5394, %v5390, 0.0
        %v5592 = vrot.slane %v5591, 4
        %v5593 = vadd.f32 %v5591, %v5592
        %v5594 = vrot.slane %v5593, 2
        %v5595 = vadd.f32 %v5593, %v5594
        %v5596 = vrot.slane %v5595, 1
        %v5597 = vadd.f32 %v5595, %v5596
        %v5598 = vsel %vm5394, %v5391, 0.0
        %v5599 = vrot.slane %v5598, 4
        %v5600 = vadd.f32 %v5598, %v5599
        %v5601 = vrot.slane %v5600, 2
        %v5602 = vadd.f32 %v5600, %v5601
        %v5603 = vrot.slane %v5602, 1
        %v5604 = vadd.f32 %v5602, %v5603
        %v5605 = vsel %vm5394, %v5392, 0.0
        %v5606 = vrot.slane %v5605, 4
        %v5607 = vadd.f32 %v5605, %v5606
        %v5608 = vrot.slane %v5607, 2
        %v5609 = vadd.f32 %v5607, %v5608
        %v5610 = vrot.slane %v5609, 1
        %v5611 = vadd.f32 %v5609, %v5610
        %v5612 = vsel %vm5394, %v5393, 0.0
        %v5613 = vrot.slane %v5612, 4
        %v5614 = vadd.f32 %v5612, %v5613
        %v5615 = vrot.slane %v5614, 2
        %v5616 = vadd.f32 %v5614, %v5615
        %v5617 = vrot.slane %v5616, 1
        %v5618 = vadd.f32 %v5616, %v5617
        %5620 = vset.pattern.permute.xlu0 0
        %5621 = vperm.xlu0 %5620, %v5078
        %v5622 = vpop.permute.xlu0 %5621
        %5625 = vset.pattern.permute.xlu0 0
        %5626 = vperm.xlu0 %5625, %v5079
        %v5627 = vpop.permute.xlu0 %5626
        %5630 = vset.pattern.permute.xlu0 0
        %5631 = vperm.xlu0 %5630, %v5080
        %v5632 = vpop.permute.xlu0 %5631
        %5635 = vset.pattern.permute.xlu0 0
        %5636 = vperm.xlu0 %5635, %v5081
        %v5637 = vpop.permute.xlu0 %5636
        %5640 = vset.pattern.permute.xlu0 0
        %5641 = vperm.xlu0 %5640, %v5094
        %v5642 = vpop.permute.xlu0 %5641
        %5645 = vset.pattern.permute.xlu0 0
        %5646 = vperm.xlu0 %5645, %v5095
        %v5647 = vpop.permute.xlu0 %5646
        %5650 = vset.pattern.permute.xlu0 0
        %5651 = vperm.xlu0 %5650, %v5096
        %v5652 = vpop.permute.xlu0 %5651
        %5655 = vset.pattern.permute.xlu0 0
        %5656 = vperm.xlu0 %5655, %v5097
        %v5657 = vpop.permute.xlu0 %5656
        %5660 = vset.pattern.permute.xlu0 0
        %5661 = vperm.xlu0 %5660, %v5110
        %v5662 = vpop.permute.xlu0 %5661
        %5665 = vset.pattern.permute.xlu0 0
        %5666 = vperm.xlu0 %5665, %v5111
        %v5667 = vpop.permute.xlu0 %5666
        %5670 = vset.pattern.permute.xlu0 0
        %5671 = vperm.xlu0 %5670, %v5112
        %v5672 = vpop.permute.xlu0 %5671
        %5675 = vset.pattern.permute.xlu0 0
        %5676 = vperm.xlu0 %5675, %v5113
        %v5677 = vpop.permute.xlu0 %5676
        %5680 = vset.pattern.permute.xlu0 0
        %5681 = vperm.xlu0 %5680, %v5126
        %v5682 = vpop.permute.xlu0 %5681
        %5685 = vset.pattern.permute.xlu0 0
        %5686 = vperm.xlu0 %5685, %v5127
        %v5687 = vpop.permute.xlu0 %5686
        %5690 = vset.pattern.permute.xlu0 0
        %5691 = vperm.xlu0 %5690, %v5128
        %v5692 = vpop.permute.xlu0 %5691
        %5695 = vset.pattern.permute.xlu0 0
        %5696 = vperm.xlu0 %5695, %v5129
        %v5697 = vpop.permute.xlu0 %5696
        %5700 = vset.pattern.permute.xlu0 0
        %5701 = vperm.xlu0 %5700, %v5142
        %v5702 = vpop.permute.xlu0 %5701
        %5705 = vset.pattern.permute.xlu0 0
        %5706 = vperm.xlu0 %5705, %v5143
        %v5707 = vpop.permute.xlu0 %5706
        %5710 = vset.pattern.permute.xlu0 0
        %5711 = vperm.xlu0 %5710, %v5144
        %v5712 = vpop.permute.xlu0 %5711
        %5715 = vset.pattern.permute.xlu0 0
        %5716 = vperm.xlu0 %5715, %v5145
        %v5717 = vpop.permute.xlu0 %5716
        %5720 = vset.pattern.permute.xlu0 0
        %5721 = vperm.xlu0 %5720, %v5158
        %v5722 = vpop.permute.xlu0 %5721
        %5725 = vset.pattern.permute.xlu0 0
        %5726 = vperm.xlu0 %5725, %v5159
        %v5727 = vpop.permute.xlu0 %5726
        %5730 = vset.pattern.permute.xlu0 0
        %5731 = vperm.xlu0 %5730, %v5160
        %v5732 = vpop.permute.xlu0 %5731
        %5735 = vset.pattern.permute.xlu0 0
        %5736 = vperm.xlu0 %5735, %v5161
        %v5737 = vpop.permute.xlu0 %5736
        %5740 = vset.pattern.permute.xlu0 0
        %5741 = vperm.xlu0 %5740, %v5174
        %v5742 = vpop.permute.xlu0 %5741
        %5745 = vset.pattern.permute.xlu0 0
        %5746 = vperm.xlu0 %5745, %v5175
        %v5747 = vpop.permute.xlu0 %5746
        %5750 = vset.pattern.permute.xlu0 0
        %5751 = vperm.xlu0 %5750, %v5176
        %v5752 = vpop.permute.xlu0 %5751
        %5755 = vset.pattern.permute.xlu0 0
        %5756 = vperm.xlu0 %5755, %v5177
        %v5757 = vpop.permute.xlu0 %5756
        %5760 = vset.pattern.permute.xlu0 0
        %5761 = vperm.xlu0 %5760, %v5190
        %v5762 = vpop.permute.xlu0 %5761
        %5765 = vset.pattern.permute.xlu0 0
        %5766 = vperm.xlu0 %5765, %v5191
        %v5767 = vpop.permute.xlu0 %5766
        %5770 = vset.pattern.permute.xlu0 0
        %5771 = vperm.xlu0 %5770, %v5192
        %v5772 = vpop.permute.xlu0 %5771
        %5775 = vset.pattern.permute.xlu0 0
        %5776 = vperm.xlu0 %5775, %v5193
        %v5777 = vpop.permute.xlu0 %5776
        %v5779 = vmul.f32 %v5622, %v391
        %v5780 = vmul.f32 %v5627, %v391
        %v5781 = vmul.f32 %v5632, %v391
        %v5782 = vmul.f32 %v5637, %v391
        %v5783 = vmul.f32 %v5642, %v393
        %v5784 = vmul.f32 %v5647, %v393
        %v5785 = vmul.f32 %v5652, %v393
        %v5786 = vmul.f32 %v5657, %v393
        %v5787 = vmul.f32 %v5662, %v396
        %v5788 = vmul.f32 %v5667, %v396
        %v5789 = vmul.f32 %v5672, %v396
        %v5790 = vmul.f32 %v5677, %v396
        %v5791 = vmul.f32 %v5682, %v398
        %v5792 = vmul.f32 %v5687, %v398
        %v5793 = vmul.f32 %v5692, %v398
        %v5794 = vmul.f32 %v5697, %v398
        %v5795 = vmul.f32 %v5702, %v401
        %v5796 = vmul.f32 %v5707, %v401
        %v5797 = vmul.f32 %v5712, %v401
        %v5798 = vmul.f32 %v5717, %v401
        %v5799 = vmul.f32 %v5722, %v403
        %v5800 = vmul.f32 %v5727, %v403
        %v5801 = vmul.f32 %v5732, %v403
        %v5802 = vmul.f32 %v5737, %v403
        %v5803 = vmul.f32 %v5742, %v406
        %v5804 = vmul.f32 %v5747, %v406
        %v5805 = vmul.f32 %v5752, %v406
        %v5806 = vmul.f32 %v5757, %v406
        %v5807 = vmul.f32 %v5762, %v408
        %v5808 = vmul.f32 %v5767, %v408
        %v5809 = vmul.f32 %v5772, %v408
        %v5810 = vmul.f32 %v5777, %v408
        %vm5811 = vcmask 392512
        %v5812 = vsel %vm5811, %v5779, 0.0
        %v5813 = vrot.slane %v5812, 4
        %v5814 = vadd.f32 %v5812, %v5813
        %v5815 = vrot.slane %v5814, 2
        %v5816 = vadd.f32 %v5814, %v5815
        %v5817 = vrot.slane %v5816, 1
        %v5818 = vadd.f32 %v5816, %v5817
        %v5819 = vsel %vm5811, %v5780, 0.0
        %v5820 = vrot.slane %v5819, 4
        %v5821 = vadd.f32 %v5819, %v5820
        %v5822 = vrot.slane %v5821, 2
        %v5823 = vadd.f32 %v5821, %v5822
        %v5824 = vrot.slane %v5823, 1
        %v5825 = vadd.f32 %v5823, %v5824
        %v5826 = vsel %vm5811, %v5781, 0.0
        %v5827 = vrot.slane %v5826, 4
        %v5828 = vadd.f32 %v5826, %v5827
        %v5829 = vrot.slane %v5828, 2
        %v5830 = vadd.f32 %v5828, %v5829
        %v5831 = vrot.slane %v5830, 1
        %v5832 = vadd.f32 %v5830, %v5831
        %v5833 = vsel %vm5811, %v5782, 0.0
        %v5834 = vrot.slane %v5833, 4
        %v5835 = vadd.f32 %v5833, %v5834
        %v5836 = vrot.slane %v5835, 2
        %v5837 = vadd.f32 %v5835, %v5836
        %v5838 = vrot.slane %v5837, 1
        %v5839 = vadd.f32 %v5837, %v5838
        %v5840 = vsel %vm5811, %v5783, 0.0
        %v5841 = vrot.slane %v5840, 4
        %v5842 = vadd.f32 %v5840, %v5841
        %v5843 = vrot.slane %v5842, 2
        %v5844 = vadd.f32 %v5842, %v5843
        %v5845 = vrot.slane %v5844, 1
        %v5846 = vadd.f32 %v5844, %v5845
        %v5847 = vsel %vm5811, %v5784, 0.0
        %v5848 = vrot.slane %v5847, 4
        %v5849 = vadd.f32 %v5847, %v5848
        %v5850 = vrot.slane %v5849, 2
        %v5851 = vadd.f32 %v5849, %v5850
        %v5852 = vrot.slane %v5851, 1
        %v5853 = vadd.f32 %v5851, %v5852
        %v5854 = vsel %vm5811, %v5785, 0.0
        %v5855 = vrot.slane %v5854, 4
        %v5856 = vadd.f32 %v5854, %v5855
        %v5857 = vrot.slane %v5856, 2
        %v5858 = vadd.f32 %v5856, %v5857
        %v5859 = vrot.slane %v5858, 1
        %v5860 = vadd.f32 %v5858, %v5859
        %v5861 = vsel %vm5811, %v5786, 0.0
        %v5862 = vrot.slane %v5861, 4
        %v5863 = vadd.f32 %v5861, %v5862
        %v5864 = vrot.slane %v5863, 2
        %v5865 = vadd.f32 %v5863, %v5864
        %v5866 = vrot.slane %v5865, 1
        %v5867 = vadd.f32 %v5865, %v5866
        %v5868 = vsel %vm5811, %v5787, 0.0
        %v5869 = vrot.slane %v5868, 4
        %v5870 = vadd.f32 %v5868, %v5869
        %v5871 = vrot.slane %v5870, 2
        %v5872 = vadd.f32 %v5870, %v5871
        %v5873 = vrot.slane %v5872, 1
        %v5874 = vadd.f32 %v5872, %v5873
        %v5875 = vsel %vm5811, %v5788, 0.0
        %v5876 = vrot.slane %v5875, 4
        %v5877 = vadd.f32 %v5875, %v5876
        %v5878 = vrot.slane %v5877, 2
        %v5879 = vadd.f32 %v5877, %v5878
        %v5880 = vrot.slane %v5879, 1
        %v5881 = vadd.f32 %v5879, %v5880
        %v5882 = vsel %vm5811, %v5789, 0.0
        %v5883 = vrot.slane %v5882, 4
        %v5884 = vadd.f32 %v5882, %v5883
        %v5885 = vrot.slane %v5884, 2
        %v5886 = vadd.f32 %v5884, %v5885
        %v5887 = vrot.slane %v5886, 1
        %v5888 = vadd.f32 %v5886, %v5887
        %v5889 = vsel %vm5811, %v5790, 0.0
        %v5890 = vrot.slane %v5889, 4
        %v5891 = vadd.f32 %v5889, %v5890
        %v5892 = vrot.slane %v5891, 2
        %v5893 = vadd.f32 %v5891, %v5892
        %v5894 = vrot.slane %v5893, 1
        %v5895 = vadd.f32 %v5893, %v5894
        %v5896 = vsel %vm5811, %v5791, 0.0
        %v5897 = vrot.slane %v5896, 4
        %v5898 = vadd.f32 %v5896, %v5897
        %v5899 = vrot.slane %v5898, 2
        %v5900 = vadd.f32 %v5898, %v5899
        %v5901 = vrot.slane %v5900, 1
        %v5902 = vadd.f32 %v5900, %v5901
        %v5903 = vsel %vm5811, %v5792, 0.0
        %v5904 = vrot.slane %v5903, 4
        %v5905 = vadd.f32 %v5903, %v5904
        %v5906 = vrot.slane %v5905, 2
        %v5907 = vadd.f32 %v5905, %v5906
        %v5908 = vrot.slane %v5907, 1
        %v5909 = vadd.f32 %v5907, %v5908
        %v5910 = vsel %vm5811, %v5793, 0.0
        %v5911 = vrot.slane %v5910, 4
        %v5912 = vadd.f32 %v5910, %v5911
        %v5913 = vrot.slane %v5912, 2
        %v5914 = vadd.f32 %v5912, %v5913
        %v5915 = vrot.slane %v5914, 1
        %v5916 = vadd.f32 %v5914, %v5915
        %v5917 = vsel %vm5811, %v5794, 0.0
        %v5918 = vrot.slane %v5917, 4
        %v5919 = vadd.f32 %v5917, %v5918
        %v5920 = vrot.slane %v5919, 2
        %v5921 = vadd.f32 %v5919, %v5920
        %v5922 = vrot.slane %v5921, 1
        %v5923 = vadd.f32 %v5921, %v5922
        %v5924 = vsel %vm5811, %v5795, 0.0
        %v5925 = vrot.slane %v5924, 4
        %v5926 = vadd.f32 %v5924, %v5925
        %v5927 = vrot.slane %v5926, 2
        %v5928 = vadd.f32 %v5926, %v5927
        %v5929 = vrot.slane %v5928, 1
        %v5930 = vadd.f32 %v5928, %v5929
        %v5931 = vsel %vm5811, %v5796, 0.0
        %v5932 = vrot.slane %v5931, 4
        %v5933 = vadd.f32 %v5931, %v5932
        %v5934 = vrot.slane %v5933, 2
        %v5935 = vadd.f32 %v5933, %v5934
        %v5936 = vrot.slane %v5935, 1
        %v5937 = vadd.f32 %v5935, %v5936
        %v5938 = vsel %vm5811, %v5797, 0.0
        %v5939 = vrot.slane %v5938, 4
        %v5940 = vadd.f32 %v5938, %v5939
        %v5941 = vrot.slane %v5940, 2
        %v5942 = vadd.f32 %v5940, %v5941
        %v5943 = vrot.slane %v5942, 1
        %v5944 = vadd.f32 %v5942, %v5943
        %v5945 = vsel %vm5811, %v5798, 0.0
        %v5946 = vrot.slane %v5945, 4
        %v5947 = vadd.f32 %v5945, %v5946
        %v5948 = vrot.slane %v5947, 2
        %v5949 = vadd.f32 %v5947, %v5948
        %v5950 = vrot.slane %v5949, 1
        %v5951 = vadd.f32 %v5949, %v5950
        %v5952 = vsel %vm5811, %v5799, 0.0
        %v5953 = vrot.slane %v5952, 4
        %v5954 = vadd.f32 %v5952, %v5953
        %v5955 = vrot.slane %v5954, 2
        %v5956 = vadd.f32 %v5954, %v5955
        %v5957 = vrot.slane %v5956, 1
        %v5958 = vadd.f32 %v5956, %v5957
        %v5959 = vsel %vm5811, %v5800, 0.0
        %v5960 = vrot.slane %v5959, 4
        %v5961 = vadd.f32 %v5959, %v5960
        %v5962 = vrot.slane %v5961, 2
        %v5963 = vadd.f32 %v5961, %v5962
        %v5964 = vrot.slane %v5963, 1
        %v5965 = vadd.f32 %v5963, %v5964
        %v5966 = vsel %vm5811, %v5801, 0.0
        %v5967 = vrot.slane %v5966, 4
        %v5968 = vadd.f32 %v5966, %v5967
        %v5969 = vrot.slane %v5968, 2
        %v5970 = vadd.f32 %v5968, %v5969
        %v5971 = vrot.slane %v5970, 1
        %v5972 = vadd.f32 %v5970, %v5971
        %v5973 = vsel %vm5811, %v5802, 0.0
        %v5974 = vrot.slane %v5973, 4
        %v5975 = vadd.f32 %v5973, %v5974
        %v5976 = vrot.slane %v5975, 2
        %v5977 = vadd.f32 %v5975, %v5976
        %v5978 = vrot.slane %v5977, 1
        %v5979 = vadd.f32 %v5977, %v5978
        %v5980 = vsel %vm5811, %v5803, 0.0
        %v5981 = vrot.slane %v5980, 4
        %v5982 = vadd.f32 %v5980, %v5981
        %v5983 = vrot.slane %v5982, 2
        %v5984 = vadd.f32 %v5982, %v5983
        %v5985 = vrot.slane %v5984, 1
        %v5986 = vadd.f32 %v5984, %v5985
        %v5987 = vsel %vm5811, %v5804, 0.0
        %v5988 = vrot.slane %v5987, 4
        %v5989 = vadd.f32 %v5987, %v5988
        %v5990 = vrot.slane %v5989, 2
        %v5991 = vadd.f32 %v5989, %v5990
        %v5992 = vrot.slane %v5991, 1
        %v5993 = vadd.f32 %v5991, %v5992
        %v5994 = vsel %vm5811, %v5805, 0.0
        %v5995 = vrot.slane %v5994, 4
        %v5996 = vadd.f32 %v5994, %v5995
        %v5997 = vrot.slane %v5996, 2
        %v5998 = vadd.f32 %v5996, %v5997
        %v5999 = vrot.slane %v5998, 1
        %v6000 = vadd.f32 %v5998, %v5999
        %v6001 = vsel %vm5811, %v5806, 0.0
        %v6002 = vrot.slane %v6001, 4
        %v6003 = vadd.f32 %v6001, %v6002
        %v6004 = vrot.slane %v6003, 2
        %v6005 = vadd.f32 %v6003, %v6004
        %v6006 = vrot.slane %v6005, 1
        %v6007 = vadd.f32 %v6005, %v6006
        %v6008 = vsel %vm5811, %v5807, 0.0
        %v6009 = vrot.slane %v6008, 4
        %v6010 = vadd.f32 %v6008, %v6009
        %v6011 = vrot.slane %v6010, 2
        %v6012 = vadd.f32 %v6010, %v6011
        %v6013 = vrot.slane %v6012, 1
        %v6014 = vadd.f32 %v6012, %v6013
        %v6015 = vsel %vm5811, %v5808, 0.0
        %v6016 = vrot.slane %v6015, 4
        %v6017 = vadd.f32 %v6015, %v6016
        %v6018 = vrot.slane %v6017, 2
        %v6019 = vadd.f32 %v6017, %v6018
        %v6020 = vrot.slane %v6019, 1
        %v6021 = vadd.f32 %v6019, %v6020
        %v6022 = vsel %vm5811, %v5809, 0.0
        %v6023 = vrot.slane %v6022, 4
        %v6024 = vadd.f32 %v6022, %v6023
        %v6025 = vrot.slane %v6024, 2
        %v6026 = vadd.f32 %v6024, %v6025
        %v6027 = vrot.slane %v6026, 1
        %v6028 = vadd.f32 %v6026, %v6027
        %v6029 = vsel %vm5811, %v5810, 0.0
        %v6030 = vrot.slane %v6029, 4
        %v6031 = vadd.f32 %v6029, %v6030
        %v6032 = vrot.slane %v6031, 2
        %v6033 = vadd.f32 %v6031, %v6032
        %v6034 = vrot.slane %v6033, 1
        %v6035 = vadd.f32 %v6033, %v6034
        %6037 = vset.pattern.permute.xlu0 0
        %6038 = vperm.xlu0 %6037, %v5082
        %v6039 = vpop.permute.xlu0 %6038
        %6042 = vset.pattern.permute.xlu0 0
        %6043 = vperm.xlu0 %6042, %v5083
        %v6044 = vpop.permute.xlu0 %6043
        %6047 = vset.pattern.permute.xlu0 0
        %6048 = vperm.xlu0 %6047, %v5084
        %v6049 = vpop.permute.xlu0 %6048
        %6052 = vset.pattern.permute.xlu0 0
        %6053 = vperm.xlu0 %6052, %v5085
        %v6054 = vpop.permute.xlu0 %6053
        %6057 = vset.pattern.permute.xlu0 0
        %6058 = vperm.xlu0 %6057, %v5098
        %v6059 = vpop.permute.xlu0 %6058
        %6062 = vset.pattern.permute.xlu0 0
        %6063 = vperm.xlu0 %6062, %v5099
        %v6064 = vpop.permute.xlu0 %6063
        %6067 = vset.pattern.permute.xlu0 0
        %6068 = vperm.xlu0 %6067, %v5100
        %v6069 = vpop.permute.xlu0 %6068
        %6072 = vset.pattern.permute.xlu0 0
        %6073 = vperm.xlu0 %6072, %v5101
        %v6074 = vpop.permute.xlu0 %6073
        %6077 = vset.pattern.permute.xlu0 0
        %6078 = vperm.xlu0 %6077, %v5114
        %v6079 = vpop.permute.xlu0 %6078
        %6082 = vset.pattern.permute.xlu0 0
        %6083 = vperm.xlu0 %6082, %v5115
        %v6084 = vpop.permute.xlu0 %6083
        %6087 = vset.pattern.permute.xlu0 0
        %6088 = vperm.xlu0 %6087, %v5116
        %v6089 = vpop.permute.xlu0 %6088
        %6092 = vset.pattern.permute.xlu0 0
        %6093 = vperm.xlu0 %6092, %v5117
        %v6094 = vpop.permute.xlu0 %6093
        %6097 = vset.pattern.permute.xlu0 0
        %6098 = vperm.xlu0 %6097, %v5130
        %v6099 = vpop.permute.xlu0 %6098
        %6102 = vset.pattern.permute.xlu0 0
        %6103 = vperm.xlu0 %6102, %v5131
        %v6104 = vpop.permute.xlu0 %6103
        %6107 = vset.pattern.permute.xlu0 0
        %6108 = vperm.xlu0 %6107, %v5132
        %v6109 = vpop.permute.xlu0 %6108
        %6112 = vset.pattern.permute.xlu0 0
        %6113 = vperm.xlu0 %6112, %v5133
        %v6114 = vpop.permute.xlu0 %6113
        %6117 = vset.pattern.permute.xlu0 0
        %6118 = vperm.xlu0 %6117, %v5146
        %v6119 = vpop.permute.xlu0 %6118
        %6122 = vset.pattern.permute.xlu0 0
        %6123 = vperm.xlu0 %6122, %v5147
        %v6124 = vpop.permute.xlu0 %6123
        %6127 = vset.pattern.permute.xlu0 0
        %6128 = vperm.xlu0 %6127, %v5148
        %v6129 = vpop.permute.xlu0 %6128
        %6132 = vset.pattern.permute.xlu0 0
        %6133 = vperm.xlu0 %6132, %v5149
        %v6134 = vpop.permute.xlu0 %6133
        %6137 = vset.pattern.permute.xlu0 0
        %6138 = vperm.xlu0 %6137, %v5162
        %v6139 = vpop.permute.xlu0 %6138
        %6142 = vset.pattern.permute.xlu0 0
        %6143 = vperm.xlu0 %6142, %v5163
        %v6144 = vpop.permute.xlu0 %6143
        %6147 = vset.pattern.permute.xlu0 0
        %6148 = vperm.xlu0 %6147, %v5164
        %v6149 = vpop.permute.xlu0 %6148
        %6152 = vset.pattern.permute.xlu0 0
        %6153 = vperm.xlu0 %6152, %v5165
        %v6154 = vpop.permute.xlu0 %6153
        %6157 = vset.pattern.permute.xlu0 0
        %6158 = vperm.xlu0 %6157, %v5178
        %v6159 = vpop.permute.xlu0 %6158
        %6162 = vset.pattern.permute.xlu0 0
        %6163 = vperm.xlu0 %6162, %v5179
        %v6164 = vpop.permute.xlu0 %6163
        %6167 = vset.pattern.permute.xlu0 0
        %6168 = vperm.xlu0 %6167, %v5180
        %v6169 = vpop.permute.xlu0 %6168
        %6172 = vset.pattern.permute.xlu0 0
        %6173 = vperm.xlu0 %6172, %v5181
        %v6174 = vpop.permute.xlu0 %6173
        %6177 = vset.pattern.permute.xlu0 0
        %6178 = vperm.xlu0 %6177, %v5194
        %v6179 = vpop.permute.xlu0 %6178
        %6182 = vset.pattern.permute.xlu0 0
        %6183 = vperm.xlu0 %6182, %v5195
        %v6184 = vpop.permute.xlu0 %6183
        %6187 = vset.pattern.permute.xlu0 0
        %6188 = vperm.xlu0 %6187, %v5196
        %v6189 = vpop.permute.xlu0 %6188
        %6192 = vset.pattern.permute.xlu0 0
        %6193 = vperm.xlu0 %6192, %v5197
        %v6194 = vpop.permute.xlu0 %6193
        %v6196 = vmul.f32 %v6039, %v391
        %v6197 = vmul.f32 %v6044, %v391
        %v6198 = vmul.f32 %v6049, %v391
        %v6199 = vmul.f32 %v6054, %v391
        %v6200 = vmul.f32 %v6059, %v393
        %v6201 = vmul.f32 %v6064, %v393
        %v6202 = vmul.f32 %v6069, %v393
        %v6203 = vmul.f32 %v6074, %v393
        %v6204 = vmul.f32 %v6079, %v396
        %v6205 = vmul.f32 %v6084, %v396
        %v6206 = vmul.f32 %v6089, %v396
        %v6207 = vmul.f32 %v6094, %v396
        %v6208 = vmul.f32 %v6099, %v398
        %v6209 = vmul.f32 %v6104, %v398
        %v6210 = vmul.f32 %v6109, %v398
        %v6211 = vmul.f32 %v6114, %v398
        %v6212 = vmul.f32 %v6119, %v401
        %v6213 = vmul.f32 %v6124, %v401
        %v6214 = vmul.f32 %v6129, %v401
        %v6215 = vmul.f32 %v6134, %v401
        %v6216 = vmul.f32 %v6139, %v403
        %v6217 = vmul.f32 %v6144, %v403
        %v6218 = vmul.f32 %v6149, %v403
        %v6219 = vmul.f32 %v6154, %v403
        %v6220 = vmul.f32 %v6159, %v406
        %v6221 = vmul.f32 %v6164, %v406
        %v6222 = vmul.f32 %v6169, %v406
        %v6223 = vmul.f32 %v6174, %v406
        %v6224 = vmul.f32 %v6179, %v408
        %v6225 = vmul.f32 %v6184, %v408
        %v6226 = vmul.f32 %v6189, %v408
        %v6227 = vmul.f32 %v6194, %v408
        %vm6228 = vcmask 458112
        %v6229 = vsel %vm6228, %v6196, 0.0
        %v6230 = vrot.slane %v6229, 4
        %v6231 = vadd.f32 %v6229, %v6230
        %v6232 = vrot.slane %v6231, 2
        %v6233 = vadd.f32 %v6231, %v6232
        %v6234 = vrot.slane %v6233, 1
        %v6235 = vadd.f32 %v6233, %v6234
        %v6236 = vsel %vm6228, %v6197, 0.0
        %v6237 = vrot.slane %v6236, 4
        %v6238 = vadd.f32 %v6236, %v6237
        %v6239 = vrot.slane %v6238, 2
        %v6240 = vadd.f32 %v6238, %v6239
        %v6241 = vrot.slane %v6240, 1
        %v6242 = vadd.f32 %v6240, %v6241
        %v6243 = vsel %vm6228, %v6198, 0.0
        %v6244 = vrot.slane %v6243, 4
        %v6245 = vadd.f32 %v6243, %v6244
        %v6246 = vrot.slane %v6245, 2
        %v6247 = vadd.f32 %v6245, %v6246
        %v6248 = vrot.slane %v6247, 1
        %v6249 = vadd.f32 %v6247, %v6248
        %v6250 = vsel %vm6228, %v6199, 0.0
        %v6251 = vrot.slane %v6250, 4
        %v6252 = vadd.f32 %v6250, %v6251
        %v6253 = vrot.slane %v6252, 2
        %v6254 = vadd.f32 %v6252, %v6253
        %v6255 = vrot.slane %v6254, 1
        %v6256 = vadd.f32 %v6254, %v6255
        %v6257 = vsel %vm6228, %v6200, 0.0
        %v6258 = vrot.slane %v6257, 4
        %v6259 = vadd.f32 %v6257, %v6258
        %v6260 = vrot.slane %v6259, 2
        %v6261 = vadd.f32 %v6259, %v6260
        %v6262 = vrot.slane %v6261, 1
        %v6263 = vadd.f32 %v6261, %v6262
        %v6264 = vsel %vm6228, %v6201, 0.0
        %v6265 = vrot.slane %v6264, 4
        %v6266 = vadd.f32 %v6264, %v6265
        %v6267 = vrot.slane %v6266, 2
        %v6268 = vadd.f32 %v6266, %v6267
        %v6269 = vrot.slane %v6268, 1
        %v6270 = vadd.f32 %v6268, %v6269
        %v6271 = vsel %vm6228, %v6202, 0.0
        %v6272 = vrot.slane %v6271, 4
        %v6273 = vadd.f32 %v6271, %v6272
        %v6274 = vrot.slane %v6273, 2
        %v6275 = vadd.f32 %v6273, %v6274
        %v6276 = vrot.slane %v6275, 1
        %v6277 = vadd.f32 %v6275, %v6276
        %v6278 = vsel %vm6228, %v6203, 0.0
        %v6279 = vrot.slane %v6278, 4
        %v6280 = vadd.f32 %v6278, %v6279
        %v6281 = vrot.slane %v6280, 2
        %v6282 = vadd.f32 %v6280, %v6281
        %v6283 = vrot.slane %v6282, 1
        %v6284 = vadd.f32 %v6282, %v6283
        %v6285 = vsel %vm6228, %v6204, 0.0
        %v6286 = vrot.slane %v6285, 4
        %v6287 = vadd.f32 %v6285, %v6286
        %v6288 = vrot.slane %v6287, 2
        %v6289 = vadd.f32 %v6287, %v6288
        %v6290 = vrot.slane %v6289, 1
        %v6291 = vadd.f32 %v6289, %v6290
        %v6292 = vsel %vm6228, %v6205, 0.0
        %v6293 = vrot.slane %v6292, 4
        %v6294 = vadd.f32 %v6292, %v6293
        %v6295 = vrot.slane %v6294, 2
        %v6296 = vadd.f32 %v6294, %v6295
        %v6297 = vrot.slane %v6296, 1
        %v6298 = vadd.f32 %v6296, %v6297
        %v6299 = vsel %vm6228, %v6206, 0.0
        %v6300 = vrot.slane %v6299, 4
        %v6301 = vadd.f32 %v6299, %v6300
        %v6302 = vrot.slane %v6301, 2
        %v6303 = vadd.f32 %v6301, %v6302
        %v6304 = vrot.slane %v6303, 1
        %v6305 = vadd.f32 %v6303, %v6304
        %v6306 = vsel %vm6228, %v6207, 0.0
        %v6307 = vrot.slane %v6306, 4
        %v6308 = vadd.f32 %v6306, %v6307
        %v6309 = vrot.slane %v6308, 2
        %v6310 = vadd.f32 %v6308, %v6309
        %v6311 = vrot.slane %v6310, 1
        %v6312 = vadd.f32 %v6310, %v6311
        %v6313 = vsel %vm6228, %v6208, 0.0
        %v6314 = vrot.slane %v6313, 4
        %v6315 = vadd.f32 %v6313, %v6314
        %v6316 = vrot.slane %v6315, 2
        %v6317 = vadd.f32 %v6315, %v6316
        %v6318 = vrot.slane %v6317, 1
        %v6319 = vadd.f32 %v6317, %v6318
        %v6320 = vsel %vm6228, %v6209, 0.0
        %v6321 = vrot.slane %v6320, 4
        %v6322 = vadd.f32 %v6320, %v6321
        %v6323 = vrot.slane %v6322, 2
        %v6324 = vadd.f32 %v6322, %v6323
        %v6325 = vrot.slane %v6324, 1
        %v6326 = vadd.f32 %v6324, %v6325
        %v6327 = vsel %vm6228, %v6210, 0.0
        %v6328 = vrot.slane %v6327, 4
        %v6329 = vadd.f32 %v6327, %v6328
        %v6330 = vrot.slane %v6329, 2
        %v6331 = vadd.f32 %v6329, %v6330
        %v6332 = vrot.slane %v6331, 1
        %v6333 = vadd.f32 %v6331, %v6332
        %v6334 = vsel %vm6228, %v6211, 0.0
        %v6335 = vrot.slane %v6334, 4
        %v6336 = vadd.f32 %v6334, %v6335
        %v6337 = vrot.slane %v6336, 2
        %v6338 = vadd.f32 %v6336, %v6337
        %v6339 = vrot.slane %v6338, 1
        %v6340 = vadd.f32 %v6338, %v6339
        %v6341 = vsel %vm6228, %v6212, 0.0
        %v6342 = vrot.slane %v6341, 4
        %v6343 = vadd.f32 %v6341, %v6342
        %v6344 = vrot.slane %v6343, 2
        %v6345 = vadd.f32 %v6343, %v6344
        %v6346 = vrot.slane %v6345, 1
        %v6347 = vadd.f32 %v6345, %v6346
        %v6348 = vsel %vm6228, %v6213, 0.0
        %v6349 = vrot.slane %v6348, 4
        %v6350 = vadd.f32 %v6348, %v6349
        %v6351 = vrot.slane %v6350, 2
        %v6352 = vadd.f32 %v6350, %v6351
        %v6353 = vrot.slane %v6352, 1
        %v6354 = vadd.f32 %v6352, %v6353
        %v6355 = vsel %vm6228, %v6214, 0.0
        %v6356 = vrot.slane %v6355, 4
        %v6357 = vadd.f32 %v6355, %v6356
        %v6358 = vrot.slane %v6357, 2
        %v6359 = vadd.f32 %v6357, %v6358
        %v6360 = vrot.slane %v6359, 1
        %v6361 = vadd.f32 %v6359, %v6360
        %v6362 = vsel %vm6228, %v6215, 0.0
        %v6363 = vrot.slane %v6362, 4
        %v6364 = vadd.f32 %v6362, %v6363
        %v6365 = vrot.slane %v6364, 2
        %v6366 = vadd.f32 %v6364, %v6365
        %v6367 = vrot.slane %v6366, 1
        %v6368 = vadd.f32 %v6366, %v6367
        %v6369 = vsel %vm6228, %v6216, 0.0
        %v6370 = vrot.slane %v6369, 4
        %v6371 = vadd.f32 %v6369, %v6370
        %v6372 = vrot.slane %v6371, 2
        %v6373 = vadd.f32 %v6371, %v6372
        %v6374 = vrot.slane %v6373, 1
        %v6375 = vadd.f32 %v6373, %v6374
        %v6376 = vsel %vm6228, %v6217, 0.0
        %v6377 = vrot.slane %v6376, 4
        %v6378 = vadd.f32 %v6376, %v6377
        %v6379 = vrot.slane %v6378, 2
        %v6380 = vadd.f32 %v6378, %v6379
        %v6381 = vrot.slane %v6380, 1
        %v6382 = vadd.f32 %v6380, %v6381
        %v6383 = vsel %vm6228, %v6218, 0.0
        %v6384 = vrot.slane %v6383, 4
        %v6385 = vadd.f32 %v6383, %v6384
        %v6386 = vrot.slane %v6385, 2
        %v6387 = vadd.f32 %v6385, %v6386
        %v6388 = vrot.slane %v6387, 1
        %v6389 = vadd.f32 %v6387, %v6388
        %v6390 = vsel %vm6228, %v6219, 0.0
        %v6391 = vrot.slane %v6390, 4
        %v6392 = vadd.f32 %v6390, %v6391
        %v6393 = vrot.slane %v6392, 2
        %v6394 = vadd.f32 %v6392, %v6393
        %v6395 = vrot.slane %v6394, 1
        %v6396 = vadd.f32 %v6394, %v6395
        %v6397 = vsel %vm6228, %v6220, 0.0
        %v6398 = vrot.slane %v6397, 4
        %v6399 = vadd.f32 %v6397, %v6398
        %v6400 = vrot.slane %v6399, 2
        %v6401 = vadd.f32 %v6399, %v6400
        %v6402 = vrot.slane %v6401, 1
        %v6403 = vadd.f32 %v6401, %v6402
        %v6404 = vsel %vm6228, %v6221, 0.0
        %v6405 = vrot.slane %v6404, 4
        %v6406 = vadd.f32 %v6404, %v6405
        %v6407 = vrot.slane %v6406, 2
        %v6408 = vadd.f32 %v6406, %v6407
        %v6409 = vrot.slane %v6408, 1
        %v6410 = vadd.f32 %v6408, %v6409
        %v6411 = vsel %vm6228, %v6222, 0.0
        %v6412 = vrot.slane %v6411, 4
        %v6413 = vadd.f32 %v6411, %v6412
        %v6414 = vrot.slane %v6413, 2
        %v6415 = vadd.f32 %v6413, %v6414
        %v6416 = vrot.slane %v6415, 1
        %v6417 = vadd.f32 %v6415, %v6416
        %v6418 = vsel %vm6228, %v6223, 0.0
        %v6419 = vrot.slane %v6418, 4
        %v6420 = vadd.f32 %v6418, %v6419
        %v6421 = vrot.slane %v6420, 2
        %v6422 = vadd.f32 %v6420, %v6421
        %v6423 = vrot.slane %v6422, 1
        %v6424 = vadd.f32 %v6422, %v6423
        %v6425 = vsel %vm6228, %v6224, 0.0
        %v6426 = vrot.slane %v6425, 4
        %v6427 = vadd.f32 %v6425, %v6426
        %v6428 = vrot.slane %v6427, 2
        %v6429 = vadd.f32 %v6427, %v6428
        %v6430 = vrot.slane %v6429, 1
        %v6431 = vadd.f32 %v6429, %v6430
        %v6432 = vsel %vm6228, %v6225, 0.0
        %v6433 = vrot.slane %v6432, 4
        %v6434 = vadd.f32 %v6432, %v6433
        %v6435 = vrot.slane %v6434, 2
        %v6436 = vadd.f32 %v6434, %v6435
        %v6437 = vrot.slane %v6436, 1
        %v6438 = vadd.f32 %v6436, %v6437
        %v6439 = vsel %vm6228, %v6226, 0.0
        %v6440 = vrot.slane %v6439, 4
        %v6441 = vadd.f32 %v6439, %v6440
        %v6442 = vrot.slane %v6441, 2
        %v6443 = vadd.f32 %v6441, %v6442
        %v6444 = vrot.slane %v6443, 1
        %v6445 = vadd.f32 %v6443, %v6444
        %v6446 = vsel %vm6228, %v6227, 0.0
        %v6447 = vrot.slane %v6446, 4
        %v6448 = vadd.f32 %v6446, %v6447
        %v6449 = vrot.slane %v6448, 2
        %v6450 = vadd.f32 %v6448, %v6449
        %v6451 = vrot.slane %v6450, 1
        %v6452 = vadd.f32 %v6450, %v6451
        %6454 = vset.pattern.permute.xlu0 0
        %6455 = vperm.xlu0 %6454, %v5086
        %v6456 = vpop.permute.xlu0 %6455
        %6459 = vset.pattern.permute.xlu0 0
        %6460 = vperm.xlu0 %6459, %v5087
        %v6461 = vpop.permute.xlu0 %6460
        %6464 = vset.pattern.permute.xlu0 0
        %6465 = vperm.xlu0 %6464, %v5088
        %v6466 = vpop.permute.xlu0 %6465
        %6469 = vset.pattern.permute.xlu0 0
        %6470 = vperm.xlu0 %6469, %v5089
        %v6471 = vpop.permute.xlu0 %6470
        %6474 = vset.pattern.permute.xlu0 0
        %6475 = vperm.xlu0 %6474, %v5102
        %v6476 = vpop.permute.xlu0 %6475
        %6479 = vset.pattern.permute.xlu0 0
        %6480 = vperm.xlu0 %6479, %v5103
        %v6481 = vpop.permute.xlu0 %6480
        %6484 = vset.pattern.permute.xlu0 0
        %6485 = vperm.xlu0 %6484, %v5104
        %v6486 = vpop.permute.xlu0 %6485
        %6489 = vset.pattern.permute.xlu0 0
        %6490 = vperm.xlu0 %6489, %v5105
        %v6491 = vpop.permute.xlu0 %6490
        %6494 = vset.pattern.permute.xlu0 0
        %6495 = vperm.xlu0 %6494, %v5118
        %v6496 = vpop.permute.xlu0 %6495
        %6499 = vset.pattern.permute.xlu0 0
        %6500 = vperm.xlu0 %6499, %v5119
        %v6501 = vpop.permute.xlu0 %6500
        %6504 = vset.pattern.permute.xlu0 0
        %6505 = vperm.xlu0 %6504, %v5120
        %v6506 = vpop.permute.xlu0 %6505
        %6509 = vset.pattern.permute.xlu0 0
        %6510 = vperm.xlu0 %6509, %v5121
        %v6511 = vpop.permute.xlu0 %6510
        %6514 = vset.pattern.permute.xlu0 0
        %6515 = vperm.xlu0 %6514, %v5134
        %v6516 = vpop.permute.xlu0 %6515
        %6519 = vset.pattern.permute.xlu0 0
        %6520 = vperm.xlu0 %6519, %v5135
        %v6521 = vpop.permute.xlu0 %6520
        %6524 = vset.pattern.permute.xlu0 0
        %6525 = vperm.xlu0 %6524, %v5136
        %v6526 = vpop.permute.xlu0 %6525
        %6529 = vset.pattern.permute.xlu0 0
        %6530 = vperm.xlu0 %6529, %v5137
        %v6531 = vpop.permute.xlu0 %6530
        %6534 = vset.pattern.permute.xlu0 0
        %6535 = vperm.xlu0 %6534, %v5150
        %v6536 = vpop.permute.xlu0 %6535
        %6539 = vset.pattern.permute.xlu0 0
        %6540 = vperm.xlu0 %6539, %v5151
        %v6541 = vpop.permute.xlu0 %6540
        %6544 = vset.pattern.permute.xlu0 0
        %6545 = vperm.xlu0 %6544, %v5152
        %v6546 = vpop.permute.xlu0 %6545
        %6549 = vset.pattern.permute.xlu0 0
        %6550 = vperm.xlu0 %6549, %v5153
        %v6551 = vpop.permute.xlu0 %6550
        %6554 = vset.pattern.permute.xlu0 0
        %6555 = vperm.xlu0 %6554, %v5166
        %v6556 = vpop.permute.xlu0 %6555
        %6559 = vset.pattern.permute.xlu0 0
        %6560 = vperm.xlu0 %6559, %v5167
        %v6561 = vpop.permute.xlu0 %6560
        %6564 = vset.pattern.permute.xlu0 0
        %6565 = vperm.xlu0 %6564, %v5168
        %v6566 = vpop.permute.xlu0 %6565
        %6569 = vset.pattern.permute.xlu0 0
        %6570 = vperm.xlu0 %6569, %v5169
        %v6571 = vpop.permute.xlu0 %6570
        %6574 = vset.pattern.permute.xlu0 0
        %6575 = vperm.xlu0 %6574, %v5182
        %v6576 = vpop.permute.xlu0 %6575
        %6579 = vset.pattern.permute.xlu0 0
        %6580 = vperm.xlu0 %6579, %v5183
        %v6581 = vpop.permute.xlu0 %6580
        %6584 = vset.pattern.permute.xlu0 0
        %6585 = vperm.xlu0 %6584, %v5184
        %v6586 = vpop.permute.xlu0 %6585
        %6589 = vset.pattern.permute.xlu0 0
        %6590 = vperm.xlu0 %6589, %v5185
        %v6591 = vpop.permute.xlu0 %6590
        %6594 = vset.pattern.permute.xlu0 0
        %6595 = vperm.xlu0 %6594, %v5198
        %v6596 = vpop.permute.xlu0 %6595
        %6599 = vset.pattern.permute.xlu0 0
        %6600 = vperm.xlu0 %6599, %v5199
        %v6601 = vpop.permute.xlu0 %6600
        %6604 = vset.pattern.permute.xlu0 0
        %6605 = vperm.xlu0 %6604, %v5200
        %v6606 = vpop.permute.xlu0 %6605
        %6609 = vset.pattern.permute.xlu0 0
        %6610 = vperm.xlu0 %6609, %v5201
        %v6611 = vpop.permute.xlu0 %6610
        %v6613 = vmul.f32 %v6456, %v391
        %v6614 = vmul.f32 %v6461, %v391
        %v6615 = vmul.f32 %v6466, %v391
        %v6616 = vmul.f32 %v6471, %v391
        %v6617 = vmul.f32 %v6476, %v393
        %v6618 = vmul.f32 %v6481, %v393
        %v6619 = vmul.f32 %v6486, %v393
        %v6620 = vmul.f32 %v6491, %v393
        %v6621 = vmul.f32 %v6496, %v396
        %v6622 = vmul.f32 %v6501, %v396
        %v6623 = vmul.f32 %v6506, %v396
        %v6624 = vmul.f32 %v6511, %v396
        %v6625 = vmul.f32 %v6516, %v398
        %v6626 = vmul.f32 %v6521, %v398
        %v6627 = vmul.f32 %v6526, %v398
        %v6628 = vmul.f32 %v6531, %v398
        %v6629 = vmul.f32 %v6536, %v401
        %v6630 = vmul.f32 %v6541, %v401
        %v6631 = vmul.f32 %v6546, %v401
        %v6632 = vmul.f32 %v6551, %v401
        %v6633 = vmul.f32 %v6556, %v403
        %v6634 = vmul.f32 %v6561, %v403
        %v6635 = vmul.f32 %v6566, %v403
        %v6636 = vmul.f32 %v6571, %v403
        %v6637 = vmul.f32 %v6576, %v406
        %v6638 = vmul.f32 %v6581, %v406
        %v6639 = vmul.f32 %v6586, %v406
        %v6640 = vmul.f32 %v6591, %v406
        %v6641 = vmul.f32 %v6596, %v408
        %v6642 = vmul.f32 %v6601, %v408
        %v6643 = vmul.f32 %v6606, %v408
        %v6644 = vmul.f32 %v6611, %v408
        %vm6645 = vcmask 523712
        %v6646 = vsel %vm6645, %v6613, 0.0
        %v6647 = vrot.slane %v6646, 4
        %v6648 = vadd.f32 %v6646, %v6647
        %v6649 = vrot.slane %v6648, 2
        %v6650 = vadd.f32 %v6648, %v6649
        %v6651 = vrot.slane %v6650, 1
        %v6652 = vadd.f32 %v6650, %v6651
        %v6653 = vsel %vm6645, %v6614, 0.0
        %v6654 = vrot.slane %v6653, 4
        %v6655 = vadd.f32 %v6653, %v6654
        %v6656 = vrot.slane %v6655, 2
        %v6657 = vadd.f32 %v6655, %v6656
        %v6658 = vrot.slane %v6657, 1
        %v6659 = vadd.f32 %v6657, %v6658
        %v6660 = vsel %vm6645, %v6615, 0.0
        %v6661 = vrot.slane %v6660, 4
        %v6662 = vadd.f32 %v6660, %v6661
        %v6663 = vrot.slane %v6662, 2
        %v6664 = vadd.f32 %v6662, %v6663
        %v6665 = vrot.slane %v6664, 1
        %v6666 = vadd.f32 %v6664, %v6665
        %v6667 = vsel %vm6645, %v6616, 0.0
        %v6668 = vrot.slane %v6667, 4
        %v6669 = vadd.f32 %v6667, %v6668
        %v6670 = vrot.slane %v6669, 2
        %v6671 = vadd.f32 %v6669, %v6670
        %v6672 = vrot.slane %v6671, 1
        %v6673 = vadd.f32 %v6671, %v6672
        %v6674 = vsel %vm6645, %v6617, 0.0
        %v6675 = vrot.slane %v6674, 4
        %v6676 = vadd.f32 %v6674, %v6675
        %v6677 = vrot.slane %v6676, 2
        %v6678 = vadd.f32 %v6676, %v6677
        %v6679 = vrot.slane %v6678, 1
        %v6680 = vadd.f32 %v6678, %v6679
        %v6681 = vsel %vm6645, %v6618, 0.0
        %v6682 = vrot.slane %v6681, 4
        %v6683 = vadd.f32 %v6681, %v6682
        %v6684 = vrot.slane %v6683, 2
        %v6685 = vadd.f32 %v6683, %v6684
        %v6686 = vrot.slane %v6685, 1
        %v6687 = vadd.f32 %v6685, %v6686
        %v6688 = vsel %vm6645, %v6619, 0.0
        %v6689 = vrot.slane %v6688, 4
        %v6690 = vadd.f32 %v6688, %v6689
        %v6691 = vrot.slane %v6690, 2
        %v6692 = vadd.f32 %v6690, %v6691
        %v6693 = vrot.slane %v6692, 1
        %v6694 = vadd.f32 %v6692, %v6693
        %v6695 = vsel %vm6645, %v6620, 0.0
        %v6696 = vrot.slane %v6695, 4
        %v6697 = vadd.f32 %v6695, %v6696
        %v6698 = vrot.slane %v6697, 2
        %v6699 = vadd.f32 %v6697, %v6698
        %v6700 = vrot.slane %v6699, 1
        %v6701 = vadd.f32 %v6699, %v6700
        %v6702 = vsel %vm6645, %v6621, 0.0
        %v6703 = vrot.slane %v6702, 4
        %v6704 = vadd.f32 %v6702, %v6703
        %v6705 = vrot.slane %v6704, 2
        %v6706 = vadd.f32 %v6704, %v6705
        %v6707 = vrot.slane %v6706, 1
        %v6708 = vadd.f32 %v6706, %v6707
        %v6709 = vsel %vm6645, %v6622, 0.0
        %v6710 = vrot.slane %v6709, 4
        %v6711 = vadd.f32 %v6709, %v6710
        %v6712 = vrot.slane %v6711, 2
        %v6713 = vadd.f32 %v6711, %v6712
        %v6714 = vrot.slane %v6713, 1
        %v6715 = vadd.f32 %v6713, %v6714
        %v6716 = vsel %vm6645, %v6623, 0.0
        %v6717 = vrot.slane %v6716, 4
        %v6718 = vadd.f32 %v6716, %v6717
        %v6719 = vrot.slane %v6718, 2
        %v6720 = vadd.f32 %v6718, %v6719
        %v6721 = vrot.slane %v6720, 1
        %v6722 = vadd.f32 %v6720, %v6721
        %v6723 = vsel %vm6645, %v6624, 0.0
        %v6724 = vrot.slane %v6723, 4
        %v6725 = vadd.f32 %v6723, %v6724
        %v6726 = vrot.slane %v6725, 2
        %v6727 = vadd.f32 %v6725, %v6726
        %v6728 = vrot.slane %v6727, 1
        %v6729 = vadd.f32 %v6727, %v6728
        %v6730 = vsel %vm6645, %v6625, 0.0
        %v6731 = vrot.slane %v6730, 4
        %v6732 = vadd.f32 %v6730, %v6731
        %v6733 = vrot.slane %v6732, 2
        %v6734 = vadd.f32 %v6732, %v6733
        %v6735 = vrot.slane %v6734, 1
        %v6736 = vadd.f32 %v6734, %v6735
        %v6737 = vsel %vm6645, %v6626, 0.0
        %v6738 = vrot.slane %v6737, 4
        %v6739 = vadd.f32 %v6737, %v6738
        %v6740 = vrot.slane %v6739, 2
        %v6741 = vadd.f32 %v6739, %v6740
        %v6742 = vrot.slane %v6741, 1
        %v6743 = vadd.f32 %v6741, %v6742
        %v6744 = vsel %vm6645, %v6627, 0.0
        %v6745 = vrot.slane %v6744, 4
        %v6746 = vadd.f32 %v6744, %v6745
        %v6747 = vrot.slane %v6746, 2
        %v6748 = vadd.f32 %v6746, %v6747
        %v6749 = vrot.slane %v6748, 1
        %v6750 = vadd.f32 %v6748, %v6749
        %v6751 = vsel %vm6645, %v6628, 0.0
        %v6752 = vrot.slane %v6751, 4
        %v6753 = vadd.f32 %v6751, %v6752
        %v6754 = vrot.slane %v6753, 2
        %v6755 = vadd.f32 %v6753, %v6754
        %v6756 = vrot.slane %v6755, 1
        %v6757 = vadd.f32 %v6755, %v6756
        %v6758 = vsel %vm6645, %v6629, 0.0
        %v6759 = vrot.slane %v6758, 4
        %v6760 = vadd.f32 %v6758, %v6759
        %v6761 = vrot.slane %v6760, 2
        %v6762 = vadd.f32 %v6760, %v6761
        %v6763 = vrot.slane %v6762, 1
        %v6764 = vadd.f32 %v6762, %v6763
        %v6765 = vsel %vm6645, %v6630, 0.0
        %v6766 = vrot.slane %v6765, 4
        %v6767 = vadd.f32 %v6765, %v6766
        %v6768 = vrot.slane %v6767, 2
        %v6769 = vadd.f32 %v6767, %v6768
        %v6770 = vrot.slane %v6769, 1
        %v6771 = vadd.f32 %v6769, %v6770
        %v6772 = vsel %vm6645, %v6631, 0.0
        %v6773 = vrot.slane %v6772, 4
        %v6774 = vadd.f32 %v6772, %v6773
        %v6775 = vrot.slane %v6774, 2
        %v6776 = vadd.f32 %v6774, %v6775
        %v6777 = vrot.slane %v6776, 1
        %v6778 = vadd.f32 %v6776, %v6777
        %v6779 = vsel %vm6645, %v6632, 0.0
        %v6780 = vrot.slane %v6779, 4
        %v6781 = vadd.f32 %v6779, %v6780
        %v6782 = vrot.slane %v6781, 2
        %v6783 = vadd.f32 %v6781, %v6782
        %v6784 = vrot.slane %v6783, 1
        %v6785 = vadd.f32 %v6783, %v6784
        %v6786 = vsel %vm6645, %v6633, 0.0
        %v6787 = vrot.slane %v6786, 4
        %v6788 = vadd.f32 %v6786, %v6787
        %v6789 = vrot.slane %v6788, 2
        %v6790 = vadd.f32 %v6788, %v6789
        %v6791 = vrot.slane %v6790, 1
        %v6792 = vadd.f32 %v6790, %v6791
        %v6793 = vsel %vm6645, %v6634, 0.0
        %v6794 = vrot.slane %v6793, 4
        %v6795 = vadd.f32 %v6793, %v6794
        %v6796 = vrot.slane %v6795, 2
        %v6797 = vadd.f32 %v6795, %v6796
        %v6798 = vrot.slane %v6797, 1
        %v6799 = vadd.f32 %v6797, %v6798
        %v6800 = vsel %vm6645, %v6635, 0.0
        %v6801 = vrot.slane %v6800, 4
        %v6802 = vadd.f32 %v6800, %v6801
        %v6803 = vrot.slane %v6802, 2
        %v6804 = vadd.f32 %v6802, %v6803
        %v6805 = vrot.slane %v6804, 1
        %v6806 = vadd.f32 %v6804, %v6805
        %v6807 = vsel %vm6645, %v6636, 0.0
        %v6808 = vrot.slane %v6807, 4
        %v6809 = vadd.f32 %v6807, %v6808
        %v6810 = vrot.slane %v6809, 2
        %v6811 = vadd.f32 %v6809, %v6810
        %v6812 = vrot.slane %v6811, 1
        %v6813 = vadd.f32 %v6811, %v6812
        %v6814 = vsel %vm6645, %v6637, 0.0
        %v6815 = vrot.slane %v6814, 4
        %v6816 = vadd.f32 %v6814, %v6815
        %v6817 = vrot.slane %v6816, 2
        %v6818 = vadd.f32 %v6816, %v6817
        %v6819 = vrot.slane %v6818, 1
        %v6820 = vadd.f32 %v6818, %v6819
        %v6821 = vsel %vm6645, %v6638, 0.0
        %v6822 = vrot.slane %v6821, 4
        %v6823 = vadd.f32 %v6821, %v6822
        %v6824 = vrot.slane %v6823, 2
        %v6825 = vadd.f32 %v6823, %v6824
        %v6826 = vrot.slane %v6825, 1
        %v6827 = vadd.f32 %v6825, %v6826
        %v6828 = vsel %vm6645, %v6639, 0.0
        %v6829 = vrot.slane %v6828, 4
        %v6830 = vadd.f32 %v6828, %v6829
        %v6831 = vrot.slane %v6830, 2
        %v6832 = vadd.f32 %v6830, %v6831
        %v6833 = vrot.slane %v6832, 1
        %v6834 = vadd.f32 %v6832, %v6833
        %v6835 = vsel %vm6645, %v6640, 0.0
        %v6836 = vrot.slane %v6835, 4
        %v6837 = vadd.f32 %v6835, %v6836
        %v6838 = vrot.slane %v6837, 2
        %v6839 = vadd.f32 %v6837, %v6838
        %v6840 = vrot.slane %v6839, 1
        %v6841 = vadd.f32 %v6839, %v6840
        %v6842 = vsel %vm6645, %v6641, 0.0
        %v6843 = vrot.slane %v6842, 4
        %v6844 = vadd.f32 %v6842, %v6843
        %v6845 = vrot.slane %v6844, 2
        %v6846 = vadd.f32 %v6844, %v6845
        %v6847 = vrot.slane %v6846, 1
        %v6848 = vadd.f32 %v6846, %v6847
        %v6849 = vsel %vm6645, %v6642, 0.0
        %v6850 = vrot.slane %v6849, 4
        %v6851 = vadd.f32 %v6849, %v6850
        %v6852 = vrot.slane %v6851, 2
        %v6853 = vadd.f32 %v6851, %v6852
        %v6854 = vrot.slane %v6853, 1
        %v6855 = vadd.f32 %v6853, %v6854
        %v6856 = vsel %vm6645, %v6643, 0.0
        %v6857 = vrot.slane %v6856, 4
        %v6858 = vadd.f32 %v6856, %v6857
        %v6859 = vrot.slane %v6858, 2
        %v6860 = vadd.f32 %v6858, %v6859
        %v6861 = vrot.slane %v6860, 1
        %v6862 = vadd.f32 %v6860, %v6861
        %v6863 = vsel %vm6645, %v6644, 0.0
        %v6864 = vrot.slane %v6863, 4
        %v6865 = vadd.f32 %v6863, %v6864
        %v6866 = vrot.slane %v6865, 2
        %v6867 = vadd.f32 %v6865, %v6866
        %v6868 = vrot.slane %v6867, 1
        %v6869 = vadd.f32 %v6867, %v6868
        %v6902 = vsel %vm492, %v5408, %v5401
        %v6903 = vsel %vm495, %v5415, %v6902
        %v6904 = vsel %vm498, %v5422, %v6903
        %v6905 = vsel %vm492, %v5436, %v5429
        %v6906 = vsel %vm495, %v5443, %v6905
        %v6907 = vsel %vm498, %v5450, %v6906
        %v6908 = vsel %vm492, %v5464, %v5457
        %v6909 = vsel %vm495, %v5471, %v6908
        %v6910 = vsel %vm498, %v5478, %v6909
        %v6911 = vsel %vm492, %v5492, %v5485
        %v6912 = vsel %vm495, %v5499, %v6911
        %v6913 = vsel %vm498, %v5506, %v6912
        %v6914 = vsel %vm492, %v5520, %v5513
        %v6915 = vsel %vm495, %v5527, %v6914
        %v6916 = vsel %vm498, %v5534, %v6915
        %v6917 = vsel %vm492, %v5548, %v5541
        %v6918 = vsel %vm495, %v5555, %v6917
        %v6919 = vsel %vm498, %v5562, %v6918
        %v6920 = vsel %vm492, %v5576, %v5569
        %v6921 = vsel %vm495, %v5583, %v6920
        %v6922 = vsel %vm498, %v5590, %v6921
        %v6923 = vsel %vm492, %v5604, %v5597
        %v6924 = vsel %vm495, %v5611, %v6923
        %v6925 = vsel %vm498, %v5618, %v6924
        %6926 = vrot.lane.b32.xlu0 %v6904, 96
        %v6927 = vpop.permute.xlu0 %6926
        %6928 = vrot.lane.b32.xlu0 %v6907, 96
        %v6929 = vpop.permute.xlu0 %6928
        %6930 = vrot.lane.b32.xlu0 %v6910, 96
        %v6931 = vpop.permute.xlu0 %6930
        %6932 = vrot.lane.b32.xlu0 %v6913, 96
        %v6933 = vpop.permute.xlu0 %6932
        %6934 = vrot.lane.b32.xlu0 %v6916, 96
        %v6935 = vpop.permute.xlu0 %6934
        %6936 = vrot.lane.b32.xlu0 %v6919, 96
        %v6937 = vpop.permute.xlu0 %6936
        %6938 = vrot.lane.b32.xlu0 %v6922, 96
        %v6939 = vpop.permute.xlu0 %6938
        %6940 = vrot.lane.b32.xlu0 %v6925, 96
        %v6941 = vpop.permute.xlu0 %6940
        %v6982 = vsel %vm492, %v5825, %v5818
        %v6983 = vsel %vm495, %v5832, %v6982
        %v6984 = vsel %vm498, %v5839, %v6983
        %v6985 = vsel %vm492, %v5853, %v5846
        %v6986 = vsel %vm495, %v5860, %v6985
        %v6987 = vsel %vm498, %v5867, %v6986
        %v6988 = vsel %vm492, %v5881, %v5874
        %v6989 = vsel %vm495, %v5888, %v6988
        %v6990 = vsel %vm498, %v5895, %v6989
        %v6991 = vsel %vm492, %v5909, %v5902
        %v6992 = vsel %vm495, %v5916, %v6991
        %v6993 = vsel %vm498, %v5923, %v6992
        %v6994 = vsel %vm492, %v5937, %v5930
        %v6995 = vsel %vm495, %v5944, %v6994
        %v6996 = vsel %vm498, %v5951, %v6995
        %v6997 = vsel %vm492, %v5965, %v5958
        %v6998 = vsel %vm495, %v5972, %v6997
        %v6999 = vsel %vm498, %v5979, %v6998
        %v7000 = vsel %vm492, %v5993, %v5986
        %v7001 = vsel %vm495, %v6000, %v7000
        %v7002 = vsel %vm498, %v6007, %v7001
        %v7003 = vsel %vm492, %v6021, %v6014
        %v7004 = vsel %vm495, %v6028, %v7003
        %v7005 = vsel %vm498, %v6035, %v7004
        %7006 = vrot.lane.b32.xlu0 %v6984, 96
        %v7007 = vpop.permute.xlu0 %7006
        %7008 = vrot.lane.b32.xlu0 %v6987, 96
        %v7009 = vpop.permute.xlu0 %7008
        %7010 = vrot.lane.b32.xlu0 %v6990, 96
        %v7011 = vpop.permute.xlu0 %7010
        %7012 = vrot.lane.b32.xlu0 %v6993, 96
        %v7013 = vpop.permute.xlu0 %7012
        %7014 = vrot.lane.b32.xlu0 %v6996, 96
        %v7015 = vpop.permute.xlu0 %7014
        %7016 = vrot.lane.b32.xlu0 %v6999, 96
        %v7017 = vpop.permute.xlu0 %7016
        %7018 = vrot.lane.b32.xlu0 %v7002, 96
        %v7019 = vpop.permute.xlu0 %7018
        %7020 = vrot.lane.b32.xlu0 %v7005, 96
        %v7021 = vpop.permute.xlu0 %7020
        %v7062 = vsel %vm492, %v6242, %v6235
        %v7063 = vsel %vm495, %v6249, %v7062
        %v7064 = vsel %vm498, %v6256, %v7063
        %v7065 = vsel %vm492, %v6270, %v6263
        %v7066 = vsel %vm495, %v6277, %v7065
        %v7067 = vsel %vm498, %v6284, %v7066
        %v7068 = vsel %vm492, %v6298, %v6291
        %v7069 = vsel %vm495, %v6305, %v7068
        %v7070 = vsel %vm498, %v6312, %v7069
        %v7071 = vsel %vm492, %v6326, %v6319
        %v7072 = vsel %vm495, %v6333, %v7071
        %v7073 = vsel %vm498, %v6340, %v7072
        %v7074 = vsel %vm492, %v6354, %v6347
        %v7075 = vsel %vm495, %v6361, %v7074
        %v7076 = vsel %vm498, %v6368, %v7075
        %v7077 = vsel %vm492, %v6382, %v6375
        %v7078 = vsel %vm495, %v6389, %v7077
        %v7079 = vsel %vm498, %v6396, %v7078
        %v7080 = vsel %vm492, %v6410, %v6403
        %v7081 = vsel %vm495, %v6417, %v7080
        %v7082 = vsel %vm498, %v6424, %v7081
        %v7083 = vsel %vm492, %v6438, %v6431
        %v7084 = vsel %vm495, %v6445, %v7083
        %v7085 = vsel %vm498, %v6452, %v7084
        %7086 = vrot.lane.b32.xlu0 %v7064, 96
        %v7087 = vpop.permute.xlu0 %7086
        %7088 = vrot.lane.b32.xlu0 %v7067, 96
        %v7089 = vpop.permute.xlu0 %7088
        %7090 = vrot.lane.b32.xlu0 %v7070, 96
        %v7091 = vpop.permute.xlu0 %7090
        %7092 = vrot.lane.b32.xlu0 %v7073, 96
        %v7093 = vpop.permute.xlu0 %7092
        %7094 = vrot.lane.b32.xlu0 %v7076, 96
        %v7095 = vpop.permute.xlu0 %7094
        %7096 = vrot.lane.b32.xlu0 %v7079, 96
        %v7097 = vpop.permute.xlu0 %7096
        %7098 = vrot.lane.b32.xlu0 %v7082, 96
        %v7099 = vpop.permute.xlu0 %7098
        %7100 = vrot.lane.b32.xlu0 %v7085, 96
        %v7101 = vpop.permute.xlu0 %7100
        %v7142 = vsel %vm492, %v6659, %v6652
        %v7143 = vsel %vm495, %v6666, %v7142
        %v7144 = vsel %vm498, %v6673, %v7143
        %v7145 = vsel %vm492, %v6687, %v6680
        %v7146 = vsel %vm495, %v6694, %v7145
        %v7147 = vsel %vm498, %v6701, %v7146
        %v7148 = vsel %vm492, %v6715, %v6708
        %v7149 = vsel %vm495, %v6722, %v7148
        %v7150 = vsel %vm498, %v6729, %v7149
        %v7151 = vsel %vm492, %v6743, %v6736
        %v7152 = vsel %vm495, %v6750, %v7151
        %v7153 = vsel %vm498, %v6757, %v7152
        %v7154 = vsel %vm492, %v6771, %v6764
        %v7155 = vsel %vm495, %v6778, %v7154
        %v7156 = vsel %vm498, %v6785, %v7155
        %v7157 = vsel %vm492, %v6799, %v6792
        %v7158 = vsel %vm495, %v6806, %v7157
        %v7159 = vsel %vm498, %v6813, %v7158
        %v7160 = vsel %vm492, %v6827, %v6820
        %v7161 = vsel %vm495, %v6834, %v7160
        %v7162 = vsel %vm498, %v6841, %v7161
        %v7163 = vsel %vm492, %v6855, %v6848
        %v7164 = vsel %vm495, %v6862, %v7163
        %v7165 = vsel %vm498, %v6869, %v7164
        %7166 = vrot.lane.b32.xlu0 %v7144, 96
        %v7167 = vpop.permute.xlu0 %7166
        %7168 = vrot.lane.b32.xlu0 %v7147, 96
        %v7169 = vpop.permute.xlu0 %7168
        %7170 = vrot.lane.b32.xlu0 %v7150, 96
        %v7171 = vpop.permute.xlu0 %7170
        %7172 = vrot.lane.b32.xlu0 %v7153, 96
        %v7173 = vpop.permute.xlu0 %7172
        %7174 = vrot.lane.b32.xlu0 %v7156, 96
        %v7175 = vpop.permute.xlu0 %7174
        %7176 = vrot.lane.b32.xlu0 %v7159, 96
        %v7177 = vpop.permute.xlu0 %7176
        %7178 = vrot.lane.b32.xlu0 %v7162, 96
        %v7179 = vpop.permute.xlu0 %7178
        %7180 = vrot.lane.b32.xlu0 %v7165, 96
        %v7181 = vpop.permute.xlu0 %7180
        %v7190 = vsel %vm646, %v6927, %v7007
        %v7191 = vsel %vm646, %v6929, %v7009
        %v7192 = vsel %vm646, %v6931, %v7011
        %v7193 = vsel %vm646, %v6933, %v7013
        %v7194 = vsel %vm646, %v6935, %v7015
        %v7195 = vsel %vm646, %v6937, %v7017
        %v7196 = vsel %vm646, %v6939, %v7019
        %v7197 = vsel %vm646, %v6941, %v7021
        %vm7198 = vcmask 130048
        %v7199 = vsel %vm7198, %v7190, %v7087
        %v7200 = vsel %vm7198, %v7191, %v7089
        %v7201 = vsel %vm7198, %v7192, %v7091
        %v7202 = vsel %vm7198, %v7193, %v7093
        %v7203 = vsel %vm7198, %v7194, %v7095
        %v7204 = vsel %vm7198, %v7195, %v7097
        %v7205 = vsel %vm7198, %v7196, %v7099
        %v7206 = vsel %vm7198, %v7197, %v7101
        %vm7207 = vcmask 195584
        %v7208 = vsel %vm7207, %v7199, %v7167
        %v7209 = vsel %vm7207, %v7200, %v7169
        %v7210 = vsel %vm7207, %v7201, %v7171
        %v7211 = vsel %vm7207, %v7202, %v7173
        %v7212 = vsel %vm7207, %v7203, %v7175
        %v7213 = vsel %vm7207, %v7204, %v7177
        %v7214 = vsel %vm7207, %v7205, %v7179
        %v7215 = vsel %vm7207, %v7206, %v7181
        %v7216 = vpack.c.bf16 %v7208, %v7208
        %v7217 = vpack.c.bf16 %v7209, %v7209
        %v7218 = vpack.c.bf16 %v7210, %v7210
        %v7219 = vpack.c.bf16 %v7211, %v7211
        %v7220 = vpack.c.bf16 %v7212, %v7212
        %v7221 = vpack.c.bf16 %v7213, %v7213
        %v7222 = vpack.c.bf16 %v7214, %v7214
        %v7223 = vpack.c.bf16 %v7215, %v7215
        %v7224 = vld [vmem:[%s5] sm:$0xf]
        %v7225 = vld [vmem:[%s5 + $0x4] sm:$0xf]
        %v7226 = vld [vmem:[%s5 + $0x8] sm:$0xf]
        %v7227 = vld [vmem:[%s5 + $0xc] sm:$0xf]
        %v7228 = vld [vmem:[%s6] sm:$0x1]
        %v7230 = vperm.slane %v7228, 0
        %7233 = vst [vmem:[#allocation1] ss:$4 sm:$0xff] %v7216
        %s7235 = scalar_lea.vmem [#allocation1], 1
        %7236 = vst [vmem:[%s7235] ss:$4 sm:$0xff] %v7217
        %s7238 = scalar_lea.vmem [#allocation1], 2
        %7239 = vst [vmem:[%s7238] ss:$4 sm:$0xff] %v7218
        %s7241 = scalar_lea.vmem [#allocation1], 3
        %7242 = vst [vmem:[%s7241] ss:$4 sm:$0xff] %v7219
        %s7244 = scalar_lea.vmem [#allocation1], 32
        %7245 = vst [vmem:[%s7244] ss:$4 sm:$0xff] %v7220
        %s7247 = scalar_lea.vmem [#allocation1], 33
        %7248 = vst [vmem:[%s7247] ss:$4 sm:$0xff] %v7221
        %s7250 = scalar_lea.vmem [#allocation1], 34
        %7251 = vst [vmem:[%s7250] ss:$4 sm:$0xff] %v7222
        %s7253 = scalar_lea.vmem [#allocation1], 35
        %7254 = vst [vmem:[%s7253] ss:$4 sm:$0xff] %v7223
        %v7255 = vld.sshfl [vmem:[#allocation1] sm:$0xff pattern:$0x73625140]
        %v7256 = vld.sshfl [vmem:[#allocation1 + $0x20] sm:$0xff pattern:$0x73625140]
        %v7261 = vunpack.c.l.b16 %v7224
        %v7262 = vunpack.c.l.b16 %v7225
        %v7263 = vunpack.c.l.b16 %v7226
        %v7264 = vunpack.c.l.b16 %v7227
        %v7265 = vpack.c.b16 %v7262, %v7261
        %v7266 = vpack.c.b16 %v7264, %v7263
        %v7269 = vsel %vm368, %v7255, 0
        %v7271 = vsel %vm368, %v7256, 0
        %7273 = vmatpush.bf16.msra.mxu0 0
        %7274 = vmatpush.bf16.msra.mxu0 0
        %7275 = vmatpush.bf16.msra.mxu0 0
        %7276 = vmatpush.bf16.msra.mxu0 0
        %7277 = vmatpush.bf16.msra.mxu0 0
        %7278 = vmatpush.bf16.msra.mxu0 0
        %7279 = vmatpush.bf16.msra.mxu0 %v7266
        %7280 = vmatpush.bf16.msra.mxu0 %v7265
        %7281 = vmatmul.bf16.gmra.mxu0 %v7269
        %v7282 = vpop.f32.mrf.mxu0
        %v7283 = vadd.f32 %v7230, %v7282
        %v7284 = vpop.f32.mrf.mxu0
        %v7285 = vadd.f32 %v7230, %v7284
        %7286 = vmatmul.bf16.gmra.mxu0 %v7271
        %v7287 = vpop.f32.mrf.mxu0
        %v7288 = vadd.f32 %v7230, %v7287
        %v7289 = vpop.f32.mrf.mxu0
        %v7290 = vadd.f32 %v7230, %v7289
        %7291 = vdwg.mxu0
        %v7296 = vrot.slane %v7283, 4
        %v7297 = vrot.slane %v7285, 4
        %v7298 = vrot.slane %v7288, 4
        %v7299 = vrot.slane %v7290, 4
        %v7304 = vld [vmem:[%s321] sm:$0xf]
        %v7305 = vld [vmem:[%s321 + $0x4] sm:$0xf]
        %v7306 = vld [vmem:[%s321 + $0x8] sm:$0xf]
        %v7307 = vld [vmem:[%s321 + $0xc] sm:$0xf]
        %v7308 = vld [vmem:[%s321 + $0x10] sm:$0xf]
        %v7309 = vld [vmem:[%s321 + $0x14] sm:$0xf]
        %v7310 = vld [vmem:[%s321 + $0x18] sm:$0xf]
        %v7311 = vld [vmem:[%s321 + $0x1c] sm:$0xf]
        %vm7312 = vcmp.gt.f32.partialorder %v7304, 0.5
        %vm7313 = vcmp.gt.f32.partialorder %v7305, 0.5
        %vm7314 = vcmp.gt.f32.partialorder %v7306, 0.5
        %vm7315 = vcmp.gt.f32.partialorder %v7307, 0.5
        %vm7316 = vcmp.gt.f32.partialorder %v7308, 0.5
        %vm7317 = vcmp.gt.f32.partialorder %v7309, 0.5
        %vm7318 = vcmp.gt.f32.partialorder %v7310, 0.5
        %vm7319 = vcmp.gt.f32.partialorder %v7311, 0.5
        %v7320 = vsel %vm7312, 1, 0
        %v7321 = vsel %vm7313, 1, 0
        %v7322 = vsel %vm7314, 1, 0
        %v7323 = vsel %vm7315, 1, 0
        %v7324 = vsel %vm7316, 1, 0
        %v7325 = vsel %vm7317, 1, 0
        %v7326 = vsel %vm7318, 1, 0
        %v7327 = vsel %vm7319, 1, 0
        %7328 = vset.pattern.permute.xlu0 0
        %7329 = vperm.xlu0 %7328, %v7320
        %v7330 = vpop.permute.xlu0 %7329
        %7331 = vset.pattern.permute.xlu0 0
        %7332 = vperm.xlu0 %7331, %v7321
        %v7333 = vpop.permute.xlu0 %7332
        %7334 = vset.pattern.permute.xlu0 0
        %7335 = vperm.xlu0 %7334, %v7322
        %v7336 = vpop.permute.xlu0 %7335
        %7337 = vset.pattern.permute.xlu0 0
        %7338 = vperm.xlu0 %7337, %v7323
        %v7339 = vpop.permute.xlu0 %7338
        %7340 = vset.pattern.permute.xlu0 0
        %7341 = vperm.xlu0 %7340, %v7324
        %v7342 = vpop.permute.xlu0 %7341
        %7343 = vset.pattern.permute.xlu0 0
        %7344 = vperm.xlu0 %7343, %v7325
        %v7345 = vpop.permute.xlu0 %7344
        %7346 = vset.pattern.permute.xlu0 0
        %7347 = vperm.xlu0 %7346, %v7326
        %v7348 = vpop.permute.xlu0 %7347
        %7349 = vset.pattern.permute.xlu0 0
        %7350 = vperm.xlu0 %7349, %v7327
        %v7351 = vpop.permute.xlu0 %7350
        %vm7352 = vcmp.eq.s32.totalorder %v7330, 1
        %vm7353 = vcmp.eq.s32.totalorder %v7333, 1
        %vm7354 = vcmp.eq.s32.totalorder %v7336, 1
        %vm7355 = vcmp.eq.s32.totalorder %v7339, 1
        %vm7356 = vcmp.eq.s32.totalorder %v7342, 1
        %vm7357 = vcmp.eq.s32.totalorder %v7345, 1
        %vm7358 = vcmp.eq.s32.totalorder %v7348, 1
        %vm7359 = vcmp.eq.s32.totalorder %v7351, 1
        %v7360 = vsel %vm7352, 0.0, %v7283
        %v7361 = vsel %vm7353, 0.0, %v7296
        %v7362 = vsel %vm7354, 0.0, %v7285
        %v7363 = vsel %vm7355, 0.0, %v7297
        %v7364 = vsel %vm7356, 0.0, %v7288
        %v7365 = vsel %vm7357, 0.0, %v7298
        %v7366 = vsel %vm7358, 0.0, %v7290
        %v7367 = vsel %vm7359, 0.0, %v7299
        %v7376 = vrot.slane %v7360, 1
        %v7377 = vrot.slane %v7361, 1
        %v7378 = vrot.slane %v7362, 1
        %v7379 = vrot.slane %v7363, 1
        %v7380 = vrot.slane %v7364, 1
        %v7381 = vrot.slane %v7365, 1
        %v7382 = vrot.slane %v7366, 1
        %v7383 = vrot.slane %v7367, 1
        %7384 = vrot.lane.b32.xlu0 %v7376, 32
        %v7385 = vpop.permute.xlu0 %7384
        %7386 = vrot.lane.b32.xlu0 %v7377, 32
        %v7387 = vpop.permute.xlu0 %7386
        %7388 = vrot.lane.b32.xlu0 %v7378, 32
        %v7389 = vpop.permute.xlu0 %7388
        %7390 = vrot.lane.b32.xlu0 %v7379, 32
        %v7391 = vpop.permute.xlu0 %7390
        %7392 = vrot.lane.b32.xlu0 %v7380, 32
        %v7393 = vpop.permute.xlu0 %7392
        %7394 = vrot.lane.b32.xlu0 %v7381, 32
        %v7395 = vpop.permute.xlu0 %7394
        %7396 = vrot.lane.b32.xlu0 %v7382, 32
        %v7397 = vpop.permute.xlu0 %7396
        %7398 = vrot.lane.b32.xlu0 %v7383, 32
        %v7399 = vpop.permute.xlu0 %7398
        %v7408 = vrot.slane %v7360, 2
        %v7409 = vrot.slane %v7361, 2
        %v7410 = vrot.slane %v7362, 2
        %v7411 = vrot.slane %v7363, 2
        %v7412 = vrot.slane %v7364, 2
        %v7413 = vrot.slane %v7365, 2
        %v7414 = vrot.slane %v7366, 2
        %v7415 = vrot.slane %v7367, 2
        %7416 = vrot.lane.b32.xlu0 %v7408, 64
        %v7417 = vpop.permute.xlu0 %7416
        %7418 = vrot.lane.b32.xlu0 %v7409, 64
        %v7419 = vpop.permute.xlu0 %7418
        %7420 = vrot.lane.b32.xlu0 %v7410, 64
        %v7421 = vpop.permute.xlu0 %7420
        %7422 = vrot.lane.b32.xlu0 %v7411, 64
        %v7423 = vpop.permute.xlu0 %7422
        %7424 = vrot.lane.b32.xlu0 %v7412, 64
        %v7425 = vpop.permute.xlu0 %7424
        %7426 = vrot.lane.b32.xlu0 %v7413, 64
        %v7427 = vpop.permute.xlu0 %7426
        %7428 = vrot.lane.b32.xlu0 %v7414, 64
        %v7429 = vpop.permute.xlu0 %7428
        %7430 = vrot.lane.b32.xlu0 %v7415, 64
        %v7431 = vpop.permute.xlu0 %7430
        %v7440 = vrot.slane %v7360, 3
        %v7441 = vrot.slane %v7361, 3
        %v7442 = vrot.slane %v7362, 3
        %v7443 = vrot.slane %v7363, 3
        %v7444 = vrot.slane %v7364, 3
        %v7445 = vrot.slane %v7365, 3
        %v7446 = vrot.slane %v7366, 3
        %v7447 = vrot.slane %v7367, 3
        %7448 = vrot.lane.b32.xlu0 %v7440, 96
        %v7449 = vpop.permute.xlu0 %7448
        %7450 = vrot.lane.b32.xlu0 %v7441, 96
        %v7451 = vpop.permute.xlu0 %7450
        %7452 = vrot.lane.b32.xlu0 %v7442, 96
        %v7453 = vpop.permute.xlu0 %7452
        %7454 = vrot.lane.b32.xlu0 %v7443, 96
        %v7455 = vpop.permute.xlu0 %7454
        %7456 = vrot.lane.b32.xlu0 %v7444, 96
        %v7457 = vpop.permute.xlu0 %7456
        %7458 = vrot.lane.b32.xlu0 %v7445, 96
        %v7459 = vpop.permute.xlu0 %7458
        %7460 = vrot.lane.b32.xlu0 %v7446, 96
        %v7461 = vpop.permute.xlu0 %7460
        %7462 = vrot.lane.b32.xlu0 %v7447, 96
        %v7463 = vpop.permute.xlu0 %7462
        %v7472 = vsel %vm368, %v7360, %v7385
        %v7473 = vsel %vm368, %v7361, %v7387
        %v7474 = vsel %vm368, %v7362, %v7389
        %v7475 = vsel %vm368, %v7363, %v7391
        %v7476 = vsel %vm368, %v7364, %v7393
        %v7477 = vsel %vm368, %v7365, %v7395
        %v7478 = vsel %vm368, %v7366, %v7397
        %v7479 = vsel %vm368, %v7367, %v7399
        %vm7480 = vcmask 523264
        %v7481 = vsel %vm7480, %v7472, %v7417
        %v7482 = vsel %vm7480, %v7473, %v7419
        %v7483 = vsel %vm7480, %v7474, %v7421
        %v7484 = vsel %vm7480, %v7475, %v7423
        %v7485 = vsel %vm7480, %v7476, %v7425
        %v7486 = vsel %vm7480, %v7477, %v7427
        %v7487 = vsel %vm7480, %v7478, %v7429
        %v7488 = vsel %vm7480, %v7479, %v7431
        %vm7489 = vcmask 785408
        %v7490 = vsel %vm7489, %v7481, %v7449
        %v7491 = vsel %vm7489, %v7482, %v7451
        %v7492 = vsel %vm7489, %v7483, %v7453
        %v7493 = vsel %vm7489, %v7484, %v7455
        %v7494 = vsel %vm7489, %v7485, %v7457
        %v7495 = vsel %vm7489, %v7486, %v7459
        %v7496 = vsel %vm7489, %v7487, %v7461
        %v7497 = vsel %vm7489, %v7488, %v7463
        %v7506 = vrot.slane %v7491, 7
        %v7507 = vsel %vm492, %v7506, %v7490
        %v7508 = vrot.slane %v7492, 6
        %v7509 = vsel %vm495, %v7508, %v7507
        %v7510 = vrot.slane %v7493, 5
        %v7511 = vsel %vm498, %v7510, %v7509
        %v7512 = vrot.slane %v7494, 4
        %vm7513 = vcmask 1044484
        %v7514 = vsel %vm7513, %v7512, %v7511
        %v7515 = vrot.slane %v7495, 3
        %vm7516 = vcmask 1045509
        %v7517 = vsel %vm7516, %v7515, %v7514
        %v7518 = vrot.slane %v7496, 2
        %vm7519 = vcmask 1046534
        %v7520 = vsel %vm7519, %v7518, %v7517
        %v7521 = vrot.slane %v7497, 1
        %vm7522 = vcmask 1047559
        %v7523 = vsel %vm7522, %v7521, %v7520
        %7525 = vst [vmem:[%s304] sm:$0xff] %v7523
        %s7526 = sand.u32 %s191, 1
        %s7527 = scalar_lea.sflag [#allocation3], %s7526
        %s7528 = sand.u32 %s191, 1
        %s7529 = smul.addr %s7528, 8
        %s7530 = scalar_lea.vmem [#allocation2], %s7529
        // Predicated region
        $region49: #{tpu_custom_call.1} parent=47 // pred_check
          %p7531 = pneg %p201
        $region50: #{tpu_custom_call.1} parent=47 // pred_check_branch
          %7533 = sbr.rel (%p7531) target = $region52
        $region51: #{tpu_custom_call.1} parent=47 // pred_region
          %7535 = vsyncadd %s7527, 0
          %s7536 = smul.addr %s21, 8
          %s7537 = scalar_lea.hbm %s7, %s7536
          %s7539 = sshll.u32 %s7530, 4
          %s7540 = int_to_ptr.vmem [resolvable:$true] %s7539
          %s7541 = sshll.u32 %s7537, 4
          %s7542 = int_to_ptr.hbm [resolvable:$true] %s7541
          %7544 = dma.vmem_to_hbm [thread:$0]  %s7540, 128, %s7542, %s7527
        $region52: #{tpu_custom_call.1} parent=47 // pred_fallthru
          _
      $region48: #{tpu_custom_call.1} parent=5 // pred_fallthru
        _
      %p7545 = scmp.le.s32.totalorder 2, %s16
      // Predicated region
      $region53: #{tpu_custom_call.1} parent=5 // pred_check
        %p7546 = pneg %p7545
      $region54: #{tpu_custom_call.1} parent=5 // pred_check_branch
        %7548 = sbr.rel (%p7546) target = $region56
      $region55: #{tpu_custom_call.1} parent=5 // pred_region
        %s7549 = ssub.s32 %s16, 2
        // Predicated region
        $region57: #{tpu_custom_call.1} parent=55 // pred_check
          %p7550 = pneg %p207
        $region58: #{tpu_custom_call.1} parent=55 // pred_check_branch
          %7552 = sbr.rel (%p7550) target = $region60
        $region59: #{tpu_custom_call.1} parent=55 // pred_region
          %s7553 = sand.u32 %s192, 1
          %s7554 = scalar_lea.sflag [#allocation3], %s7553
          %s7555 = sand.u32 %s192, 1
          %s7556 = smul.addr %s7555, 8
          %s7557 = scalar_lea.vmem [#allocation2], %s7556
          %7559 = dma.done %s7554, 128
        $region60: #{tpu_custom_call.1} parent=55 // pred_fallthru
          _
      $region56: #{tpu_custom_call.1} parent=5 // pred_fallthru
        _
    $region6: #{tpu_custom_call.1} parent=1 // loop_footer
      %s20 = sadd.s32 1, %s16
    $region7: #{tpu_custom_call.1} parent=1 // loop_footer_branch
      %15 = sbr.rel target = $region3
    $region8: #{tpu_custom_call.1} parent=1 // loop_exit
      _
    %7560 = vsyncpa [#allocation3], 1
    %s7561 = scalar_lea.sflag [#allocation3], 1
    %7562 = vsyncpa %s7561, 1

</llo_original>
